<compile_context>
chip_gen: v7x
topology: tpu7x:2x2x1
jax: 0.10.0
libtpu: 0.0.40
codegen_flags: <defaults>
</compile_context>

<pallas_src>
import numpy as np
import jax
import jax.numpy as jnp
from jax.experimental import pallas as pl
from jax.experimental.pallas import tpu as pltpu

LN_EPS = 1e-5


# ----------------------------------------------------------------------------
# Tile-size / spec helpers
# ----------------------------------------------------------------------------
def _pick_row_tile(M, max_tile=1024):
    """Largest multiple-of-8 divisor of M <= max_tile, preferring >=2 grid steps."""
    cands = [t for t in range(8, min(max_tile, M) + 1, 8) if M % t == 0]
    if not cands:
        return M
    two_step = [t for t in cands if M // t >= 2]
    return max(two_step) if two_step else max(cands)


def _pick_window_batch(B, nWin, N, max_rows=512):
    """Windows per grid step = k_b * nWin (whole images), capped by row count,
    keeping >= 2 grid steps when possible (v7x megacore).  Row block (WB*N) must
    be a multiple of 8 unless it spans the whole array."""
    k_b = 1
    while (B % (k_b * 2) == 0) and ((k_b * 2) * nWin * N <= max_rows) \
            and (B // (k_b * 2) >= 2):
        k_b *= 2
    WB = k_b * nWin
    if (WB * N) % 8 != 0 and WB != B * nWin:
        # fall back to the whole array (block == full dims is always allowed)
        k_b, WB = B, B * nWin
    return WB, k_b


def _const_spec(shape):
    """BlockSpec for an operand whose block index never changes: single-buffered."""
    nd = len(shape)
    idx = lambda i, _nd=nd: (0,) * _nd
    try:
        return pl.BlockSpec(shape, idx, pipeline_mode=pl.Buffered(1))
    except TypeError:  # older jax without pipeline_mode: fall back to default buffering
        return pl.BlockSpec(shape, idx)


def _vmem_limit(est_bytes, cap=64 << 20):
    """Explicit scoped-VMEM budget: 2x estimate + headroom, capped at v7x physical."""
    return int(min(cap, 2 * int(est_bytes) + (8 << 20)))


# ----------------------------------------------------------------------------
# Pallas kernels
# ----------------------------------------------------------------------------
def _layernorm_kernel(x_ref, g_ref, b_ref, o_ref):
    x = x_ref[...].astype(jnp.float32)
    mean = jnp.mean(x, axis=-1, keepdims=True)
    var = jnp.mean((x - mean) ** 2, axis=-1, keepdims=True)
    xn = (x - mean) * jax.lax.rsqrt(var + LN_EPS)
    o_ref[...] = (xn * g_ref[...] + b_ref[...]).astype(o_ref.dtype)


def layernorm_pallas(x2d, gamma, beta):
    """Standalone LN (only used on the padded fallback path)."""
    M, C = x2d.shape
    tm = _pick_row_tile(M)
    est = 2 * 2 * tm * C * 4 + 2 * C * 4
    return pl.pallas_call(
        _layernorm_kernel,
        out_shape=jax.ShapeDtypeStruct((M, C), x2d.dtype),
        grid_spec=pltpu.PrefetchScalarGridSpec(
            num_scalar_prefetch=0,
            grid=(M // tm,),
            in_specs=[
                pl.BlockSpec((tm, C), lambda i: (i, 0)),
                _const_spec((1, C)),
                _const_spec((1, C)),
            ],
            out_specs=pl.BlockSpec((tm, C), lambda i: (i, 0)),
        ),
        compiler_params=pltpu.CompilerParams(
            dimension_semantics=("parallel",),
            vmem_limit_bytes=_vmem_limit(est)),
    )(x2d, gamma, beta)


def window_attention_pallas(xw2d, ln_g, ln_b, wqkv_b, bqkv_s, wproj_b, bproj,
                            bias_nwin, num_heads, nWin, fuse_ln=True):
    """Fused [LN1 ->] QKV -> per-head attention -> proj over batched windows.

    xw2d:      (Bn*N, C) window tokens, window-major / token-minor, raw tokens
               when fuse_ln=True, pre-normalized when fuse_ln=False.
    bias_nwin: (num_heads, nWin, N, N) = rel-pos bias + shift mask, pre-combined
               (prepared once at parameter-load time).
    Weights arrive already bf16 with the softmax scale folded into the q columns.
    """
    R_total, C = xw2d.shape
    H = num_heads
    hd = C // H
    N = bias_nwin.shape[-1]
    Bn = R_total // N
    B = Bn // nWin
    WB, k_b = _pick_window_batch(B, nWin, N)
    RB = WB * N
    grid = (R_total // RB,)

    def kernel(x_ref, g_ref, b_ref, wqkv_ref, bqkv_ref, wproj_ref, bproj_ref,
               bias_ref, o_ref):
        x = x_ref[...].astype(jnp.float32)                       # (RB, C)
        if fuse_ln:
            mu = jnp.mean(x, axis=-1, keepdims=True)
            var = jnp.mean((x - mu) ** 2, axis=-1, keepdims=True)
            xn = (x - mu) * jax.lax.rsqrt(var + LN_EPS) * g_ref[...] + b_ref[...]
        else:
            xn = x
        # One big QKV matmul over all batched windows (bf16 operands, f32 acc).
        qkv = jnp.dot(xn.astype(jnp.bfloat16), wqkv_ref[...],
                      preferred_element_type=jnp.float32) + bqkv_ref[...]
        y = jnp.zeros((RB, C), jnp.float32)                      # f32 register accumulator
        for h in range(H):
            q = qkv[:, h * hd:(h + 1) * hd].reshape(WB, N, hd).astype(jnp.bfloat16)
            k = qkv[:, C + h * hd:C + (h + 1) * hd].reshape(WB, N, hd).astype(jnp.bfloat16)
            v = qkv[:, 2 * C + h * hd:2 * C + (h + 1) * hd].reshape(WB, N, hd).astype(jnp.bfloat16)
            # window-batched QK^T; scale already folded into q.
            s = jnp.einsum('wnd,wmd->wnm', q, k,
                           preferred_element_type=jnp.float32)   # (WB, N, N)
            # bias (rel-pos + shift mask) broadcast across the k_b images in the batch
            s = s.reshape(k_b, nWin, N, N) + bias_ref[h][None]
            s = s.reshape(WB, N, N)
            m = jnp.max(s, axis=-1, keepdims=True)
            e = jnp.exp(s - m)
            denom = jnp.sum(e, axis=-1, keepdims=True)
            o_h = jnp.einsum('wnm,wmd->wnd', e.astype(jnp.bfloat16), v,
                             preferred_element_type=jnp.float32)  # (WB, N, hd)
            # flash-style: normalize the (.., hd) output instead of the (.., N) probs.
            o_h = o_h * pl.reciprocal(denom, approx=True)
            # fold the head->C concat into the proj: accumulate o_h @ wproj[h-rows]
            y = y + jnp.dot(o_h.reshape(RB, hd).astype(jnp.bfloat16),
                            wproj_ref[h * hd:(h + 1) * hd, :],
                            preferred_element_type=jnp.float32)
        y = y + bproj_ref[...]
        o_ref[...] = y.astype(o_ref.dtype)                       # lane-dense store

    est = (2 * 2 * RB * C * 4                                    # in/out, double-buffered f32
           + (C * 3 * C + C * C) * 2                             # bf16 weights, single-buffered
           + (3 * C + 4 * C) * 4                                 # small f32 biases / LN params
           + H * nWin * N * N * 4                                # attention bias
           + RB * (3 * C + C) * 4 + 2 * WB * N * N * 4)          # qkv / y / score intermediates
    return pl.pallas_call(
        kernel,
        out_shape=jax.ShapeDtypeStruct((R_total, C), xw2d.dtype),
        grid_spec=pltpu.PrefetchScalarGridSpec(
            num_scalar_prefetch=0,
            grid=grid,
            in_specs=[
                pl.BlockSpec((RB, C), lambda i: (i, 0)),
                _const_spec((1, C)),
                _const_spec((1, C)),
                _const_spec((C, 3 * C)),
                _const_spec((1, 3 * C)),
                _const_spec((C, C)),
                _const_spec((1, C)),
                _const_spec((H, nWin, N, N)),
            ],
            out_specs=pl.BlockSpec((RB, C), lambda i: (i, 0)),
        ),
        compiler_params=pltpu.CompilerParams(
            dimension_semantics=("parallel",),
            vmem_limit_bytes=_vmem_limit(est)),
    )(xw2d, ln_g, ln_b, wqkv_b, bqkv_s, wproj_b, bproj, bias_nwin)


def mlp_block_pallas(x2d, g2, b2, w1b, b1, w2b, bb2):
    """Fused: out = x + fc2(gelu(fc1(layernorm(x)))). x2d: (M, C); w1b/w2b are bf16."""
    M, C = x2d.shape
    Hd = w1b.shape[1]
    # cap the row tile so the live (tm, Hd) f32 intermediate stays ~4 MiB (v7x VMEM)
    cap = max(64, ((4 << 20) // (4 * Hd)) // 8 * 8)
    tm = _pick_row_tile(M, max_tile=min(1024, cap))

    def kernel(x_ref, g_ref, be_ref, w1_ref, b1_ref, w2_ref, b2_ref, o_ref):
        x = x_ref[...].astype(jnp.float32)
        mu = jnp.mean(x, axis=-1, keepdims=True)
        var = jnp.mean((x - mu) ** 2, axis=-1, keepdims=True)
        xn = (x - mu) * jax.lax.rsqrt(var + LN_EPS) * g_ref[...] + be_ref[...]
        h = jnp.dot(xn.astype(jnp.bfloat16), w1_ref[...],
                    preferred_element_type=jnp.float32) + b1_ref[...]
        h = jax.nn.gelu(h, approximate=True)
        y = jnp.dot(h.astype(jnp.bfloat16), w2_ref[...],
                    preferred_element_type=jnp.float32) + b2_ref[...]
        o_ref[...] = (x + y).astype(o_ref.dtype)

    est = (2 * 2 * tm * C * 4                                    # in/out double-buffered
           + 2 * C * Hd * 2                                      # bf16 fc1/fc2, single-buffered
           + (Hd + 3 * C) * 4                                    # biases / LN params
           + tm * (2 * Hd + C) * 4)                              # intermediates
    return pl.pallas_call(
        kernel,
        out_shape=jax.ShapeDtypeStruct((M, C), x2d.dtype),
        grid_spec=pltpu.PrefetchScalarGridSpec(
            num_scalar_prefetch=0,
            grid=(M // tm,),
            in_specs=[
                pl.BlockSpec((tm, C), lambda i: (i, 0)),
                _const_spec((1, C)),
                _const_spec((1, C)),
                _const_spec((C, Hd)),
                _const_spec((1, Hd)),
                _const_spec((Hd, C)),
                _const_spec((1, C)),
            ],
            out_specs=pl.BlockSpec((tm, C), lambda i: (i, 0)),
        ),
        compiler_params=pltpu.CompilerParams(
            dimension_semantics=("parallel",),
            vmem_limit_bytes=_vmem_limit(est)),
    )(x2d, g2, b2, w1b, b1, w2b, bb2)


# ----------------------------------------------------------------------------
# Pure-JAX reference (f32) for the correctness check
# ----------------------------------------------------------------------------
def layernorm_ref(x2d, gamma, beta):
    mean = x2d.mean(-1, keepdims=True)
    var = ((x2d - mean) ** 2).mean(-1, keepdims=True)
    return (x2d - mean) / jnp.sqrt(var + LN_EPS) * gamma.reshape(-1) + beta.reshape(-1)


def window_attention_ref(xw, wqkv, bqkv, wproj, bproj, rel_bias, mask, num_heads):
    Bn, N, C = xw.shape
    hd = C // num_heads
    scale = hd ** (-0.5)
    qkv = xw @ wqkv + bqkv.reshape(-1)
    qkv = qkv.reshape(Bn, N, 3, num_heads, hd).transpose(2, 0, 3, 1, 4)
    q, k, v = qkv[0], qkv[1], qkv[2]
    attn = jnp.einsum('bhnd,bhmd->bhnm', q, k) * scale + rel_bias[None]
    nWin = mask.shape[0]
    attn = attn.reshape(Bn // nWin, nWin, num_heads, N, N) + mask[None, :, None]
    attn = attn.reshape(Bn, num_heads, N, N)
    attn = jax.nn.softmax(attn, axis=-1)
    out = jnp.einsum('bhnm,bhmd->bhnd', attn, v).transpose(0, 2, 1, 3).reshape(Bn, N, C)
    return out @ wproj + bproj.reshape(-1)


def mlp_block_ref(x2d, g2, b2, w1, b1, w2, bb2):
    xn = layernorm_ref(x2d, g2, b2)
    h = jax.nn.gelu(xn @ w1 + b1.reshape(-1), approximate=True)
    return x2d + (h @ w2 + bb2.reshape(-1))


# ----------------------------------------------------------------------------
# Glue (reshapes / window partition / roll) in plain JAX
# ----------------------------------------------------------------------------
def window_partition_jax(x, ws):
    B, H, W, C = x.shape
    pad_h = (ws - H % ws) % ws
    pad_w = (ws - W % ws) % ws
    if pad_h or pad_w:
        x = jnp.pad(x, ((0, 0), (0, pad_h), (0, pad_w), (0, 0)))
    Hp, Wp = H + pad_h, W + pad_w
    xw = x.reshape(B, Hp // ws, ws, Wp // ws, ws, C)
    xw = xw.transpose(0, 1, 3, 2, 4, 5).reshape(-1, ws, ws, C)
    return xw, Hp, Wp


def window_reverse_jax(windows, ws, Hp, Wp, H, W):
    nh, nw = Hp // ws, Wp // ws
    B = windows.shape[0] // (nh * nw)
    C = windows.shape[-1]
    x = windows.reshape(B, nh, nw, ws, ws, C).transpose(0, 1, 3, 2, 4, 5)
    x = x.reshape(B, Hp, Wp, C)
    return x[:, :H, :W, :]


def relative_position_index(ws):
    coords = np.stack(np.meshgrid(np.arange(ws), np.arange(ws), indexing='ij'))
    cf = coords.reshape(2, -1)
    rel = cf[:, :, None] - cf[:, None, :]
    rel = rel.transpose(1, 2, 0).astype(np.int64)
    rel[:, :, 0] += ws - 1
    rel[:, :, 1] += ws - 1
    rel[:, :, 0] *= 2 * ws - 1
    return rel.sum(-1)  # (N, N)


def compute_attn_mask(H, W, ws, shift):
    N = ws * ws
    if shift == 0:
        nWin = int(np.ceil(H / ws)) * int(np.ceil(W / ws))
        return np.zeros((nWin, N, N), np.float32)
    img_mask = np.zeros((1, H, W, 1), np.float32)
    slices = (slice(0, -ws), slice(-ws, -shift), slice(-shift, None))
    cnt = 0
    for hs in slices:
        for wsl in slices:
            img_mask[:, hs, wsl, :] = cnt
            cnt += 1
    pad_h = (ws - H % ws) % ws
    pad_w = (ws - W % ws) % ws
    if pad_h or pad_w:
        img_mask = np.pad(img_mask, ((0, 0), (0, pad_h), (0, pad_w), (0, 0)))
    Hp, Wp = H + pad_h, W + pad_w
    mw = img_mask.reshape(1, Hp // ws, ws, Wp // ws, ws, 1)
    mw = mw.transpose(0, 1, 3, 2, 4, 5).reshape(-1, N)
    am = mw[:, None, :] - mw[:, :, None]
    am = np.where(am != 0, -100.0, 0.0).astype(np.float32)
    return am


# ----------------------------------------------------------------------------
# One-time parameter preparation (hoisted out of the forward path)
# ----------------------------------------------------------------------------
def prepare_block_params(p, H, W, eff_ws, shift, num_heads):
    C = p['wqkv'].shape[0]
    hd = C // num_heads
    scale = hd ** (-0.5)
    N = eff_ws * eff_ws
    rel_idx = relative_position_index(eff_ws)
    mask = jnp.asarray(compute_attn_mask(H, W, eff_ws, shift))    # (nWin, N, N)
    rel_bias = p['rel_table'][rel_idx.reshape(-1)].reshape(N, N, num_heads)
    rel_bias = rel_bias.transpose(2, 0, 1)                        # (heads, N, N)
    bias_nwin = rel_bias[:, None] + mask[None, :]                 # (heads, nWin, N, N)
    # fold softmax scale into the q columns of the qkv projection
    wqkv_s = jnp.concatenate([p['wqkv'][:, :C] * scale, p['wqkv'][:, C:]], axis=1)
    bqkv_s = jnp.concatenate([p['bqkv'][:, :C] * scale, p['bqkv'][:, C:]], axis=1)
    return dict(
        eff_ws=eff_ws, shift=shift, num_heads=num_heads,
        ln1_g=p['ln1_g'], ln1_b=p['ln1_b'],
        wqkv_b=wqkv_s.astype(jnp.bfloat16), bqkv_s=bqkv_s,
        wproj_b=p['wproj'].astype(jnp.bfloat16), bproj=p['bproj'],
        bias_nwin=bias_nwin,
        ln2_g=p['ln2_g'], ln2_b=p['ln2_b'],
        fc1_wb=p['fc1_w'].astype(jnp.bfloat16), fc1_b=p['fc1_b'],
        fc2_wb=p['fc2_w'].astype(jnp.bfloat16), fc2_b=p['fc2_b'],
    )


def prepare_basic_layer_params(params_list, H, W, window_size, num_heads):
    eff_ws = min(H, W) if min(H, W) <= window_size else window_size
    prepped = []
    for i, p in enumerate(params_list):
        shift = 0 if i % 2 == 0 else window_size // 2
        if min(H, W) <= window_size:
            shift = 0
        prepped.append(prepare_block_params(p, H, W, eff_ws, shift, num_heads))
    return prepped


# ----------------------------------------------------------------------------
# Forward passes
# ----------------------------------------------------------------------------
def swin_block_forward_pallas(x, pp, H, W):
    B, L, C = x.shape
    ws, shift = pp['eff_ws'], pp['shift']
    num_heads = pp['num_heads']
    N = ws * ws
    nWin = pp['bias_nwin'].shape[1]
    shortcut = x
    pad_h = (ws - H % ws) % ws
    pad_w = (ws - W % ws) % ws
    # LN is per-token, so it commutes with roll/window-partition; fuse it into
    # the attention kernel whenever no padding tokens are introduced.
    fuse_ln = (pad_h == 0 and pad_w == 0)

    if fuse_ln:
        xs = x.reshape(B, H, W, C)          # raw tokens; LN happens inside attention
    else:
        xs = layernorm_pallas(x.reshape(B * L, C), pp['ln1_g'], pp['ln1_b'])
        xs = xs.reshape(B, H, W, C)

    if shift > 0:
        xs = jnp.roll(xs, shift=(-shift, -shift), axis=(1, 2))

    xw, Hp, Wp = window_partition_jax(xs, ws)
    Bn = xw.shape[0]
    xw2d = xw.reshape(Bn * N, C)            # lane/sublane-dense 2-D kernel boundary

    attn2d = window_attention_pallas(xw2d, pp['ln1_g'], pp['ln1_b'],
                                     pp['wqkv_b'], pp['bqkv_s'],
                                     pp['wproj_b'], pp['bproj'],
                                     pp['bias_nwin'], num_heads, nWin,
                                     fuse_ln=fuse_ln)

    attn_out = attn2d.reshape(Bn, ws, ws, C)
    xr = window_reverse_jax(attn_out, ws, Hp, Wp, H, W)
    if shift > 0:
        xr = jnp.roll(xr, shift=(shift, shift), axis=(1, 2))
    x = shortcut + xr.reshape(B, L, C)

    # norm2 + MLP + residual (fused)
    x = mlp_block_pallas(x.reshape(B * L, C), pp['ln2_g'], pp['ln2_b'],
                         pp['fc1_wb'], pp['fc1_b'], pp['fc2_wb'], pp['fc2_b'])
    return x.reshape(B, L, C)


def basic_layer_forward_pallas(x, prepped_list, H, W):
    for pp in prepped_list:
        x = swin_block_forward_pallas(x, pp, H, W)
    # downsample is None -> identity
    return x


def swin_block_forward_ref(x, p, H, W, ws, shift, num_heads, rel_idx, mask):
    B, L, C = x.shape
    shortcut = x
    N = ws * ws
    xs = layernorm_ref(x.reshape(B * L, C), p['ln1_g'], p['ln1_b']).reshape(B, H, W, C)
    if shift > 0:
        xs = jnp.roll(xs, shift=(-shift, -shift), axis=(1, 2))
    xw, Hp, Wp = window_partition_jax(xs, ws)
    xw = xw.reshape(-1, N, C)
    rel_bias = p['rel_table'][rel_idx.reshape(-1)].reshape(N, N, num_heads).transpose(2, 0, 1)
    attn_out = window_attention_ref(xw, p['wqkv'], p['bqkv'], p['wproj'],
                                    p['bproj'], rel_bias, mask, num_heads)
    attn_out = attn_out.reshape(-1, ws, ws, C)
    xr = window_reverse_jax(attn_out, ws, Hp, Wp, H, W)
    if shift > 0:
        xr = jnp.roll(xr, shift=(shift, shift), axis=(1, 2))
    x = shortcut + xr.reshape(B, L, C)
    x = mlp_block_ref(x.reshape(B * L, C), p['ln2_g'], p['ln2_b'],
                      p['fc1_w'], p['fc1_b'], p['fc2_w'], p['fc2_b'])
    return x.reshape(B, L, C)


def basic_layer_forward_ref(x, params_list, H, W, window_size, num_heads):
    eff_ws = min(H, W) if min(H, W) <= window_size else window_size
    rel_idx = relative_position_index(eff_ws)
    for i, p in enumerate(params_list):
        shift = 0 if i % 2 == 0 else window_size // 2
        if min(H, W) <= window_size:
            shift = 0
        mask = jnp.asarray(compute_attn_mask(H, W, eff_ws, shift))
        x = swin_block_forward_ref(x, p, H, W, eff_ws, shift, num_heads, rel_idx, mask)
    return x


# ----------------------------------------------------------------------------
# Deterministic parameter init
# ----------------------------------------------------------------------------
def init_block_params(key, dim, num_heads, window_size, mlp_ratio):
    hidden = int(dim * mlp_ratio)
    tbl = (2 * window_size - 1) ** 2
    ks = jax.random.split(key, 5)
    f32 = jnp.float32
    return dict(
        ln1_g=jnp.ones((1, dim), f32), ln1_b=jnp.zeros((1, dim), f32),
        wqkv=0.02 * jax.random.normal(ks[0], (dim, 3 * dim), f32),
        bqkv=jnp.zeros((1, 3 * dim), f32),
        wproj=0.02 * jax.random.normal(ks[1], (dim, dim), f32),
        bproj=jnp.zeros((1, dim), f32),
        rel_table=0.02 * jax.random.normal(ks[2], (tbl, num_heads), f32),
        ln2_g=jnp.ones((1, dim), f32), ln2_b=jnp.zeros((1, dim), f32),
        fc1_w=0.02 * jax.random.normal(ks[3], (dim, hidden), f32),
        fc1_b=jnp.zeros((1, hidden), f32),
        fc2_w=0.02 * jax.random.normal(ks[4], (hidden, dim), f32),
        fc2_b=jnp.zeros((1, dim), f32),
    )


# ----------------------------------------------------------------------------
if __name__ == "__main__":
    B = 2
    H = W = 8
    dim = 32
    depth = 2
    num_heads = 4
    window_size = 4
    mlp_ratio = 4.0

    key = jax.random.PRNGKey(0)
    kx, kp = jax.random.split(key)
    x = jax.random.normal(kx, (B, H * W, dim), jnp.float32)

    eff_ws = min(H, W) if min(H, W) <= window_size else window_size
    params = [init_block_params(k, dim, num_heads, eff_ws, mlp_ratio)
              for k in jax.random.split(kp, depth)]

    # one-time weight prep (scale fold, bf16 casts, bias+mask combine)
    prepped = prepare_basic_layer_params(params, H, W, window_size, num_heads)

    out = basic_layer_forward_pallas(x, prepped, H, W)
    out = jax.block_until_ready(out)

    ref = basic_layer_forward_ref(x, params, H, W, window_size, num_heads)
    ref = jax.block_until_ready(ref)

    assert out.shape == (B, H * W, dim)
    # Pallas path uses bf16 MXU operands with f32 accumulation; reference is pure f32.
    if not np.allclose(np.asarray(out), np.asarray(ref), atol=2e-2, rtol=2e-2):
        raise RuntimeError("Pallas output mismatch vs reference")
    print("KERNEL_OK")
</pallas_src>

<mosaic_0001>
module attributes {stable_mosaic.version = 11 : i64} {
  func.func @kernel(%arg0: i32, %arg1: memref<64x32xf32, #tpu.memory_space<vmem>>, %arg2: memref<1x32xf32, #tpu.memory_space<vmem>>, %arg3: memref<1x32xf32, #tpu.memory_space<vmem>>, %arg4: memref<32x96xbf16, #tpu.memory_space<vmem>>, %arg5: memref<1x96xf32, #tpu.memory_space<vmem>>, %arg6: memref<32x32xbf16, #tpu.memory_space<vmem>>, %arg7: memref<1x32xf32, #tpu.memory_space<vmem>>, %arg8: memref<4x4x16x16xf32, #tpu.memory_space<vmem>>, %arg9: memref<64x32xf32, #tpu.memory_space<vmem>>) attributes {dimension_semantics = [#tpu.dimension_semantics<parallel>], iteration_bounds = array<i64: 2>, scalar_prefetch = 0 : i64, scratch_operands = 0 : i64, tpu.core_type = #tpu.core_type<tc>, window_params = [{transform_indices = @transform_0, window_bounds = array<i64: 64, 32>}, {pipeline_mode = #tpu.pipeline_mode<synchronous>, transform_indices = @transform_1, window_bounds = array<i64: 1, 32>}, {pipeline_mode = #tpu.pipeline_mode<synchronous>, transform_indices = @transform_2, window_bounds = array<i64: 1, 32>}, {pipeline_mode = #tpu.pipeline_mode<synchronous>, transform_indices = @transform_3, window_bounds = array<i64: 32, 96>}, {pipeline_mode = #tpu.pipeline_mode<synchronous>, transform_indices = @transform_4, window_bounds = array<i64: 1, 96>}, {pipeline_mode = #tpu.pipeline_mode<synchronous>, transform_indices = @transform_5, window_bounds = array<i64: 32, 32>}, {pipeline_mode = #tpu.pipeline_mode<synchronous>, transform_indices = @transform_6, window_bounds = array<i64: 1, 32>}, {pipeline_mode = #tpu.pipeline_mode<synchronous>, transform_indices = @transform_7, window_bounds = array<i64: 4, 4, 16, 16>}, {transform_indices = @transform_8, window_bounds = array<i64: 64, 32>}]} {
    %c0 = arith.constant 0 : index
    %c0_0 = arith.constant 0 : index
    %0 = vector.load %arg1[%c0, %c0_0] : memref<64x32xf32, #tpu.memory_space<vmem>>, vector<64x32xf32>
    %cst = arith.constant dense<0.000000e+00> : vector<64xf32>
    %1 = vector.multi_reduction <add>, %0, %cst [1] : vector<64x32xf32> to vector<64xf32>
    %2 = vector.shape_cast %1 : vector<64xf32> to vector<64x1xf32>
    %cst_1 = arith.constant 3.200000e+01 : f32
    %3 = vector.broadcast %cst_1 : f32 to vector<64x1xf32>
    %4 = arith.divf %2, %3 : vector<64x1xf32>
    %5 = vector.broadcast %4 : vector<64x1xf32> to vector<64x32xf32>
    %6 = arith.subf %0, %5 : vector<64x32xf32>
    %7 = arith.mulf %6, %6 : vector<64x32xf32>
    %cst_2 = arith.constant dense<0.000000e+00> : vector<64xf32>
    %8 = vector.multi_reduction <add>, %7, %cst_2 [1] : vector<64x32xf32> to vector<64xf32>
    %9 = vector.shape_cast %8 : vector<64xf32> to vector<64x1xf32>
    %cst_3 = arith.constant 3.200000e+01 : f32
    %10 = vector.broadcast %cst_3 : f32 to vector<64x1xf32>
    %11 = arith.divf %9, %10 : vector<64x1xf32>
    %12 = vector.broadcast %4 : vector<64x1xf32> to vector<64x32xf32>
    %13 = arith.subf %0, %12 : vector<64x32xf32>
    %cst_4 = arith.constant 9.99999974E-6 : f32
    %14 = vector.broadcast %cst_4 : f32 to vector<64x1xf32>
    %15 = arith.addf %11, %14 : vector<64x1xf32>
    %16 = math.rsqrt %15 : vector<64x1xf32>
    %17 = vector.broadcast %16 : vector<64x1xf32> to vector<64x32xf32>
    %18 = arith.mulf %13, %17 : vector<64x32xf32>
    %c0_5 = arith.constant 0 : index
    %c0_6 = arith.constant 0 : index
    %19 = vector.load %arg2[%c0_5, %c0_6] : memref<1x32xf32, #tpu.memory_space<vmem>>, vector<1x32xf32>
    %20 = vector.broadcast %19 : vector<1x32xf32> to vector<64x32xf32>
    %21 = arith.mulf %18, %20 : vector<64x32xf32>
    %c0_7 = arith.constant 0 : index
    %c0_8 = arith.constant 0 : index
    %22 = vector.load %arg3[%c0_7, %c0_8] : memref<1x32xf32, #tpu.memory_space<vmem>>, vector<1x32xf32>
    %23 = vector.broadcast %22 : vector<1x32xf32> to vector<64x32xf32>
    %24 = arith.addf %21, %23 : vector<64x32xf32>
    %25 = arith.truncf %24 : vector<64x32xf32> to vector<64x32xbf16>
    %c0_9 = arith.constant 0 : index
    %c0_10 = arith.constant 0 : index
    %26 = vector.load %arg4[%c0_9, %c0_10] : memref<32x96xbf16, #tpu.memory_space<vmem>>, vector<32x96xbf16>
    %cst_11 = arith.constant dense<0.000000e+00> : vector<64x96xf32>
    %27 = tpu.matmul %25, %26, %cst_11 {dimension_numbers = #tpu.dot_dimension_numbers<[1], [0], [0], [1], [0, 0, 1, 1], [], []>} : vector<64x32xbf16>, vector<32x96xbf16>, vector<64x96xf32> -> vector<64x96xf32>
    %c0_12 = arith.constant 0 : index
    %c0_13 = arith.constant 0 : index
    %28 = vector.load %arg5[%c0_12, %c0_13] : memref<1x96xf32, #tpu.memory_space<vmem>>, vector<1x96xf32>
    %29 = vector.broadcast %28 : vector<1x96xf32> to vector<64x96xf32>
    %30 = arith.addf %27, %29 : vector<64x96xf32>
    %cst_14 = arith.constant 0.000000e+00 : f32
    %31 = vector.broadcast %cst_14 : f32 to vector<64x32xf32>
    %32 = vector.extract_strided_slice %30 {offsets = [0, 0], sizes = [64, 8], strides = [1, 1]} : vector<64x96xf32> to vector<64x8xf32>
    %33 = vector.shape_cast %32 : vector<64x8xf32> to vector<4x16x8xf32>
    %34 = arith.truncf %33 : vector<4x16x8xf32> to vector<4x16x8xbf16>
    %35 = vector.extract_strided_slice %30 {offsets = [0, 32], sizes = [64, 8], strides = [1, 1]} : vector<64x96xf32> to vector<64x8xf32>
    %36 = vector.shape_cast %35 : vector<64x8xf32> to vector<4x16x8xf32>
    %37 = arith.truncf %36 : vector<4x16x8xf32> to vector<4x16x8xbf16>
    %38 = vector.extract_strided_slice %30 {offsets = [0, 64], sizes = [64, 8], strides = [1, 1]} : vector<64x96xf32> to vector<64x8xf32>
    %39 = vector.shape_cast %38 : vector<64x8xf32> to vector<4x16x8xf32>
    %40 = arith.truncf %39 : vector<4x16x8xf32> to vector<4x16x8xbf16>
    "tpu.trace_start"() <{level = 10 : i32, message = "wnd,wmd->wnm"}> : () -> ()
    %cst_15 = arith.constant dense<0.000000e+00> : vector<4x16x16xf32>
    %41 = tpu.matmul %34, %37, %cst_15 {dimension_numbers = #tpu.dot_dimension_numbers<[2], [2], [1], [1], [0, 0, 0, 1, 1, 1], [0], [0]>} : vector<4x16x8xbf16>, vector<4x16x8xbf16>, vector<4x16x16xf32> -> vector<4x16x16xf32>
    "tpu.trace_stop"() : () -> ()
    %42 = vector.shape_cast %41 : vector<4x16x16xf32> to vector<1x4x16x16xf32>
    %c0_16 = arith.constant 0 : index
    %c0_17 = arith.constant 0 : index
    %c0_18 = arith.constant 0 : index
    %c0_19 = arith.constant 0 : index
    %43 = vector.load %arg8[%c0_16, %c0_17, %c0_18, %c0_19] : memref<4x4x16x16xf32, #tpu.memory_space<vmem>>, vector<1x4x16x16xf32>
    %44 = vector.shape_cast %43 : vector<1x4x16x16xf32> to vector<4x16x16xf32>
    %45 = vector.shape_cast %44 : vector<4x16x16xf32> to vector<1x4x16x16xf32>
    %46 = arith.addf %42, %45 : vector<1x4x16x16xf32>
    %47 = vector.shape_cast %46 : vector<1x4x16x16xf32> to vector<4x16x16xf32>
    %cst_20 = arith.constant dense<0xFF800000> : vector<4x16xf32>
    %48 = vector.multi_reduction <maximumf>, %47, %cst_20 [2] : vector<4x16x16xf32> to vector<4x16xf32>
    %49 = vector.shape_cast %48 : vector<4x16xf32> to vector<4x16x1xf32>
    %50 = vector.broadcast %49 : vector<4x16x1xf32> to vector<4x16x16xf32>
    %51 = arith.subf %47, %50 : vector<4x16x16xf32>
    %52 = math.exp %51 : vector<4x16x16xf32>
    %cst_21 = arith.constant dense<0.000000e+00> : vector<4x16xf32>
    %53 = vector.multi_reduction <add>, %52, %cst_21 [2] : vector<4x16x16xf32> to vector<4x16xf32>
    %54 = vector.shape_cast %53 : vector<4x16xf32> to vector<4x16x1xf32>
    %55 = arith.truncf %52 : vector<4x16x16xf32> to vector<4x16x16xbf16>
    "tpu.trace_start"() <{level = 10 : i32, message = "wnm,wmd->wnd"}> : () -> ()
    %cst_22 = arith.constant dense<0.000000e+00> : vector<4x16x8xf32>
    %56 = tpu.matmul %55, %40, %cst_22 {dimension_numbers = #tpu.dot_dimension_numbers<[2], [1], [1], [2], [0, 0, 0, 1, 1, 2], [0], [0]>} : vector<4x16x16xbf16>, vector<4x16x8xbf16>, vector<4x16x8xf32> -> vector<4x16x8xf32>
    "tpu.trace_stop"() : () -> ()
    %57 = tpu.reciprocal %54 {approx = true} : vector<4x16x1xf32> -> vector<4x16x1xf32>
    %58 = vector.broadcast %57 : vector<4x16x1xf32> to vector<4x16x8xf32>
    %59 = arith.mulf %56, %58 : vector<4x16x8xf32>
    %60 = vector.shape_cast %59 : vector<4x16x8xf32> to vector<64x8xf32>
    %61 = arith.truncf %60 : vector<64x8xf32> to vector<64x8xbf16>
    %c0_23 = arith.constant 0 : index
    %c0_24 = arith.constant 0 : index
    %62 = vector.load %arg6[%c0_23, %c0_24] : memref<32x32xbf16, #tpu.memory_space<vmem>>, vector<8x32xbf16>
    %cst_25 = arith.constant dense<0.000000e+00> : vector<64x32xf32>
    %63 = tpu.matmul %61, %62, %cst_25 {dimension_numbers = #tpu.dot_dimension_numbers<[1], [0], [0], [1], [0, 0, 1, 1], [], []>} : vector<64x8xbf16>, vector<8x32xbf16>, vector<64x32xf32> -> vector<64x32xf32>
    %64 = arith.addf %31, %63 : vector<64x32xf32>
    %65 = vector.extract_strided_slice %30 {offsets = [0, 8], sizes = [64, 8], strides = [1, 1]} : vector<64x96xf32> to vector<64x8xf32>
    %66 = vector.shape_cast %65 : vector<64x8xf32> to vector<4x16x8xf32>
    %67 = arith.truncf %66 : vector<4x16x8xf32> to vector<4x16x8xbf16>
    %68 = vector.extract_strided_slice %30 {offsets = [0, 40], sizes = [64, 8], strides = [1, 1]} : vector<64x96xf32> to vector<64x8xf32>
    %69 = vector.shape_cast %68 : vector<64x8xf32> to vector<4x16x8xf32>
    %70 = arith.truncf %69 : vector<4x16x8xf32> to vector<4x16x8xbf16>
    %71 = vector.extract_strided_slice %30 {offsets = [0, 72], sizes = [64, 8], strides = [1, 1]} : vector<64x96xf32> to vector<64x8xf32>
    %72 = vector.shape_cast %71 : vector<64x8xf32> to vector<4x16x8xf32>
    %73 = arith.truncf %72 : vector<4x16x8xf32> to vector<4x16x8xbf16>
    "tpu.trace_start"() <{level = 10 : i32, message = "wnd,wmd->wnm"}> : () -> ()
    %cst_26 = arith.constant dense<0.000000e+00> : vector<4x16x16xf32>
    %74 = tpu.matmul %67, %70, %cst_26 {dimension_numbers = #tpu.dot_dimension_numbers<[2], [2], [1], [1], [0, 0, 0, 1, 1, 1], [0], [0]>} : vector<4x16x8xbf16>, vector<4x16x8xbf16>, vector<4x16x16xf32> -> vector<4x16x16xf32>
    "tpu.trace_stop"() : () -> ()
    %75 = vector.shape_cast %74 : vector<4x16x16xf32> to vector<1x4x16x16xf32>
    %c1 = arith.constant 1 : index
    %c0_27 = arith.constant 0 : index
    %c0_28 = arith.constant 0 : index
    %c0_29 = arith.constant 0 : index
    %76 = vector.load %arg8[%c1, %c0_27, %c0_28, %c0_29] : memref<4x4x16x16xf32, #tpu.memory_space<vmem>>, vector<1x4x16x16xf32>
    %77 = vector.shape_cast %76 : vector<1x4x16x16xf32> to vector<4x16x16xf32>
    %78 = vector.shape_cast %77 : vector<4x16x16xf32> to vector<1x4x16x16xf32>
    %79 = arith.addf %75, %78 : vector<1x4x16x16xf32>
    %80 = vector.shape_cast %79 : vector<1x4x16x16xf32> to vector<4x16x16xf32>
    %cst_30 = arith.constant dense<0xFF800000> : vector<4x16xf32>
    %81 = vector.multi_reduction <maximumf>, %80, %cst_30 [2] : vector<4x16x16xf32> to vector<4x16xf32>
    %82 = vector.shape_cast %81 : vector<4x16xf32> to vector<4x16x1xf32>
    %83 = vector.broadcast %82 : vector<4x16x1xf32> to vector<4x16x16xf32>
    %84 = arith.subf %80, %83 : vector<4x16x16xf32>
    %85 = math.exp %84 : vector<4x16x16xf32>
    %cst_31 = arith.constant dense<0.000000e+00> : vector<4x16xf32>
    %86 = vector.multi_reduction <add>, %85, %cst_31 [2] : vector<4x16x16xf32> to vector<4x16xf32>
    %87 = vector.shape_cast %86 : vector<4x16xf32> to vector<4x16x1xf32>
    %88 = arith.truncf %85 : vector<4x16x16xf32> to vector<4x16x16xbf16>
    "tpu.trace_start"() <{level = 10 : i32, message = "wnm,wmd->wnd"}> : () -> ()
    %cst_32 = arith.constant dense<0.000000e+00> : vector<4x16x8xf32>
    %89 = tpu.matmul %88, %73, %cst_32 {dimension_numbers = #tpu.dot_dimension_numbers<[2], [1], [1], [2], [0, 0, 0, 1, 1, 2], [0], [0]>} : vector<4x16x16xbf16>, vector<4x16x8xbf16>, vector<4x16x8xf32> -> vector<4x16x8xf32>
    "tpu.trace_stop"() : () -> ()
    %90 = tpu.reciprocal %87 {approx = true} : vector<4x16x1xf32> -> vector<4x16x1xf32>
    %91 = vector.broadcast %90 : vector<4x16x1xf32> to vector<4x16x8xf32>
    %92 = arith.mulf %89, %91 : vector<4x16x8xf32>
    %93 = vector.shape_cast %92 : vector<4x16x8xf32> to vector<64x8xf32>
    %94 = arith.truncf %93 : vector<64x8xf32> to vector<64x8xbf16>
    %c8 = arith.constant 8 : index
    %c0_33 = arith.constant 0 : index
    %95 = vector.load %arg6[%c8, %c0_33] : memref<32x32xbf16, #tpu.memory_space<vmem>>, vector<8x32xbf16>
    %cst_34 = arith.constant dense<0.000000e+00> : vector<64x32xf32>
    %96 = tpu.matmul %94, %95, %cst_34 {dimension_numbers = #tpu.dot_dimension_numbers<[1], [0], [0], [1], [0, 0, 1, 1], [], []>} : vector<64x8xbf16>, vector<8x32xbf16>, vector<64x32xf32> -> vector<64x32xf32>
    %97 = arith.addf %64, %96 : vector<64x32xf32>
    %98 = vector.extract_strided_slice %30 {offsets = [0, 16], sizes = [64, 8], strides = [1, 1]} : vector<64x96xf32> to vector<64x8xf32>
    %99 = vector.shape_cast %98 : vector<64x8xf32> to vector<4x16x8xf32>
    %100 = arith.truncf %99 : vector<4x16x8xf32> to vector<4x16x8xbf16>
    %101 = vector.extract_strided_slice %30 {offsets = [0, 48], sizes = [64, 8], strides = [1, 1]} : vector<64x96xf32> to vector<64x8xf32>
    %102 = vector.shape_cast %101 : vector<64x8xf32> to vector<4x16x8xf32>
    %103 = arith.truncf %102 : vector<4x16x8xf32> to vector<4x16x8xbf16>
    %104 = vector.extract_strided_slice %30 {offsets = [0, 80], sizes = [64, 8], strides = [1, 1]} : vector<64x96xf32> to vector<64x8xf32>
    %105 = vector.shape_cast %104 : vector<64x8xf32> to vector<4x16x8xf32>
    %106 = arith.truncf %105 : vector<4x16x8xf32> to vector<4x16x8xbf16>
    "tpu.trace_start"() <{level = 10 : i32, message = "wnd,wmd->wnm"}> : () -> ()
    %cst_35 = arith.constant dense<0.000000e+00> : vector<4x16x16xf32>
    %107 = tpu.matmul %100, %103, %cst_35 {dimension_numbers = #tpu.dot_dimension_numbers<[2], [2], [1], [1], [0, 0, 0, 1, 1, 1], [0], [0]>} : vector<4x16x8xbf16>, vector<4x16x8xbf16>, vector<4x16x16xf32> -> vector<4x16x16xf32>
    "tpu.trace_stop"() : () -> ()
    %108 = vector.shape_cast %107 : vector<4x16x16xf32> to vector<1x4x16x16xf32>
    %c2 = arith.constant 2 : index
    %c0_36 = arith.constant 0 : index
    %c0_37 = arith.constant 0 : index
    %c0_38 = arith.constant 0 : index
    %109 = vector.load %arg8[%c2, %c0_36, %c0_37, %c0_38] : memref<4x4x16x16xf32, #tpu.memory_space<vmem>>, vector<1x4x16x16xf32>
    %110 = vector.shape_cast %109 : vector<1x4x16x16xf32> to vector<4x16x16xf32>
    %111 = vector.shape_cast %110 : vector<4x16x16xf32> to vector<1x4x16x16xf32>
    %112 = arith.addf %108, %111 : vector<1x4x16x16xf32>
    %113 = vector.shape_cast %112 : vector<1x4x16x16xf32> to vector<4x16x16xf32>
    %cst_39 = arith.constant dense<0xFF800000> : vector<4x16xf32>
    %114 = vector.multi_reduction <maximumf>, %113, %cst_39 [2] : vector<4x16x16xf32> to vector<4x16xf32>
    %115 = vector.shape_cast %114 : vector<4x16xf32> to vector<4x16x1xf32>
    %116 = vector.broadcast %115 : vector<4x16x1xf32> to vector<4x16x16xf32>
    %117 = arith.subf %113, %116 : vector<4x16x16xf32>
    %118 = math.exp %117 : vector<4x16x16xf32>
    %cst_40 = arith.constant dense<0.000000e+00> : vector<4x16xf32>
    %119 = vector.multi_reduction <add>, %118, %cst_40 [2] : vector<4x16x16xf32> to vector<4x16xf32>
    %120 = vector.shape_cast %119 : vector<4x16xf32> to vector<4x16x1xf32>
    %121 = arith.truncf %118 : vector<4x16x16xf32> to vector<4x16x16xbf16>
    "tpu.trace_start"() <{level = 10 : i32, message = "wnm,wmd->wnd"}> : () -> ()
    %cst_41 = arith.constant dense<0.000000e+00> : vector<4x16x8xf32>
    %122 = tpu.matmul %121, %106, %cst_41 {dimension_numbers = #tpu.dot_dimension_numbers<[2], [1], [1], [2], [0, 0, 0, 1, 1, 2], [0], [0]>} : vector<4x16x16xbf16>, vector<4x16x8xbf16>, vector<4x16x8xf32> -> vector<4x16x8xf32>
    "tpu.trace_stop"() : () -> ()
    %123 = tpu.reciprocal %120 {approx = true} : vector<4x16x1xf32> -> vector<4x16x1xf32>
    %124 = vector.broadcast %123 : vector<4x16x1xf32> to vector<4x16x8xf32>
    %125 = arith.mulf %122, %124 : vector<4x16x8xf32>
    %126 = vector.shape_cast %125 : vector<4x16x8xf32> to vector<64x8xf32>
    %127 = arith.truncf %126 : vector<64x8xf32> to vector<64x8xbf16>
    %c16 = arith.constant 16 : index
    %c0_42 = arith.constant 0 : index
    %128 = vector.load %arg6[%c16, %c0_42] : memref<32x32xbf16, #tpu.memory_space<vmem>>, vector<8x32xbf16>
    %cst_43 = arith.constant dense<0.000000e+00> : vector<64x32xf32>
    %129 = tpu.matmul %127, %128, %cst_43 {dimension_numbers = #tpu.dot_dimension_numbers<[1], [0], [0], [1], [0, 0, 1, 1], [], []>} : vector<64x8xbf16>, vector<8x32xbf16>, vector<64x32xf32> -> vector<64x32xf32>
    %130 = arith.addf %97, %129 : vector<64x32xf32>
    %131 = vector.extract_strided_slice %30 {offsets = [0, 24], sizes = [64, 8], strides = [1, 1]} : vector<64x96xf32> to vector<64x8xf32>
    %132 = vector.shape_cast %131 : vector<64x8xf32> to vector<4x16x8xf32>
    %133 = arith.truncf %132 : vector<4x16x8xf32> to vector<4x16x8xbf16>
    %134 = vector.extract_strided_slice %30 {offsets = [0, 56], sizes = [64, 8], strides = [1, 1]} : vector<64x96xf32> to vector<64x8xf32>
    %135 = vector.shape_cast %134 : vector<64x8xf32> to vector<4x16x8xf32>
    %136 = arith.truncf %135 : vector<4x16x8xf32> to vector<4x16x8xbf16>
    %137 = vector.extract_strided_slice %30 {offsets = [0, 88], sizes = [64, 8], strides = [1, 1]} : vector<64x96xf32> to vector<64x8xf32>
    %138 = vector.shape_cast %137 : vector<64x8xf32> to vector<4x16x8xf32>
    %139 = arith.truncf %138 : vector<4x16x8xf32> to vector<4x16x8xbf16>
    "tpu.trace_start"() <{level = 10 : i32, message = "wnd,wmd->wnm"}> : () -> ()
    %cst_44 = arith.constant dense<0.000000e+00> : vector<4x16x16xf32>
    %140 = tpu.matmul %133, %136, %cst_44 {dimension_numbers = #tpu.dot_dimension_numbers<[2], [2], [1], [1], [0, 0, 0, 1, 1, 1], [0], [0]>} : vector<4x16x8xbf16>, vector<4x16x8xbf16>, vector<4x16x16xf32> -> vector<4x16x16xf32>
    "tpu.trace_stop"() : () -> ()
    %141 = vector.shape_cast %140 : vector<4x16x16xf32> to vector<1x4x16x16xf32>
    %c3 = arith.constant 3 : index
    %c0_45 = arith.constant 0 : index
    %c0_46 = arith.constant 0 : index
    %c0_47 = arith.constant 0 : index
    %142 = vector.load %arg8[%c3, %c0_45, %c0_46, %c0_47] : memref<4x4x16x16xf32, #tpu.memory_space<vmem>>, vector<1x4x16x16xf32>
    %143 = vector.shape_cast %142 : vector<1x4x16x16xf32> to vector<4x16x16xf32>
    %144 = vector.shape_cast %143 : vector<4x16x16xf32> to vector<1x4x16x16xf32>
    %145 = arith.addf %141, %144 : vector<1x4x16x16xf32>
    %146 = vector.shape_cast %145 : vector<1x4x16x16xf32> to vector<4x16x16xf32>
    %cst_48 = arith.constant dense<0xFF800000> : vector<4x16xf32>
    %147 = vector.multi_reduction <maximumf>, %146, %cst_48 [2] : vector<4x16x16xf32> to vector<4x16xf32>
    %148 = vector.shape_cast %147 : vector<4x16xf32> to vector<4x16x1xf32>
    %149 = vector.broadcast %148 : vector<4x16x1xf32> to vector<4x16x16xf32>
    %150 = arith.subf %146, %149 : vector<4x16x16xf32>
    %151 = math.exp %150 : vector<4x16x16xf32>
    %cst_49 = arith.constant dense<0.000000e+00> : vector<4x16xf32>
    %152 = vector.multi_reduction <add>, %151, %cst_49 [2] : vector<4x16x16xf32> to vector<4x16xf32>
    %153 = vector.shape_cast %152 : vector<4x16xf32> to vector<4x16x1xf32>
    %154 = arith.truncf %151 : vector<4x16x16xf32> to vector<4x16x16xbf16>
    "tpu.trace_start"() <{level = 10 : i32, message = "wnm,wmd->wnd"}> : () -> ()
    %cst_50 = arith.constant dense<0.000000e+00> : vector<4x16x8xf32>
    %155 = tpu.matmul %154, %139, %cst_50 {dimension_numbers = #tpu.dot_dimension_numbers<[2], [1], [1], [2], [0, 0, 0, 1, 1, 2], [0], [0]>} : vector<4x16x16xbf16>, vector<4x16x8xbf16>, vector<4x16x8xf32> -> vector<4x16x8xf32>
    "tpu.trace_stop"() : () -> ()
    %156 = tpu.reciprocal %153 {approx = true} : vector<4x16x1xf32> -> vector<4x16x1xf32>
    %157 = vector.broadcast %156 : vector<4x16x1xf32> to vector<4x16x8xf32>
    %158 = arith.mulf %155, %157 : vector<4x16x8xf32>
    %159 = vector.shape_cast %158 : vector<4x16x8xf32> to vector<64x8xf32>
    %160 = arith.truncf %159 : vector<64x8xf32> to vector<64x8xbf16>
    %c24 = arith.constant 24 : index
    %c0_51 = arith.constant 0 : index
    %161 = vector.load %arg6[%c24, %c0_51] : memref<32x32xbf16, #tpu.memory_space<vmem>>, vector<8x32xbf16>
    %cst_52 = arith.constant dense<0.000000e+00> : vector<64x32xf32>
    %162 = tpu.matmul %160, %161, %cst_52 {dimension_numbers = #tpu.dot_dimension_numbers<[1], [0], [0], [1], [0, 0, 1, 1], [], []>} : vector<64x8xbf16>, vector<8x32xbf16>, vector<64x32xf32> -> vector<64x32xf32>
    %163 = arith.addf %130, %162 : vector<64x32xf32>
    %c0_53 = arith.constant 0 : index
    %c0_54 = arith.constant 0 : index
    %164 = vector.load %arg7[%c0_53, %c0_54] : memref<1x32xf32, #tpu.memory_space<vmem>>, vector<1x32xf32>
    %165 = vector.broadcast %164 : vector<1x32xf32> to vector<64x32xf32>
    %166 = arith.addf %163, %165 : vector<64x32xf32>
    %c0_55 = arith.constant 0 : index
    %c0_56 = arith.constant 0 : index
    %167 = vector.load %arg9[%c0_55, %c0_56] : memref<64x32xf32, #tpu.memory_space<vmem>>, vector<64x32xf32>
    tpu.vector_store %arg9[%c0_55, %c0_56], %166 {strides = array<i32>} : memref<64x32xf32, #tpu.memory_space<vmem>>, vector<64x32xf32>,
    return
  }
  func.func @transform_0(%arg0: i32) -> (i32, i32) {
    %c0_i32 = arith.constant 0 : i32
    %c0_i32_0 = arith.constant 0 : i32
    return %arg0, %c0_i32 : i32, i32
  }
  func.func @transform_1(%arg0: i32) -> (i32, i32) {
    %c0_i32 = arith.constant 0 : i32
    %c0_i32_0 = arith.constant 0 : i32
    %c0_i32_1 = arith.constant 0 : i32
    return %c0_i32, %c0_i32_0 : i32, i32
  }
  func.func @transform_2(%arg0: i32) -> (i32, i32) {
    %c0_i32 = arith.constant 0 : i32
    %c0_i32_0 = arith.constant 0 : i32
    %c0_i32_1 = arith.constant 0 : i32
    return %c0_i32, %c0_i32_0 : i32, i32
  }
  func.func @transform_3(%arg0: i32) -> (i32, i32) {
    %c0_i32 = arith.constant 0 : i32
    %c0_i32_0 = arith.constant 0 : i32
    %c0_i32_1 = arith.constant 0 : i32
    return %c0_i32, %c0_i32_0 : i32, i32
  }
  func.func @transform_4(%arg0: i32) -> (i32, i32) {
    %c0_i32 = arith.constant 0 : i32
    %c0_i32_0 = arith.constant 0 : i32
    %c0_i32_1 = arith.constant 0 : i32
    return %c0_i32, %c0_i32_0 : i32, i32
  }
  func.func @transform_5(%arg0: i32) -> (i32, i32) {
    %c0_i32 = arith.constant 0 : i32
    %c0_i32_0 = arith.constant 0 : i32
    %c0_i32_1 = arith.constant 0 : i32
    return %c0_i32, %c0_i32_0 : i32, i32
  }
  func.func @transform_6(%arg0: i32) -> (i32, i32) {
    %c0_i32 = arith.constant 0 : i32
    %c0_i32_0 = arith.constant 0 : i32
    %c0_i32_1 = arith.constant 0 : i32
    return %c0_i32, %c0_i32_0 : i32, i32
  }
  func.func @transform_7(%arg0: i32) -> (i32, i32, i32, i32) {
    %c0_i32 = arith.constant 0 : i32
    %c0_i32_0 = arith.constant 0 : i32
    %c0_i32_1 = arith.constant 0 : i32
    %c0_i32_2 = arith.constant 0 : i32
    %c0_i32_3 = arith.constant 0 : i32
    return %c0_i32, %c0_i32_0, %c0_i32_1, %c0_i32_2 : i32, i32, i32, i32
  }
  func.func @transform_8(%arg0: i32) -> (i32, i32) {
    %c0_i32 = arith.constant 0 : i32
    %c0_i32_0 = arith.constant 0 : i32
    return %arg0, %c0_i32 : i32, i32
  }
}

</mosaic_0001>

<llo_original>
// kernel: tpu_custom_call.1
$region0: #{tpu_custom_call.1}
  #allocation0 [shape = 'u32[]', space=smem, size = 0x4, offset = 0x4, fixed_abs, tag = 'smem constant byte address 0x4 - core index']
  #allocation1 [shape = 'u32[144,128]{1,0:T(1,128)}', space=vmem, size = 0x12000, scoped, tag = 'internal scratch']
  %s0 = inlined_call_operand.vmem [shape: f32[128,32], index: 0, kind: input, shape index: {}]
  %s1 = inlined_call_operand.vmem [shape: f32[1,32], index: 1, kind: input, shape index: {}]
  %s2 = inlined_call_operand.vmem [shape: f32[1,32], index: 2, kind: input, shape index: {}]
  %s3 = inlined_call_operand.vmem [shape: bf16[32,96], index: 3, kind: input, shape index: {}]
  %s4 = inlined_call_operand.vmem [shape: f32[1,96], index: 4, kind: input, shape index: {}]
  %s5 = inlined_call_operand.vmem [shape: bf16[32,32], index: 5, kind: input, shape index: {}]
  %s6 = inlined_call_operand.vmem [shape: f32[1,32], index: 6, kind: input, shape index: {}]
  %s7 = inlined_call_operand.hbm [shape: f32[4,4,16,16], index: 7, kind: input, shape index: {}]
  %s8 = inlined_call_operand.vmem [shape: f32[128,32], index: 8, kind: output, shape index: {}]
  %s9 = sld [smem:[#allocation0]]
  $region69: #{tpu_custom_call.1} parent=0
    _
  %s11 = ssub.s32 1, %s9
  %s12 = scalar_select 0, %s11, %s9
  $region1: #{tpu_custom_call.1} parent=0
    #allocation2 [shape = 'u8[131072]{0}', space=vmem, size = 0x20000, scoped, tag = 'input window, operand 7, single buffered']
    #allocation3 [shape = 's32[2]{0}', space=sflag, size = 0x8, scoped, tag = 'scoped memory for tpu_custom_call.1']
    %13 = vsyncpa [#allocation3], 0
    loop: start=0, step=1, limit=4
    $region2: #{tpu_custom_call.1} parent=1 // loop_pre_header
      _
    $region3: #{tpu_custom_call.1} parent=1 // loop_header
      %s15 = sphi 0, %s19
      %p16 = scmp.ge.s32.totalorder %s15, 4
      %s25 = sphi 0, %s27
      %s28 = sphi 0, %s25
      %s29 = sphi 0, %s28
      %s45 = sphi 0, %s29
      %s49 = sphi 0, %s49
      %s51 = sphi 0, %s49
      %s52 = sphi 0, %s51
      %s66 = sphi 0, %s52
      %s70 = sphi 0, %s70
      %s72 = sphi 0, %s70
      %s73 = sphi 0, %s72
      %s87 = sphi 0, %s73
      %s91 = sphi 0, %s91
      %s93 = sphi 0, %s91
      %s94 = sphi 0, %s93
      %s108 = sphi 0, %s94
      %s112 = sphi 0, %s112
      %s114 = sphi 0, %s112
      %s115 = sphi 0, %s114
      %s129 = sphi 0, %s115
      %s133 = sphi 0, %s133
      %s135 = sphi 0, %s133
      %s136 = sphi 0, %s135
      %s150 = sphi 0, %s136
      %s154 = sphi 0, %s154
      %s156 = sphi 0, %s154
      %s157 = sphi 0, %s156
      %s171 = sphi 0, %s157
      %s175 = sphi 0, %s175
      %s177 = sphi 0, %s175
      %s178 = sphi 0, %s177
      %s192 = sphi 0, %s178
      %s198 = sphi 0, %s200
      %s201 = sphi 0, %s198
      %s202 = sphi 0, %s201
      %s218 = sphi 0, %s202
    $region4: #{tpu_custom_call.1} parent=1 // loop_header_branch
      %18 = sbr.rel (%p16) target = $region8
    $region5: #{tpu_custom_call.1} parent=1 // loop_body
      %s20 = ssub.s32 %s15, 1
      %s21 = ssub.s32 %s15, 2
      %s22 = sadd.s32 %s15, 1
      %s23 = ssub.s32 %s15, %s22
      %p24 = scmp.eq.s32.totalorder %s23, 0
      %s26 = sadd.s32 %s25, 1
      %s27 = scalar_select %p24, %s25, %s26
      %p30 = pneg %p24
      %p31 = scmp.eq.s32.totalorder %s15, 1
      %p32 = por %p30, %p31
      %p33 = scmp.ne.s32.totalorder %s25, %s28
      %p34 = scmp.eq.s32.totalorder %s15, 0
      %p35 = por %p33, %p34
      %p36 = scmp.ne.s32.totalorder %s25, %s28
      %p37 = scmp.eq.s32.totalorder %s20, 1
      %p38 = por %p36, %p37
      %p39 = scmp.ne.s32.totalorder %s28, %s29
      %p40 = scmp.eq.s32.totalorder %s20, 0
      %p41 = por %p39, %p40
      %p42 = scmp.ne.s32.totalorder %s28, %s29
      %p43 = scmp.eq.s32.totalorder %s21, 1
      %p44 = por %p42, %p43
      %p46 = scmp.ne.s32.totalorder %s29, %s45
      %p47 = scmp.eq.s32.totalorder %s21, 0
      %p48 = por %p46, %p47
      %s50 = sadd.s32 %s49, 1
      %p53 = scmp.eq.s32.totalorder %s15, 1
      %p54 = scmp.ne.s32.totalorder %s49, %s51
      %p55 = scmp.eq.s32.totalorder %s15, 0
      %p56 = por %p54, %p55
      %p57 = scmp.ne.s32.totalorder %s49, %s51
      %p58 = scmp.eq.s32.totalorder %s20, 1
      %p59 = por %p57, %p58
      %p60 = scmp.ne.s32.totalorder %s51, %s52
      %p61 = scmp.eq.s32.totalorder %s20, 0
      %p62 = por %p60, %p61
      %p63 = scmp.ne.s32.totalorder %s51, %s52
      %p64 = scmp.eq.s32.totalorder %s21, 1
      %p65 = por %p63, %p64
      %p67 = scmp.ne.s32.totalorder %s52, %s66
      %p68 = scmp.eq.s32.totalorder %s21, 0
      %p69 = por %p67, %p68
      %s71 = sadd.s32 %s70, 1
      %p74 = scmp.eq.s32.totalorder %s15, 1
      %p75 = scmp.ne.s32.totalorder %s70, %s72
      %p76 = scmp.eq.s32.totalorder %s15, 0
      %p77 = por %p75, %p76
      %p78 = scmp.ne.s32.totalorder %s70, %s72
      %p79 = scmp.eq.s32.totalorder %s20, 1
      %p80 = por %p78, %p79
      %p81 = scmp.ne.s32.totalorder %s72, %s73
      %p82 = scmp.eq.s32.totalorder %s20, 0
      %p83 = por %p81, %p82
      %p84 = scmp.ne.s32.totalorder %s72, %s73
      %p85 = scmp.eq.s32.totalorder %s21, 1
      %p86 = por %p84, %p85
      %p88 = scmp.ne.s32.totalorder %s73, %s87
      %p89 = scmp.eq.s32.totalorder %s21, 0
      %p90 = por %p88, %p89
      %s92 = sadd.s32 %s91, 1
      %p95 = scmp.eq.s32.totalorder %s15, 1
      %p96 = scmp.ne.s32.totalorder %s91, %s93
      %p97 = scmp.eq.s32.totalorder %s15, 0
      %p98 = por %p96, %p97
      %p99 = scmp.ne.s32.totalorder %s91, %s93
      %p100 = scmp.eq.s32.totalorder %s20, 1
      %p101 = por %p99, %p100
      %p102 = scmp.ne.s32.totalorder %s93, %s94
      %p103 = scmp.eq.s32.totalorder %s20, 0
      %p104 = por %p102, %p103
      %p105 = scmp.ne.s32.totalorder %s93, %s94
      %p106 = scmp.eq.s32.totalorder %s21, 1
      %p107 = por %p105, %p106
      %p109 = scmp.ne.s32.totalorder %s94, %s108
      %p110 = scmp.eq.s32.totalorder %s21, 0
      %p111 = por %p109, %p110
      %s113 = sadd.s32 %s112, 1
      %p116 = scmp.eq.s32.totalorder %s15, 1
      %p117 = scmp.ne.s32.totalorder %s112, %s114
      %p118 = scmp.eq.s32.totalorder %s15, 0
      %p119 = por %p117, %p118
      %p120 = scmp.ne.s32.totalorder %s112, %s114
      %p121 = scmp.eq.s32.totalorder %s20, 1
      %p122 = por %p120, %p121
      %p123 = scmp.ne.s32.totalorder %s114, %s115
      %p124 = scmp.eq.s32.totalorder %s20, 0
      %p125 = por %p123, %p124
      %p126 = scmp.ne.s32.totalorder %s114, %s115
      %p127 = scmp.eq.s32.totalorder %s21, 1
      %p128 = por %p126, %p127
      %p130 = scmp.ne.s32.totalorder %s115, %s129
      %p131 = scmp.eq.s32.totalorder %s21, 0
      %p132 = por %p130, %p131
      %s134 = sadd.s32 %s133, 1
      %p137 = scmp.eq.s32.totalorder %s15, 1
      %p138 = scmp.ne.s32.totalorder %s133, %s135
      %p139 = scmp.eq.s32.totalorder %s15, 0
      %p140 = por %p138, %p139
      %p141 = scmp.ne.s32.totalorder %s133, %s135
      %p142 = scmp.eq.s32.totalorder %s20, 1
      %p143 = por %p141, %p142
      %p144 = scmp.ne.s32.totalorder %s135, %s136
      %p145 = scmp.eq.s32.totalorder %s20, 0
      %p146 = por %p144, %p145
      %p147 = scmp.ne.s32.totalorder %s135, %s136
      %p148 = scmp.eq.s32.totalorder %s21, 1
      %p149 = por %p147, %p148
      %p151 = scmp.ne.s32.totalorder %s136, %s150
      %p152 = scmp.eq.s32.totalorder %s21, 0
      %p153 = por %p151, %p152
      %s155 = sadd.s32 %s154, 1
      %p158 = scmp.eq.s32.totalorder %s15, 1
      %p159 = scmp.ne.s32.totalorder %s154, %s156
      %p160 = scmp.eq.s32.totalorder %s15, 0
      %p161 = por %p159, %p160
      %p162 = scmp.ne.s32.totalorder %s154, %s156
      %p163 = scmp.eq.s32.totalorder %s20, 1
      %p164 = por %p162, %p163
      %p165 = scmp.ne.s32.totalorder %s156, %s157
      %p166 = scmp.eq.s32.totalorder %s20, 0
      %p167 = por %p165, %p166
      %p168 = scmp.ne.s32.totalorder %s156, %s157
      %p169 = scmp.eq.s32.totalorder %s21, 1
      %p170 = por %p168, %p169
      %p172 = scmp.ne.s32.totalorder %s157, %s171
      %p173 = scmp.eq.s32.totalorder %s21, 0
      %p174 = por %p172, %p173
      %s176 = sadd.s32 %s175, 1
      %p179 = scmp.eq.s32.totalorder %s15, 1
      %p180 = scmp.ne.s32.totalorder %s175, %s177
      %p181 = scmp.eq.s32.totalorder %s15, 0
      %p182 = por %p180, %p181
      %p183 = scmp.ne.s32.totalorder %s175, %s177
      %p184 = scmp.eq.s32.totalorder %s20, 1
      %p185 = por %p183, %p184
      %p186 = scmp.ne.s32.totalorder %s177, %s178
      %p187 = scmp.eq.s32.totalorder %s20, 0
      %p188 = por %p186, %p187
      %p189 = scmp.ne.s32.totalorder %s177, %s178
      %p190 = scmp.eq.s32.totalorder %s21, 1
      %p191 = por %p189, %p190
      %p193 = scmp.ne.s32.totalorder %s178, %s192
      %p194 = scmp.eq.s32.totalorder %s21, 0
      %p195 = por %p193, %p194
      %s196 = ssub.s32 %s15, %s22
      %p197 = scmp.eq.s32.totalorder %s196, 0
      %s199 = sadd.s32 %s198, 1
      %s200 = scalar_select %p197, %s198, %s199
      %p203 = pneg %p197
      %p204 = scmp.eq.s32.totalorder %s15, 1
      %p205 = por %p203, %p204
      %p206 = scmp.ne.s32.totalorder %s198, %s201
      %p207 = scmp.eq.s32.totalorder %s15, 0
      %p208 = por %p206, %p207
      %p209 = scmp.ne.s32.totalorder %s198, %s201
      %p210 = scmp.eq.s32.totalorder %s20, 1
      %p211 = por %p209, %p210
      %p212 = scmp.ne.s32.totalorder %s201, %s202
      %p213 = scmp.eq.s32.totalorder %s20, 0
      %p214 = por %p212, %p213
      %p215 = scmp.ne.s32.totalorder %s201, %s202
      %p216 = scmp.eq.s32.totalorder %s21, 1
      %p217 = por %p215, %p216
      %p219 = scmp.ne.s32.totalorder %s202, %s218
      %p220 = scmp.eq.s32.totalorder %s21, 0
      %p221 = por %p219, %p220
      %p222 = scmp.le.s32.totalorder 1, %s15
      %p223 = scmp.lt.s32.totalorder %s15, 3
      %p224 = pnand %p222, %p223
      %p225 = pneg %p224
      // Predicated region
      $region9: #{tpu_custom_call.1} parent=5 // pred_check
        _
      $region10: #{tpu_custom_call.1} parent=5 // pred_check_branch
        %227 = sbr.rel (%p224) target = $region12
      $region11: #{tpu_custom_call.1} parent=5 // pred_region
        %s228 = ssub.s32 %s15, 1
        // Predicated region
        $region13: #{tpu_custom_call.1} parent=11 // pred_check
          %p229 = pneg %p62
        $region14: #{tpu_custom_call.1} parent=11 // pred_check_branch
          %231 = sbr.rel (%p229) target = $region16
        $region15: #{tpu_custom_call.1} parent=11 // pred_region
          _
        $region16: #{tpu_custom_call.1} parent=11 // pred_fallthru
          _
        // Predicated region
        $region17: #{tpu_custom_call.1} parent=11 // pred_check
          %p232 = pneg %p83
        $region18: #{tpu_custom_call.1} parent=11 // pred_check_branch
          %234 = sbr.rel (%p232) target = $region20
        $region19: #{tpu_custom_call.1} parent=11 // pred_region
          _
        $region20: #{tpu_custom_call.1} parent=11 // pred_fallthru
          _
        // Predicated region
        $region21: #{tpu_custom_call.1} parent=11 // pred_check
          %p235 = pneg %p104
        $region22: #{tpu_custom_call.1} parent=11 // pred_check_branch
          %237 = sbr.rel (%p235) target = $region24
        $region23: #{tpu_custom_call.1} parent=11 // pred_region
          _
        $region24: #{tpu_custom_call.1} parent=11 // pred_fallthru
          _
        // Predicated region
        $region25: #{tpu_custom_call.1} parent=11 // pred_check
          %p238 = pneg %p125
        $region26: #{tpu_custom_call.1} parent=11 // pred_check_branch
          %240 = sbr.rel (%p238) target = $region28
        $region27: #{tpu_custom_call.1} parent=11 // pred_region
          _
        $region28: #{tpu_custom_call.1} parent=11 // pred_fallthru
          _
        // Predicated region
        $region29: #{tpu_custom_call.1} parent=11 // pred_check
          %p241 = pneg %p146
        $region30: #{tpu_custom_call.1} parent=11 // pred_check_branch
          %243 = sbr.rel (%p241) target = $region32
        $region31: #{tpu_custom_call.1} parent=11 // pred_region
          _
        $region32: #{tpu_custom_call.1} parent=11 // pred_fallthru
          _
        // Predicated region
        $region33: #{tpu_custom_call.1} parent=11 // pred_check
          %p244 = pneg %p167
        $region34: #{tpu_custom_call.1} parent=11 // pred_check_branch
          %246 = sbr.rel (%p244) target = $region36
        $region35: #{tpu_custom_call.1} parent=11 // pred_region
          _
        $region36: #{tpu_custom_call.1} parent=11 // pred_fallthru
          _
        // Predicated region
        $region37: #{tpu_custom_call.1} parent=11 // pred_check
          %p247 = pneg %p188
        $region38: #{tpu_custom_call.1} parent=11 // pred_check_branch
          %249 = sbr.rel (%p247) target = $region40
        $region39: #{tpu_custom_call.1} parent=11 // pred_region
          %s251 = ssub.s32 4096, 4096
          %252 = vsyncadd [#allocation3], %s251
          %s253 = sshll.u32 [#allocation2], 4
          %s254 = int_to_ptr.vmem [resolvable:$true] %s253
          %259 = dma.hbm_to_vmem [thread:$0]  %s7, 4096, %s254, [#allocation3], 128, 128, 8
        $region40: #{tpu_custom_call.1} parent=11 // pred_fallthru
          _
      $region12: #{tpu_custom_call.1} parent=5 // pred_fallthru
        _
      %p260 = scmp.lt.s32.totalorder %s15, 2
      // Predicated region
      $region41: #{tpu_custom_call.1} parent=5 // pred_check
        %p261 = pneg %p260
      $region42: #{tpu_custom_call.1} parent=5 // pred_check_branch
        %263 = sbr.rel (%p261) target = $region44
      $region43: #{tpu_custom_call.1} parent=5 // pred_region
        // Predicated region
        $region45: #{tpu_custom_call.1} parent=43 // pred_check
          %p264 = pneg %p35
        $region46: #{tpu_custom_call.1} parent=43 // pred_check_branch
          %266 = sbr.rel (%p264) target = $region48
        $region47: #{tpu_custom_call.1} parent=43 // pred_region
          %s267 = smul.u32 8, %s15
          %p268 = scmp.lt.s32.totalorder %s267, 15
          %s269 = scalar_select %p268, %s267, 15
          %s270 = smul.addr %s269, 8
          %s271 = scalar_lea.vmem %s0, %s270
          %s272 = smul.u32 8, %s15
        $region48: #{tpu_custom_call.1} parent=43 // pred_fallthru
          _
      $region44: #{tpu_custom_call.1} parent=5 // pred_fallthru
        _
      %p273 = scmp.le.s32.totalorder 1, %s15
      %p274 = scmp.lt.s32.totalorder %s15, 3
      %p275 = pnand %p273, %p274
      %p276 = pneg %p275
      // Predicated region
      $region49: #{tpu_custom_call.1} parent=5 // pred_check
        _
      $region50: #{tpu_custom_call.1} parent=5 // pred_check_branch
        %278 = sbr.rel (%p275) target = $region52
      $region51: #{tpu_custom_call.1} parent=5 // pred_region
        %s279 = ssub.s32 %s15, 1
        // Predicated region
        $region53: #{tpu_custom_call.1} parent=51 // pred_check
          %p280 = pneg %p188
        $region54: #{tpu_custom_call.1} parent=51 // pred_check_branch
          %282 = sbr.rel (%p280) target = $region56
        $region55: #{tpu_custom_call.1} parent=51 // pred_region
          %283 = dma.done [#allocation3], 4096
        $region56: #{tpu_custom_call.1} parent=51 // pred_fallthru
          _
        %s284 = smul.u32 8, %s20
        %p285 = scmp.lt.s32.totalorder %s284, 15
        %s286 = scalar_select %p285, %s284, 15
        %s287 = smul.addr %s286, 8
        %s288 = scalar_lea.vmem %s0, %s287
        %p289 = pneg %p41
        %p290 = pneg %p38
        %p291 = pneg %p62
        %p292 = pneg %p59
        %p293 = pneg %p83
        %p294 = pneg %p80
        %p295 = pneg %p104
        %p296 = pneg %p101
        %p297 = pneg %p125
        %p298 = pneg %p122
        %p299 = pneg %p146
        %p300 = pneg %p143
        %p301 = pneg %p167
        %p302 = pneg %p164
        %p303 = pneg %p188
        %p304 = pneg %p185
        %p305 = pneg %p214
        %p306 = pneg %p211
        %s307 = smul.u32 8, %s20
        %p308 = scmp.lt.s32.totalorder %s307, 15
        %s309 = scalar_select %p308, %s307, 15
        %s310 = smul.addr %s309, 8
        %s311 = scalar_lea.vmem %s8, %s310
        %s312 = smul.u32 8, %s20
        %p313 = scmp.lt.s32.totalorder %s312, 15
        %s314 = scalar_select %p313, %s312, 15
        %s315 = smul.addr %s314, 8
        %s316 = scalar_lea.vmem %s0, %s315
        %s317 = smul.u32 8, %s20
        %s318 = smul.u32 8, %s20
        %p319 = scmp.lt.s32.totalorder %s318, 15
        %s320 = scalar_select %p319, %s318, 15
        %s321 = smul.addr %s320, 8
        %s322 = scalar_lea.vmem %s8, %s321
        %s323 = smul.u32 8, %s20
        %v325 = vld [vmem:[%s316] sm:$0xff]
        %v326 = vld [vmem:[%s316 + $0x8] sm:$0xff]
        %v327 = vld [vmem:[%s316 + $0x10] sm:$0xff]
        %v328 = vld [vmem:[%s316 + $0x18] sm:$0xff]
        %v329 = vld [vmem:[%s316 + $0x20] sm:$0xff]
        %v330 = vld [vmem:[%s316 + $0x28] sm:$0xff]
        %v331 = vld [vmem:[%s316 + $0x30] sm:$0xff]
        %v332 = vld [vmem:[%s316 + $0x38] sm:$0xff]
        %vm333 = vcmask 261120
        %v334 = vsel %vm333, %v325, 0.0
        %335 = vadd.xlane.f32.xlu0 %v334
        %v336 = vpop.xlane.xlu0 %335
        %v337 = vsel %vm333, %v326, 0.0
        %338 = vadd.xlane.f32.xlu0 %v337
        %v339 = vpop.xlane.xlu0 %338
        %v340 = vsel %vm333, %v327, 0.0
        %341 = vadd.xlane.f32.xlu0 %v340
        %v342 = vpop.xlane.xlu0 %341
        %v343 = vsel %vm333, %v328, 0.0
        %344 = vadd.xlane.f32.xlu0 %v343
        %v345 = vpop.xlane.xlu0 %344
        %v346 = vsel %vm333, %v329, 0.0
        %347 = vadd.xlane.f32.xlu0 %v346
        %v348 = vpop.xlane.xlu0 %347
        %v349 = vsel %vm333, %v330, 0.0
        %350 = vadd.xlane.f32.xlu0 %v349
        %v351 = vpop.xlane.xlu0 %350
        %v352 = vsel %vm333, %v331, 0.0
        %353 = vadd.xlane.f32.xlu0 %v352
        %v354 = vpop.xlane.xlu0 %353
        %v355 = vsel %vm333, %v332, 0.0
        %356 = vadd.xlane.f32.xlu0 %v355
        %v357 = vpop.xlane.xlu0 %356
        %v358 = vrcp.pop 32.0
        %v359 = vmul.f32 %v336, %v358
        %v360 = vmul.f32 %v339, %v358
        %v361 = vmul.f32 %v342, %v358
        %v362 = vmul.f32 %v345, %v358
        %v363 = vmul.f32 %v348, %v358
        %v364 = vmul.f32 %v351, %v358
        %v365 = vmul.f32 %v354, %v358
        %v366 = vmul.f32 %v357, %v358
        %v367 = vsub.f32 %v325, %v359
        %v368 = vsub.f32 %v326, %v360
        %v369 = vsub.f32 %v327, %v361
        %v370 = vsub.f32 %v328, %v362
        %v371 = vsub.f32 %v329, %v363
        %v372 = vsub.f32 %v330, %v364
        %v373 = vsub.f32 %v331, %v365
        %v374 = vsub.f32 %v332, %v366
        %v375 = vmul.f32 %v367, %v367
        %v376 = vmul.f32 %v368, %v368
        %v377 = vmul.f32 %v369, %v369
        %v378 = vmul.f32 %v370, %v370
        %v379 = vmul.f32 %v371, %v371
        %v380 = vmul.f32 %v372, %v372
        %v381 = vmul.f32 %v373, %v373
        %v382 = vmul.f32 %v374, %v374
        %v383 = vsel %vm333, %v375, 0.0
        %384 = vadd.xlane.f32.xlu0 %v383
        %v385 = vpop.xlane.xlu0 %384
        %v386 = vsel %vm333, %v376, 0.0
        %387 = vadd.xlane.f32.xlu0 %v386
        %v388 = vpop.xlane.xlu0 %387
        %v389 = vsel %vm333, %v377, 0.0
        %390 = vadd.xlane.f32.xlu0 %v389
        %v391 = vpop.xlane.xlu0 %390
        %v392 = vsel %vm333, %v378, 0.0
        %393 = vadd.xlane.f32.xlu0 %v392
        %v394 = vpop.xlane.xlu0 %393
        %v395 = vsel %vm333, %v379, 0.0
        %396 = vadd.xlane.f32.xlu0 %v395
        %v397 = vpop.xlane.xlu0 %396
        %v398 = vsel %vm333, %v380, 0.0
        %399 = vadd.xlane.f32.xlu0 %v398
        %v400 = vpop.xlane.xlu0 %399
        %v401 = vsel %vm333, %v381, 0.0
        %402 = vadd.xlane.f32.xlu0 %v401
        %v403 = vpop.xlane.xlu0 %402
        %v404 = vsel %vm333, %v382, 0.0
        %405 = vadd.xlane.f32.xlu0 %v404
        %v406 = vpop.xlane.xlu0 %405
        %v407 = vmul.f32 %v385, %v358
        %v408 = vmul.f32 %v388, %v358
        %v409 = vmul.f32 %v391, %v358
        %v410 = vmul.f32 %v394, %v358
        %v411 = vmul.f32 %v397, %v358
        %v412 = vmul.f32 %v400, %v358
        %v413 = vmul.f32 %v403, %v358
        %v414 = vmul.f32 %v406, %v358
        %v415 = vadd.f32 %v407, 1e-05
        %v416 = vadd.f32 %v408, 1e-05
        %v417 = vadd.f32 %v409, 1e-05
        %v418 = vadd.f32 %v410, 1e-05
        %v419 = vadd.f32 %v411, 1e-05
        %v420 = vadd.f32 %v412, 1e-05
        %v421 = vadd.f32 %v413, 1e-05
        %v422 = vadd.f32 %v414, 1e-05
        %v423 = vrsqrt.pop %v415
        %v424 = vrsqrt.pop %v416
        %v425 = vrsqrt.pop %v417
        %v426 = vrsqrt.pop %v418
        %v427 = vrsqrt.pop %v419
        %v428 = vrsqrt.pop %v420
        %v429 = vrsqrt.pop %v421
        %v430 = vrsqrt.pop %v422
        %v431 = vmul.f32 %v367, %v423
        %v432 = vmul.f32 %v368, %v424
        %v433 = vmul.f32 %v369, %v425
        %v434 = vmul.f32 %v370, %v426
        %v435 = vmul.f32 %v371, %v427
        %v436 = vmul.f32 %v372, %v428
        %v437 = vmul.f32 %v373, %v429
        %v438 = vmul.f32 %v374, %v430
        %v439 = vld [vmem:[%s1] sm:$0x1]
        %v441 = vlaneseq
        %v442 = vshrl.u32 %v441, 7
        %v443 = vsub.s32 0, %v442
        %v444 = vrot.slane %v439, %v443
        %v446 = vmul.f32 %v431, %v444
        %v447 = vmul.f32 %v432, %v444
        %v448 = vmul.f32 %v433, %v444
        %v449 = vmul.f32 %v434, %v444
        %v450 = vmul.f32 %v435, %v444
        %v451 = vmul.f32 %v436, %v444
        %v452 = vmul.f32 %v437, %v444
        %v453 = vmul.f32 %v438, %v444
        %v454 = vld [vmem:[%s2] sm:$0x1]
        %v456 = vlaneseq
        %v457 = vshrl.u32 %v456, 7
        %v458 = vsub.s32 0, %v457
        %v459 = vrot.slane %v454, %v458
        %v461 = vadd.f32 %v446, %v459
        %v462 = vadd.f32 %v447, %v459
        %v463 = vadd.f32 %v448, %v459
        %v464 = vadd.f32 %v449, %v459
        %v465 = vadd.f32 %v450, %v459
        %v466 = vadd.f32 %v451, %v459
        %v467 = vadd.f32 %v452, %v459
        %v468 = vadd.f32 %v453, %v459
        %v469 = vpack.c.bf16 %v462, %v461
        %v470 = vpack.c.bf16 %v464, %v463
        %v471 = vpack.c.bf16 %v466, %v465
        %v472 = vpack.c.bf16 %v468, %v467
        %v473 = vld [vmem:[%s3] sm:$0xf]
        %v474 = vld [vmem:[%s3 + $0x4] sm:$0xf]
        %v475 = vld [vmem:[%s3 + $0x8] sm:$0xf]
        %v476 = vld [vmem:[%s3 + $0xc] sm:$0xf]
        %v477 = vld [vmem:[%s4] sm:$0x1]
        %v479 = vlaneseq
        %v480 = vshrl.u32 %v479, 7
        %v481 = vsub.s32 0, %v480
        %v482 = vrot.slane %v477, %v481
        %v488 = vunpack.c.l.b16 %v473
        %v489 = vunpack.c.l.b16 %v474
        %v490 = vunpack.c.l.b16 %v475
        %v491 = vunpack.c.l.b16 %v476
        %v492 = vpack.c.b16 %v489, %v488
        %v493 = vpack.c.b16 %v491, %v490
        %v497 = vsel %vm333, %v469, 0
        %v500 = vsel %vm333, %v470, 0
        %v503 = vsel %vm333, %v471, 0
        %v506 = vsel %vm333, %v472, 0
        %508 = vmatprep.subr.bf16.mxu0 0
        %509 = vmatpush1.bf16.msra.mxu0 %v492
        %510 = vmatprep.subr.bf16.mxu0 0
        %511 = vmatpush1.bf16.msra.mxu0 %v493
        %512 = vmatprep.subr.bf16.mxu0 0
        %513 = vmatpush1.bf16.msra.mxu0 0
        %514 = vmatprep.subr.bf16.mxu0 0
        %515 = vmatpush1.bf16.msra.mxu0 0
        %516 = vmatprep.subr.bf16.mxu0 0
        %517 = vmatpush1.bf16.msra.mxu0 0
        %518 = vmatprep.subr.bf16.mxu0 0
        %519 = vmatpush1.bf16.msra.mxu0 0
        %520 = vmatprep.subr.bf16.mxu0 0
        %521 = vmatpush1.bf16.msra.mxu0 0
        %522 = vmatprep.subr.bf16.mxu0 0
        %523 = vmatpush1.bf16.msra.mxu0 0
        %524 = vmatprep.subr.bf16.mxu0 0
        %525 = vmatpush1.bf16.msra.mxu0 0
        %526 = vmatprep.subr.bf16.mxu0 0
        %527 = vmatpush1.bf16.msra.mxu0 0
        %528 = vmatprep.subr.bf16.mxu0 0
        %529 = vmatpush1.bf16.msra.mxu0 0
        %530 = vmatprep.subr.bf16.mxu0 0
        %531 = vmatpush1.bf16.msra.mxu0 0
        %532 = vmatprep.subr.bf16.mxu0 0
        %533 = vmatpush1.bf16.msra.mxu0 0
        %534 = vmatprep.subr.bf16.mxu0 0
        %535 = vmatpush1.bf16.msra.mxu0 0
        %536 = vmatprep.subr.bf16.mxu0 0
        %537 = vmatpush1.bf16.msra.mxu0 0
        %538 = vmatprep.subr.bf16.mxu0 0
        %539 = vmatpush1.bf16.msra.mxu0 0
        %540 = vmatprep.mubr.bf16.mxu0 0
        %541 = vmatmul.mubr.bf16.gmra.mrb[0].mxu0 %v497
        %v542 = vpop.f32.mrb[0].mxu0
        %v543 = vadd.f32 %v482, %v542
        %v544 = vpop.f32.mrb[0].mxu0
        %v545 = vpop.f32.mrb[0].mxu0
        %v546 = vadd.f32 %v482, %v545
        %v547 = vpop.f32.mrb[0].mxu0
        %548 = vmatprep.mubr.bf16.mxu0 0
        %549 = vmatmul.mubr.bf16.gmra.mrb[0].mxu0 %v500
        %v550 = vpop.f32.mrb[0].mxu0
        %v551 = vadd.f32 %v482, %v550
        %v552 = vpop.f32.mrb[0].mxu0
        %v553 = vpop.f32.mrb[0].mxu0
        %v554 = vadd.f32 %v482, %v553
        %v555 = vpop.f32.mrb[0].mxu0
        %556 = vmatprep.mubr.bf16.mxu0 0
        %557 = vmatmul.mubr.bf16.gmra.mrb[0].mxu0 %v503
        %v558 = vpop.f32.mrb[0].mxu0
        %v559 = vadd.f32 %v482, %v558
        %v560 = vpop.f32.mrb[0].mxu0
        %v561 = vpop.f32.mrb[0].mxu0
        %v562 = vadd.f32 %v482, %v561
        %v563 = vpop.f32.mrb[0].mxu0
        %564 = vmatprep.mubr.bf16.mxu0 0
        %565 = vmatmul.mubr.bf16.gmra.mrb[0].mxu0 %v506
        %v566 = vpop.f32.mrb[0].mxu0
        %v567 = vadd.f32 %v482, %v566
        %v568 = vpop.f32.mrb[0].mxu0
        %v569 = vpop.f32.mrb[0].mxu0
        %v570 = vadd.f32 %v482, %v569
        %v571 = vpop.f32.mrb[0].mxu0
        %572 = vdwg.mxu0
        %v573 = vpack.c.bf16 %v546, %v543
        %v574 = vpack.c.bf16 %v554, %v551
        %v575 = vpack.c.bf16 %v562, %v559
        %v576 = vpack.c.bf16 %v570, %v567
        %578 = vrot.lane.b32.xlu0 %v573, 96
        %v579 = vpop.permute.xlu0 %578
        %vm580 = vcmask 64512
        %v582 = vsel %vm580, %v573, 0
        %v585 = vsel %vm580, %v579, 0
        %587 = vmatprep.subr.bf16.mxu0 0
        %588 = vmatpush1.bf16.xpose.msra.mxu0 %v585
        %589 = vmatprep.subr.bf16.mxu0 0
        %590 = vmatpush1.bf16.xpose.msra.mxu0 0
        %591 = vmatprep.subr.bf16.mxu0 0
        %592 = vmatpush1.bf16.xpose.msra.mxu0 0
        %593 = vmatprep.subr.bf16.mxu0 0
        %594 = vmatpush1.bf16.xpose.msra.mxu0 0
        %595 = vmatprep.subr.bf16.mxu0 0
        %596 = vmatpush1.bf16.xpose.msra.mxu0 0
        %597 = vmatprep.subr.bf16.mxu0 0
        %598 = vmatpush1.bf16.xpose.msra.mxu0 0
        %599 = vmatprep.subr.bf16.mxu0 0
        %600 = vmatpush1.bf16.xpose.msra.mxu0 0
        %601 = vmatprep.subr.bf16.mxu0 0
        %602 = vmatpush1.bf16.xpose.msra.mxu0 0
        %603 = vmatprep.subr.bf16.mxu0 0
        %604 = vmatpush1.bf16.xpose.msra.mxu0 0
        %605 = vmatprep.subr.bf16.mxu0 0
        %606 = vmatpush1.bf16.xpose.msra.mxu0 0
        %607 = vmatprep.subr.bf16.mxu0 0
        %608 = vmatpush1.bf16.xpose.msra.mxu0 0
        %609 = vmatprep.subr.bf16.mxu0 0
        %610 = vmatpush1.bf16.xpose.msra.mxu0 0
        %611 = vmatprep.subr.bf16.mxu0 0
        %612 = vmatpush1.bf16.xpose.msra.mxu0 0
        %613 = vmatprep.subr.bf16.mxu0 0
        %614 = vmatpush1.bf16.xpose.msra.mxu0 0
        %615 = vmatprep.subr.bf16.mxu0 0
        %616 = vmatpush1.bf16.xpose.msra.mxu0 0
        %617 = vmatprep.subr.bf16.mxu0 0
        %618 = vmatpush1.bf16.xpose.msra.mxu0 0
        %619 = vmatprep.mubr.bf16.mxu0 0
        %620 = vmatmul.mubr.bf16.gmra.mrb[0].mxu0 %v582
        %v621 = vpop.f32.mrb[0].mxu0
        %v622 = vadd.f32 0.0, %v621
        %v623 = vpop.f32.mrb[0].mxu0
        %v624 = vpop.f32.mrb[0].mxu0
        %v625 = vadd.f32 0.0, %v624
        %v626 = vpop.f32.mrb[0].mxu0
        %627 = vdwg.mxu0
        %629 = vrot.lane.b32.xlu0 %v574, 96
        %v630 = vpop.permute.xlu0 %629
        %v632 = vsel %vm580, %v574, 0
        %v635 = vsel %vm580, %v630, 0
        %637 = vmatprep.subr.bf16.mxu0 0
        %638 = vmatpush1.bf16.xpose.msra.mxu0 %v635
        %639 = vmatprep.subr.bf16.mxu0 0
        %640 = vmatpush1.bf16.xpose.msra.mxu0 0
        %641 = vmatprep.subr.bf16.mxu0 0
        %642 = vmatpush1.bf16.xpose.msra.mxu0 0
        %643 = vmatprep.subr.bf16.mxu0 0
        %644 = vmatpush1.bf16.xpose.msra.mxu0 0
        %645 = vmatprep.subr.bf16.mxu0 0
        %646 = vmatpush1.bf16.xpose.msra.mxu0 0
        %647 = vmatprep.subr.bf16.mxu0 0
        %648 = vmatpush1.bf16.xpose.msra.mxu0 0
        %649 = vmatprep.subr.bf16.mxu0 0
        %650 = vmatpush1.bf16.xpose.msra.mxu0 0
        %651 = vmatprep.subr.bf16.mxu0 0
        %652 = vmatpush1.bf16.xpose.msra.mxu0 0
        %653 = vmatprep.subr.bf16.mxu0 0
        %654 = vmatpush1.bf16.xpose.msra.mxu0 0
        %655 = vmatprep.subr.bf16.mxu0 0
        %656 = vmatpush1.bf16.xpose.msra.mxu0 0
        %657 = vmatprep.subr.bf16.mxu0 0
        %658 = vmatpush1.bf16.xpose.msra.mxu0 0
        %659 = vmatprep.subr.bf16.mxu0 0
        %660 = vmatpush1.bf16.xpose.msra.mxu0 0
        %661 = vmatprep.subr.bf16.mxu0 0
        %662 = vmatpush1.bf16.xpose.msra.mxu0 0
        %663 = vmatprep.subr.bf16.mxu0 0
        %664 = vmatpush1.bf16.xpose.msra.mxu0 0
        %665 = vmatprep.subr.bf16.mxu0 0
        %666 = vmatpush1.bf16.xpose.msra.mxu0 0
        %667 = vmatprep.subr.bf16.mxu0 0
        %668 = vmatpush1.bf16.xpose.msra.mxu0 0
        %669 = vmatprep.mubr.bf16.mxu0 0
        %670 = vmatmul.mubr.bf16.gmra.mrb[0].mxu0 %v632
        %v671 = vpop.f32.mrb[0].mxu0
        %v672 = vadd.f32 0.0, %v671
        %v673 = vpop.f32.mrb[0].mxu0
        %v674 = vpop.f32.mrb[0].mxu0
        %v675 = vadd.f32 0.0, %v674
        %v676 = vpop.f32.mrb[0].mxu0
        %677 = vdwg.mxu0
        %679 = vrot.lane.b32.xlu0 %v575, 96
        %v680 = vpop.permute.xlu0 %679
        %v682 = vsel %vm580, %v575, 0
        %v685 = vsel %vm580, %v680, 0
        %687 = vmatprep.subr.bf16.mxu0 0
        %688 = vmatpush1.bf16.xpose.msra.mxu0 %v685
        %689 = vmatprep.subr.bf16.mxu0 0
        %690 = vmatpush1.bf16.xpose.msra.mxu0 0
        %691 = vmatprep.subr.bf16.mxu0 0
        %692 = vmatpush1.bf16.xpose.msra.mxu0 0
        %693 = vmatprep.subr.bf16.mxu0 0
        %694 = vmatpush1.bf16.xpose.msra.mxu0 0
        %695 = vmatprep.subr.bf16.mxu0 0
        %696 = vmatpush1.bf16.xpose.msra.mxu0 0
        %697 = vmatprep.subr.bf16.mxu0 0
        %698 = vmatpush1.bf16.xpose.msra.mxu0 0
        %699 = vmatprep.subr.bf16.mxu0 0
        %700 = vmatpush1.bf16.xpose.msra.mxu0 0
        %701 = vmatprep.subr.bf16.mxu0 0
        %702 = vmatpush1.bf16.xpose.msra.mxu0 0
        %703 = vmatprep.subr.bf16.mxu0 0
        %704 = vmatpush1.bf16.xpose.msra.mxu0 0
        %705 = vmatprep.subr.bf16.mxu0 0
        %706 = vmatpush1.bf16.xpose.msra.mxu0 0
        %707 = vmatprep.subr.bf16.mxu0 0
        %708 = vmatpush1.bf16.xpose.msra.mxu0 0
        %709 = vmatprep.subr.bf16.mxu0 0
        %710 = vmatpush1.bf16.xpose.msra.mxu0 0
        %711 = vmatprep.subr.bf16.mxu0 0
        %712 = vmatpush1.bf16.xpose.msra.mxu0 0
        %713 = vmatprep.subr.bf16.mxu0 0
        %714 = vmatpush1.bf16.xpose.msra.mxu0 0
        %715 = vmatprep.subr.bf16.mxu0 0
        %716 = vmatpush1.bf16.xpose.msra.mxu0 0
        %717 = vmatprep.subr.bf16.mxu0 0
        %718 = vmatpush1.bf16.xpose.msra.mxu0 0
        %719 = vmatprep.mubr.bf16.mxu0 0
        %720 = vmatmul.mubr.bf16.gmra.mrb[0].mxu0 %v682
        %v721 = vpop.f32.mrb[0].mxu0
        %v722 = vadd.f32 0.0, %v721
        %v723 = vpop.f32.mrb[0].mxu0
        %v724 = vpop.f32.mrb[0].mxu0
        %v725 = vadd.f32 0.0, %v724
        %v726 = vpop.f32.mrb[0].mxu0
        %727 = vdwg.mxu0
        %729 = vrot.lane.b32.xlu0 %v576, 96
        %v730 = vpop.permute.xlu0 %729
        %v732 = vsel %vm580, %v576, 0
        %v735 = vsel %vm580, %v730, 0
        %737 = vmatprep.subr.bf16.mxu0 0
        %738 = vmatpush1.bf16.xpose.msra.mxu0 %v735
        %739 = vmatprep.subr.bf16.mxu0 0
        %740 = vmatpush1.bf16.xpose.msra.mxu0 0
        %741 = vmatprep.subr.bf16.mxu0 0
        %742 = vmatpush1.bf16.xpose.msra.mxu0 0
        %743 = vmatprep.subr.bf16.mxu0 0
        %744 = vmatpush1.bf16.xpose.msra.mxu0 0
        %745 = vmatprep.subr.bf16.mxu0 0
        %746 = vmatpush1.bf16.xpose.msra.mxu0 0
        %747 = vmatprep.subr.bf16.mxu0 0
        %748 = vmatpush1.bf16.xpose.msra.mxu0 0
        %749 = vmatprep.subr.bf16.mxu0 0
        %750 = vmatpush1.bf16.xpose.msra.mxu0 0
        %751 = vmatprep.subr.bf16.mxu0 0
        %752 = vmatpush1.bf16.xpose.msra.mxu0 0
        %753 = vmatprep.subr.bf16.mxu0 0
        %754 = vmatpush1.bf16.xpose.msra.mxu0 0
        %755 = vmatprep.subr.bf16.mxu0 0
        %756 = vmatpush1.bf16.xpose.msra.mxu0 0
        %757 = vmatprep.subr.bf16.mxu0 0
        %758 = vmatpush1.bf16.xpose.msra.mxu0 0
        %759 = vmatprep.subr.bf16.mxu0 0
        %760 = vmatpush1.bf16.xpose.msra.mxu0 0
        %761 = vmatprep.subr.bf16.mxu0 0
        %762 = vmatpush1.bf16.xpose.msra.mxu0 0
        %763 = vmatprep.subr.bf16.mxu0 0
        %764 = vmatpush1.bf16.xpose.msra.mxu0 0
        %765 = vmatprep.subr.bf16.mxu0 0
        %766 = vmatpush1.bf16.xpose.msra.mxu0 0
        %767 = vmatprep.subr.bf16.mxu0 0
        %768 = vmatpush1.bf16.xpose.msra.mxu0 0
        %769 = vmatprep.mubr.bf16.mxu0 0
        %770 = vmatmul.mubr.bf16.gmra.mrb[0].mxu0 %v732
        %v771 = vpop.f32.mrb[0].mxu0
        %v772 = vadd.f32 0.0, %v771
        %v773 = vpop.f32.mrb[0].mxu0
        %v774 = vpop.f32.mrb[0].mxu0
        %v775 = vadd.f32 0.0, %v774
        %v776 = vpop.f32.mrb[0].mxu0
        %777 = vdwg.mxu0
        %v778 = vld [vmem:[#allocation2] sm:$0xff]
        %v779 = vld [vmem:[#allocation2 + $0x8] sm:$0xff]
        %v780 = vld [vmem:[#allocation2 + $0x10] sm:$0xff]
        %v781 = vld [vmem:[#allocation2 + $0x18] sm:$0xff]
        %v782 = vld [vmem:[#allocation2 + $0x20] sm:$0xff]
        %v783 = vld [vmem:[#allocation2 + $0x28] sm:$0xff]
        %v784 = vld [vmem:[#allocation2 + $0x30] sm:$0xff]
        %v785 = vld [vmem:[#allocation2 + $0x38] sm:$0xff]
        %v786 = vadd.f32 %v622, %v778
        %v787 = vadd.f32 %v625, %v779
        %v788 = vadd.f32 %v672, %v780
        %v789 = vadd.f32 %v675, %v781
        %v790 = vadd.f32 %v722, %v782
        %v791 = vadd.f32 %v725, %v783
        %v792 = vadd.f32 %v772, %v784
        %v793 = vadd.f32 %v775, %v785
        %vm794 = vcmask 130048
        %v795 = vsel %vm794, %v786, -inf
        %796 = vmax.xlane.f32.xlu0 %v795
        %v797 = vpop.xlane.xlu0 %796
        %v798 = vsel %vm794, %v787, -inf
        %799 = vmax.xlane.f32.xlu0 %v798
        %v800 = vpop.xlane.xlu0 %799
        %v801 = vsel %vm794, %v788, -inf
        %802 = vmax.xlane.f32.xlu0 %v801
        %v803 = vpop.xlane.xlu0 %802
        %v804 = vsel %vm794, %v789, -inf
        %805 = vmax.xlane.f32.xlu0 %v804
        %v806 = vpop.xlane.xlu0 %805
        %v807 = vsel %vm794, %v790, -inf
        %808 = vmax.xlane.f32.xlu0 %v807
        %v809 = vpop.xlane.xlu0 %808
        %v810 = vsel %vm794, %v791, -inf
        %811 = vmax.xlane.f32.xlu0 %v810
        %v812 = vpop.xlane.xlu0 %811
        %v813 = vsel %vm794, %v792, -inf
        %814 = vmax.xlane.f32.xlu0 %v813
        %v815 = vpop.xlane.xlu0 %814
        %v816 = vsel %vm794, %v793, -inf
        %817 = vmax.xlane.f32.xlu0 %v816
        %v818 = vpop.xlane.xlu0 %817
        %v819 = vsub.f32 %v786, %v797
        %v820 = vsub.f32 %v787, %v800
        %v821 = vsub.f32 %v788, %v803
        %v822 = vsub.f32 %v789, %v806
        %v823 = vsub.f32 %v790, %v809
        %v824 = vsub.f32 %v791, %v812
        %v825 = vsub.f32 %v792, %v815
        %v826 = vsub.f32 %v793, %v818
        %v827 = vmul.f32 %v819, 1.442695
        %v828 = vpow.pop %v827
        %v829 = vmul.f32 %v820, 1.442695
        %v830 = vpow.pop %v829
        %v831 = vmul.f32 %v821, 1.442695
        %v832 = vpow.pop %v831
        %v833 = vmul.f32 %v822, 1.442695
        %v834 = vpow.pop %v833
        %v835 = vmul.f32 %v823, 1.442695
        %v836 = vpow.pop %v835
        %v837 = vmul.f32 %v824, 1.442695
        %v838 = vpow.pop %v837
        %v839 = vmul.f32 %v825, 1.442695
        %v840 = vpow.pop %v839
        %v841 = vmul.f32 %v826, 1.442695
        %v842 = vpow.pop %v841
        %v843 = vsel %vm794, %v828, 0.0
        %844 = vadd.xlane.f32.xlu0 %v843
        %v845 = vpop.xlane.xlu0 %844
        %v846 = vsel %vm794, %v830, 0.0
        %847 = vadd.xlane.f32.xlu0 %v846
        %v848 = vpop.xlane.xlu0 %847
        %v849 = vsel %vm794, %v832, 0.0
        %850 = vadd.xlane.f32.xlu0 %v849
        %v851 = vpop.xlane.xlu0 %850
        %v852 = vsel %vm794, %v834, 0.0
        %853 = vadd.xlane.f32.xlu0 %v852
        %v854 = vpop.xlane.xlu0 %853
        %v855 = vsel %vm794, %v836, 0.0
        %856 = vadd.xlane.f32.xlu0 %v855
        %v857 = vpop.xlane.xlu0 %856
        %v858 = vsel %vm794, %v838, 0.0
        %859 = vadd.xlane.f32.xlu0 %v858
        %v860 = vpop.xlane.xlu0 %859
        %v861 = vsel %vm794, %v840, 0.0
        %862 = vadd.xlane.f32.xlu0 %v861
        %v863 = vpop.xlane.xlu0 %862
        %v864 = vsel %vm794, %v842, 0.0
        %865 = vadd.xlane.f32.xlu0 %v864
        %v866 = vpop.xlane.xlu0 %865
        %v867 = vpack.c.bf16 %v830, %v828
        %v868 = vpack.c.bf16 %v834, %v832
        %v869 = vpack.c.bf16 %v838, %v836
        %v870 = vpack.c.bf16 %v842, %v840
        %871 = vrot.lane.b32.xlu0 %v573, 64
        %v872 = vpop.permute.xlu0 %871
        %v875 = vsel %vm794, %v867, 0
        %877 = vmatprep.subr.bf16.mxu0 0
        %878 = vmatpush1.bf16.msra.mxu0 %v872
        %879 = vmatprep.subr.bf16.mxu0 0
        %880 = vmatpush1.bf16.msra.mxu0 0
        %881 = vmatprep.subr.bf16.mxu0 0
        %882 = vmatpush1.bf16.msra.mxu0 0
        %883 = vmatprep.subr.bf16.mxu0 0
        %884 = vmatpush1.bf16.msra.mxu0 0
        %885 = vmatprep.subr.bf16.mxu0 0
        %886 = vmatpush1.bf16.msra.mxu0 0
        %887 = vmatprep.subr.bf16.mxu0 0
        %888 = vmatpush1.bf16.msra.mxu0 0
        %889 = vmatprep.subr.bf16.mxu0 0
        %890 = vmatpush1.bf16.msra.mxu0 0
        %891 = vmatprep.subr.bf16.mxu0 0
        %892 = vmatpush1.bf16.msra.mxu0 0
        %893 = vmatprep.subr.bf16.mxu0 0
        %894 = vmatpush1.bf16.msra.mxu0 0
        %895 = vmatprep.subr.bf16.mxu0 0
        %896 = vmatpush1.bf16.msra.mxu0 0
        %897 = vmatprep.subr.bf16.mxu0 0
        %898 = vmatpush1.bf16.msra.mxu0 0
        %899 = vmatprep.subr.bf16.mxu0 0
        %900 = vmatpush1.bf16.msra.mxu0 0
        %901 = vmatprep.subr.bf16.mxu0 0
        %902 = vmatpush1.bf16.msra.mxu0 0
        %903 = vmatprep.subr.bf16.mxu0 0
        %904 = vmatpush1.bf16.msra.mxu0 0
        %905 = vmatprep.subr.bf16.mxu0 0
        %906 = vmatpush1.bf16.msra.mxu0 0
        %907 = vmatprep.subr.bf16.mxu0 0
        %908 = vmatpush1.bf16.msra.mxu0 0
        %909 = vmatprep.mubr.bf16.mxu0 0
        %910 = vmatmul.mubr.bf16.gmra.mrb[0].mxu0 %v875
        %v911 = vpop.f32.mrb[0].mxu0
        %v912 = vadd.f32 0.0, %v911
        %v913 = vpop.f32.mrb[0].mxu0
        %v914 = vpop.f32.mrb[0].mxu0
        %v915 = vadd.f32 0.0, %v914
        %v916 = vpop.f32.mrb[0].mxu0
        %917 = vdwg.mxu0
        %918 = vrot.lane.b32.xlu0 %v574, 64
        %v919 = vpop.permute.xlu0 %918
        %v922 = vsel %vm794, %v868, 0
        %924 = vmatprep.subr.bf16.mxu0 0
        %925 = vmatpush1.bf16.msra.mxu0 %v919
        %926 = vmatprep.subr.bf16.mxu0 0
        %927 = vmatpush1.bf16.msra.mxu0 0
        %928 = vmatprep.subr.bf16.mxu0 0
        %929 = vmatpush1.bf16.msra.mxu0 0
        %930 = vmatprep.subr.bf16.mxu0 0
        %931 = vmatpush1.bf16.msra.mxu0 0
        %932 = vmatprep.subr.bf16.mxu0 0
        %933 = vmatpush1.bf16.msra.mxu0 0
        %934 = vmatprep.subr.bf16.mxu0 0
        %935 = vmatpush1.bf16.msra.mxu0 0
        %936 = vmatprep.subr.bf16.mxu0 0
        %937 = vmatpush1.bf16.msra.mxu0 0
        %938 = vmatprep.subr.bf16.mxu0 0
        %939 = vmatpush1.bf16.msra.mxu0 0
        %940 = vmatprep.subr.bf16.mxu0 0
        %941 = vmatpush1.bf16.msra.mxu0 0
        %942 = vmatprep.subr.bf16.mxu0 0
        %943 = vmatpush1.bf16.msra.mxu0 0
        %944 = vmatprep.subr.bf16.mxu0 0
        %945 = vmatpush1.bf16.msra.mxu0 0
        %946 = vmatprep.subr.bf16.mxu0 0
        %947 = vmatpush1.bf16.msra.mxu0 0
        %948 = vmatprep.subr.bf16.mxu0 0
        %949 = vmatpush1.bf16.msra.mxu0 0
        %950 = vmatprep.subr.bf16.mxu0 0
        %951 = vmatpush1.bf16.msra.mxu0 0
        %952 = vmatprep.subr.bf16.mxu0 0
        %953 = vmatpush1.bf16.msra.mxu0 0
        %954 = vmatprep.subr.bf16.mxu0 0
        %955 = vmatpush1.bf16.msra.mxu0 0
        %956 = vmatprep.mubr.bf16.mxu0 0
        %957 = vmatmul.mubr.bf16.gmra.mrb[0].mxu0 %v922
        %v958 = vpop.f32.mrb[0].mxu0
        %v959 = vadd.f32 0.0, %v958
        %v960 = vpop.f32.mrb[0].mxu0
        %v961 = vpop.f32.mrb[0].mxu0
        %v962 = vadd.f32 0.0, %v961
        %v963 = vpop.f32.mrb[0].mxu0
        %964 = vdwg.mxu0
        %965 = vrot.lane.b32.xlu0 %v575, 64
        %v966 = vpop.permute.xlu0 %965
        %v969 = vsel %vm794, %v869, 0
        %971 = vmatprep.subr.bf16.mxu0 0
        %972 = vmatpush1.bf16.msra.mxu0 %v966
        %973 = vmatprep.subr.bf16.mxu0 0
        %974 = vmatpush1.bf16.msra.mxu0 0
        %975 = vmatprep.subr.bf16.mxu0 0
        %976 = vmatpush1.bf16.msra.mxu0 0
        %977 = vmatprep.subr.bf16.mxu0 0
        %978 = vmatpush1.bf16.msra.mxu0 0
        %979 = vmatprep.subr.bf16.mxu0 0
        %980 = vmatpush1.bf16.msra.mxu0 0
        %981 = vmatprep.subr.bf16.mxu0 0
        %982 = vmatpush1.bf16.msra.mxu0 0
        %983 = vmatprep.subr.bf16.mxu0 0
        %984 = vmatpush1.bf16.msra.mxu0 0
        %985 = vmatprep.subr.bf16.mxu0 0
        %986 = vmatpush1.bf16.msra.mxu0 0
        %987 = vmatprep.subr.bf16.mxu0 0
        %988 = vmatpush1.bf16.msra.mxu0 0
        %989 = vmatprep.subr.bf16.mxu0 0
        %990 = vmatpush1.bf16.msra.mxu0 0
        %991 = vmatprep.subr.bf16.mxu0 0
        %992 = vmatpush1.bf16.msra.mxu0 0
        %993 = vmatprep.subr.bf16.mxu0 0
        %994 = vmatpush1.bf16.msra.mxu0 0
        %995 = vmatprep.subr.bf16.mxu0 0
        %996 = vmatpush1.bf16.msra.mxu0 0
        %997 = vmatprep.subr.bf16.mxu0 0
        %998 = vmatpush1.bf16.msra.mxu0 0
        %999 = vmatprep.subr.bf16.mxu0 0
        %1000 = vmatpush1.bf16.msra.mxu0 0
        %1001 = vmatprep.subr.bf16.mxu0 0
        %1002 = vmatpush1.bf16.msra.mxu0 0
        %1003 = vmatprep.mubr.bf16.mxu0 0
        %1004 = vmatmul.mubr.bf16.gmra.mrb[0].mxu0 %v969
        %v1005 = vpop.f32.mrb[0].mxu0
        %v1006 = vadd.f32 0.0, %v1005
        %v1007 = vpop.f32.mrb[0].mxu0
        %v1008 = vpop.f32.mrb[0].mxu0
        %v1009 = vadd.f32 0.0, %v1008
        %v1010 = vpop.f32.mrb[0].mxu0
        %1011 = vdwg.mxu0
        %1012 = vrot.lane.b32.xlu0 %v576, 64
        %v1013 = vpop.permute.xlu0 %1012
        %v1016 = vsel %vm794, %v870, 0
        %1018 = vmatprep.subr.bf16.mxu0 0
        %1019 = vmatpush1.bf16.msra.mxu0 %v1013
        %1020 = vmatprep.subr.bf16.mxu0 0
        %1021 = vmatpush1.bf16.msra.mxu0 0
        %1022 = vmatprep.subr.bf16.mxu0 0
        %1023 = vmatpush1.bf16.msra.mxu0 0
        %1024 = vmatprep.subr.bf16.mxu0 0
        %1025 = vmatpush1.bf16.msra.mxu0 0
        %1026 = vmatprep.subr.bf16.mxu0 0
        %1027 = vmatpush1.bf16.msra.mxu0 0
        %1028 = vmatprep.subr.bf16.mxu0 0
        %1029 = vmatpush1.bf16.msra.mxu0 0
        %1030 = vmatprep.subr.bf16.mxu0 0
        %1031 = vmatpush1.bf16.msra.mxu0 0
        %1032 = vmatprep.subr.bf16.mxu0 0
        %1033 = vmatpush1.bf16.msra.mxu0 0
        %1034 = vmatprep.subr.bf16.mxu0 0
        %1035 = vmatpush1.bf16.msra.mxu0 0
        %1036 = vmatprep.subr.bf16.mxu0 0
        %1037 = vmatpush1.bf16.msra.mxu0 0
        %1038 = vmatprep.subr.bf16.mxu0 0
        %1039 = vmatpush1.bf16.msra.mxu0 0
        %1040 = vmatprep.subr.bf16.mxu0 0
        %1041 = vmatpush1.bf16.msra.mxu0 0
        %1042 = vmatprep.subr.bf16.mxu0 0
        %1043 = vmatpush1.bf16.msra.mxu0 0
        %1044 = vmatprep.subr.bf16.mxu0 0
        %1045 = vmatpush1.bf16.msra.mxu0 0
        %1046 = vmatprep.subr.bf16.mxu0 0
        %1047 = vmatpush1.bf16.msra.mxu0 0
        %1048 = vmatprep.subr.bf16.mxu0 0
        %1049 = vmatpush1.bf16.msra.mxu0 0
        %1050 = vmatprep.mubr.bf16.mxu0 0
        %1051 = vmatmul.mubr.bf16.gmra.mrb[0].mxu0 %v1016
        %v1052 = vpop.f32.mrb[0].mxu0
        %v1053 = vadd.f32 0.0, %v1052
        %v1054 = vpop.f32.mrb[0].mxu0
        %v1055 = vpop.f32.mrb[0].mxu0
        %v1056 = vadd.f32 0.0, %v1055
        %v1057 = vpop.f32.mrb[0].mxu0
        %1058 = vdwg.mxu0
        %v1059 = vrcp.pop %v845
        %v1060 = vrcp.pop %v848
        %v1061 = vrcp.pop %v851
        %v1062 = vrcp.pop %v854
        %v1063 = vrcp.pop %v857
        %v1064 = vrcp.pop %v860
        %v1065 = vrcp.pop %v863
        %v1066 = vrcp.pop %v866
        %v1067 = vmul.f32 %v912, %v1059
        %v1068 = vmul.f32 %v915, %v1060
        %v1069 = vmul.f32 %v959, %v1061
        %v1070 = vmul.f32 %v962, %v1062
        %v1071 = vmul.f32 %v1006, %v1063
        %v1072 = vmul.f32 %v1009, %v1064
        %v1073 = vmul.f32 %v1053, %v1065
        %v1074 = vmul.f32 %v1056, %v1066
        %v1075 = vpack.c.bf16 %v1068, %v1067
        %v1076 = vpack.c.bf16 %v1070, %v1069
        %v1077 = vpack.c.bf16 %v1072, %v1071
        %v1078 = vpack.c.bf16 %v1074, %v1073
        %v1079 = vld [vmem:[%s5] sm:$0xf]
        %1080 = vrot.lane.b32.xlu0 %v573, 120
        %v1081 = vpop.permute.xlu0 %1080
        %1082 = vrot.lane.b32.xlu0 %v573, 88
        %v1083 = vpop.permute.xlu0 %1082
        %v1085 = vsel %vm580, %v1081, 0
        %v1088 = vsel %vm580, %v1083, 0
        %1090 = vmatprep.subr.bf16.mxu0 0
        %1091 = vmatpush1.bf16.xpose.msra.mxu0 %v1088
        %1092 = vmatprep.subr.bf16.mxu0 0
        %1093 = vmatpush1.bf16.xpose.msra.mxu0 0
        %1094 = vmatprep.subr.bf16.mxu0 0
        %1095 = vmatpush1.bf16.xpose.msra.mxu0 0
        %1096 = vmatprep.subr.bf16.mxu0 0
        %1097 = vmatpush1.bf16.xpose.msra.mxu0 0
        %1098 = vmatprep.subr.bf16.mxu0 0
        %1099 = vmatpush1.bf16.xpose.msra.mxu0 0
        %1100 = vmatprep.subr.bf16.mxu0 0
        %1101 = vmatpush1.bf16.xpose.msra.mxu0 0
        %1102 = vmatprep.subr.bf16.mxu0 0
        %1103 = vmatpush1.bf16.xpose.msra.mxu0 0
        %1104 = vmatprep.subr.bf16.mxu0 0
        %1105 = vmatpush1.bf16.xpose.msra.mxu0 0
        %1106 = vmatprep.subr.bf16.mxu0 0
        %1107 = vmatpush1.bf16.xpose.msra.mxu0 0
        %1108 = vmatprep.subr.bf16.mxu0 0
        %1109 = vmatpush1.bf16.xpose.msra.mxu0 0
        %1110 = vmatprep.subr.bf16.mxu0 0
        %1111 = vmatpush1.bf16.xpose.msra.mxu0 0
        %1112 = vmatprep.subr.bf16.mxu0 0
        %1113 = vmatpush1.bf16.xpose.msra.mxu0 0
        %1114 = vmatprep.subr.bf16.mxu0 0
        %1115 = vmatpush1.bf16.xpose.msra.mxu0 0
        %1116 = vmatprep.subr.bf16.mxu0 0
        %1117 = vmatpush1.bf16.xpose.msra.mxu0 0
        %1118 = vmatprep.subr.bf16.mxu0 0
        %1119 = vmatpush1.bf16.xpose.msra.mxu0 0
        %1120 = vmatprep.subr.bf16.mxu0 0
        %1121 = vmatpush1.bf16.xpose.msra.mxu0 0
        %1122 = vmatprep.mubr.bf16.mxu0 0
        %1123 = vmatmul.mubr.bf16.gmra.mrb[0].mxu0 %v1085
        %v1124 = vpop.f32.mrb[0].mxu0
        %v1125 = vadd.f32 0.0, %v1124
        %v1126 = vpop.f32.mrb[0].mxu0
        %v1127 = vpop.f32.mrb[0].mxu0
        %v1128 = vadd.f32 0.0, %v1127
        %v1129 = vpop.f32.mrb[0].mxu0
        %1130 = vdwg.mxu0
        %1131 = vrot.lane.b32.xlu0 %v574, 120
        %v1132 = vpop.permute.xlu0 %1131
        %1133 = vrot.lane.b32.xlu0 %v574, 88
        %v1134 = vpop.permute.xlu0 %1133
        %v1136 = vsel %vm580, %v1132, 0
        %v1139 = vsel %vm580, %v1134, 0
        %1141 = vmatprep.subr.bf16.mxu0 0
        %1142 = vmatpush1.bf16.xpose.msra.mxu0 %v1139
        %1143 = vmatprep.subr.bf16.mxu0 0
        %1144 = vmatpush1.bf16.xpose.msra.mxu0 0
        %1145 = vmatprep.subr.bf16.mxu0 0
        %1146 = vmatpush1.bf16.xpose.msra.mxu0 0
        %1147 = vmatprep.subr.bf16.mxu0 0
        %1148 = vmatpush1.bf16.xpose.msra.mxu0 0
        %1149 = vmatprep.subr.bf16.mxu0 0
        %1150 = vmatpush1.bf16.xpose.msra.mxu0 0
        %1151 = vmatprep.subr.bf16.mxu0 0
        %1152 = vmatpush1.bf16.xpose.msra.mxu0 0
        %1153 = vmatprep.subr.bf16.mxu0 0
        %1154 = vmatpush1.bf16.xpose.msra.mxu0 0
        %1155 = vmatprep.subr.bf16.mxu0 0
        %1156 = vmatpush1.bf16.xpose.msra.mxu0 0
        %1157 = vmatprep.subr.bf16.mxu0 0
        %1158 = vmatpush1.bf16.xpose.msra.mxu0 0
        %1159 = vmatprep.subr.bf16.mxu0 0
        %1160 = vmatpush1.bf16.xpose.msra.mxu0 0
        %1161 = vmatprep.subr.bf16.mxu0 0
        %1162 = vmatpush1.bf16.xpose.msra.mxu0 0
        %1163 = vmatprep.subr.bf16.mxu0 0
        %1164 = vmatpush1.bf16.xpose.msra.mxu0 0
        %1165 = vmatprep.subr.bf16.mxu0 0
        %1166 = vmatpush1.bf16.xpose.msra.mxu0 0
        %1167 = vmatprep.subr.bf16.mxu0 0
        %1168 = vmatpush1.bf16.xpose.msra.mxu0 0
        %1169 = vmatprep.subr.bf16.mxu0 0
        %1170 = vmatpush1.bf16.xpose.msra.mxu0 0
        %1171 = vmatprep.subr.bf16.mxu0 0
        %1172 = vmatpush1.bf16.xpose.msra.mxu0 0
        %1173 = vmatprep.mubr.bf16.mxu0 0
        %1174 = vmatmul.mubr.bf16.gmra.mrb[0].mxu0 %v1136
        %v1175 = vpop.f32.mrb[0].mxu0
        %v1176 = vadd.f32 0.0, %v1175
        %v1177 = vpop.f32.mrb[0].mxu0
        %v1178 = vpop.f32.mrb[0].mxu0
        %v1179 = vadd.f32 0.0, %v1178
        %v1180 = vpop.f32.mrb[0].mxu0
        %1181 = vdwg.mxu0
        %1182 = vrot.lane.b32.xlu0 %v575, 120
        %v1183 = vpop.permute.xlu0 %1182
        %1184 = vrot.lane.b32.xlu0 %v575, 88
        %v1185 = vpop.permute.xlu0 %1184
        %v1187 = vsel %vm580, %v1183, 0
        %v1190 = vsel %vm580, %v1185, 0
        %1192 = vmatprep.subr.bf16.mxu0 0
        %1193 = vmatpush1.bf16.xpose.msra.mxu0 %v1190
        %1194 = vmatprep.subr.bf16.mxu0 0
        %1195 = vmatpush1.bf16.xpose.msra.mxu0 0
        %1196 = vmatprep.subr.bf16.mxu0 0
        %1197 = vmatpush1.bf16.xpose.msra.mxu0 0
        %1198 = vmatprep.subr.bf16.mxu0 0
        %1199 = vmatpush1.bf16.xpose.msra.mxu0 0
        %1200 = vmatprep.subr.bf16.mxu0 0
        %1201 = vmatpush1.bf16.xpose.msra.mxu0 0
        %1202 = vmatprep.subr.bf16.mxu0 0
        %1203 = vmatpush1.bf16.xpose.msra.mxu0 0
        %1204 = vmatprep.subr.bf16.mxu0 0
        %1205 = vmatpush1.bf16.xpose.msra.mxu0 0
        %1206 = vmatprep.subr.bf16.mxu0 0
        %1207 = vmatpush1.bf16.xpose.msra.mxu0 0
        %1208 = vmatprep.subr.bf16.mxu0 0
        %1209 = vmatpush1.bf16.xpose.msra.mxu0 0
        %1210 = vmatprep.subr.bf16.mxu0 0
        %1211 = vmatpush1.bf16.xpose.msra.mxu0 0
        %1212 = vmatprep.subr.bf16.mxu0 0
        %1213 = vmatpush1.bf16.xpose.msra.mxu0 0
        %1214 = vmatprep.subr.bf16.mxu0 0
        %1215 = vmatpush1.bf16.xpose.msra.mxu0 0
        %1216 = vmatprep.subr.bf16.mxu0 0
        %1217 = vmatpush1.bf16.xpose.msra.mxu0 0
        %1218 = vmatprep.subr.bf16.mxu0 0
        %1219 = vmatpush1.bf16.xpose.msra.mxu0 0
        %1220 = vmatprep.subr.bf16.mxu0 0
        %1221 = vmatpush1.bf16.xpose.msra.mxu0 0
        %1222 = vmatprep.subr.bf16.mxu0 0
        %1223 = vmatpush1.bf16.xpose.msra.mxu0 0
        %1224 = vmatprep.mubr.bf16.mxu0 0
        %1225 = vmatmul.mubr.bf16.gmra.mrb[0].mxu0 %v1187
        %v1226 = vpop.f32.mrb[0].mxu0
        %v1227 = vadd.f32 0.0, %v1226
        %v1228 = vpop.f32.mrb[0].mxu0
        %v1229 = vpop.f32.mrb[0].mxu0
        %v1230 = vadd.f32 0.0, %v1229
        %v1231 = vpop.f32.mrb[0].mxu0
        %1232 = vdwg.mxu0
        %1233 = vrot.lane.b32.xlu0 %v576, 120
        %v1234 = vpop.permute.xlu0 %1233
        %1235 = vrot.lane.b32.xlu0 %v576, 88
        %v1236 = vpop.permute.xlu0 %1235
        %v1238 = vsel %vm580, %v1234, 0
        %v1241 = vsel %vm580, %v1236, 0
        %1243 = vmatprep.subr.bf16.mxu0 0
        %1244 = vmatpush1.bf16.xpose.msra.mxu0 %v1241
        %1245 = vmatprep.subr.bf16.mxu0 0
        %1246 = vmatpush1.bf16.xpose.msra.mxu0 0
        %1247 = vmatprep.subr.bf16.mxu0 0
        %1248 = vmatpush1.bf16.xpose.msra.mxu0 0
        %1249 = vmatprep.subr.bf16.mxu0 0
        %1250 = vmatpush1.bf16.xpose.msra.mxu0 0
        %1251 = vmatprep.subr.bf16.mxu0 0
        %1252 = vmatpush1.bf16.xpose.msra.mxu0 0
        %1253 = vmatprep.subr.bf16.mxu0 0
        %1254 = vmatpush1.bf16.xpose.msra.mxu0 0
        %1255 = vmatprep.subr.bf16.mxu0 0
        %1256 = vmatpush1.bf16.xpose.msra.mxu0 0
        %1257 = vmatprep.subr.bf16.mxu0 0
        %1258 = vmatpush1.bf16.xpose.msra.mxu0 0
        %1259 = vmatprep.subr.bf16.mxu0 0
        %1260 = vmatpush1.bf16.xpose.msra.mxu0 0
        %1261 = vmatprep.subr.bf16.mxu0 0
        %1262 = vmatpush1.bf16.xpose.msra.mxu0 0
        %1263 = vmatprep.subr.bf16.mxu0 0
        %1264 = vmatpush1.bf16.xpose.msra.mxu0 0
        %1265 = vmatprep.subr.bf16.mxu0 0
        %1266 = vmatpush1.bf16.xpose.msra.mxu0 0
        %1267 = vmatprep.subr.bf16.mxu0 0
        %1268 = vmatpush1.bf16.xpose.msra.mxu0 0
        %1269 = vmatprep.subr.bf16.mxu0 0
        %1270 = vmatpush1.bf16.xpose.msra.mxu0 0
        %1271 = vmatprep.subr.bf16.mxu0 0
        %1272 = vmatpush1.bf16.xpose.msra.mxu0 0
        %1273 = vmatprep.subr.bf16.mxu0 0
        %1274 = vmatpush1.bf16.xpose.msra.mxu0 0
        %1275 = vmatprep.mubr.bf16.mxu0 0
        %1276 = vmatmul.mubr.bf16.gmra.mrb[0].mxu0 %v1238
        %v1277 = vpop.f32.mrb[0].mxu0
        %v1278 = vadd.f32 0.0, %v1277
        %v1279 = vpop.f32.mrb[0].mxu0
        %v1280 = vpop.f32.mrb[0].mxu0
        %v1281 = vadd.f32 0.0, %v1280
        %v1282 = vpop.f32.mrb[0].mxu0
        %1283 = vdwg.mxu0
        %s1284 = scalar_lea.vmem [#allocation2], 64
        %v1285 = vld [vmem:[%s1284] sm:$0xff]
        %v1286 = vld [vmem:[%s1284 + $0x8] sm:$0xff]
        %v1287 = vld [vmem:[%s1284 + $0x10] sm:$0xff]
        %v1288 = vld [vmem:[%s1284 + $0x18] sm:$0xff]
        %v1289 = vld [vmem:[%s1284 + $0x20] sm:$0xff]
        %v1290 = vld [vmem:[%s1284 + $0x28] sm:$0xff]
        %v1291 = vld [vmem:[%s1284 + $0x30] sm:$0xff]
        %v1292 = vld [vmem:[%s1284 + $0x38] sm:$0xff]
        %v1293 = vadd.f32 %v1125, %v1285
        %v1294 = vadd.f32 %v1128, %v1286
        %v1295 = vadd.f32 %v1176, %v1287
        %v1296 = vadd.f32 %v1179, %v1288
        %v1297 = vadd.f32 %v1227, %v1289
        %v1298 = vadd.f32 %v1230, %v1290
        %v1299 = vadd.f32 %v1278, %v1291
        %v1300 = vadd.f32 %v1281, %v1292
        %v1301 = vsel %vm794, %v1293, -inf
        %1302 = vmax.xlane.f32.xlu0 %v1301
        %v1303 = vpop.xlane.xlu0 %1302
        %v1304 = vsel %vm794, %v1294, -inf
        %1305 = vmax.xlane.f32.xlu0 %v1304
        %v1306 = vpop.xlane.xlu0 %1305
        %v1307 = vsel %vm794, %v1295, -inf
        %1308 = vmax.xlane.f32.xlu0 %v1307
        %v1309 = vpop.xlane.xlu0 %1308
        %v1310 = vsel %vm794, %v1296, -inf
        %1311 = vmax.xlane.f32.xlu0 %v1310
        %v1312 = vpop.xlane.xlu0 %1311
        %v1313 = vsel %vm794, %v1297, -inf
        %1314 = vmax.xlane.f32.xlu0 %v1313
        %v1315 = vpop.xlane.xlu0 %1314
        %v1316 = vsel %vm794, %v1298, -inf
        %1317 = vmax.xlane.f32.xlu0 %v1316
        %v1318 = vpop.xlane.xlu0 %1317
        %v1319 = vsel %vm794, %v1299, -inf
        %1320 = vmax.xlane.f32.xlu0 %v1319
        %v1321 = vpop.xlane.xlu0 %1320
        %v1322 = vsel %vm794, %v1300, -inf
        %1323 = vmax.xlane.f32.xlu0 %v1322
        %v1324 = vpop.xlane.xlu0 %1323
        %v1325 = vsub.f32 %v1293, %v1303
        %v1326 = vsub.f32 %v1294, %v1306
        %v1327 = vsub.f32 %v1295, %v1309
        %v1328 = vsub.f32 %v1296, %v1312
        %v1329 = vsub.f32 %v1297, %v1315
        %v1330 = vsub.f32 %v1298, %v1318
        %v1331 = vsub.f32 %v1299, %v1321
        %v1332 = vsub.f32 %v1300, %v1324
        %v1333 = vmul.f32 %v1325, 1.442695
        %v1334 = vpow.pop %v1333
        %v1335 = vmul.f32 %v1326, 1.442695
        %v1336 = vpow.pop %v1335
        %v1337 = vmul.f32 %v1327, 1.442695
        %v1338 = vpow.pop %v1337
        %v1339 = vmul.f32 %v1328, 1.442695
        %v1340 = vpow.pop %v1339
        %v1341 = vmul.f32 %v1329, 1.442695
        %v1342 = vpow.pop %v1341
        %v1343 = vmul.f32 %v1330, 1.442695
        %v1344 = vpow.pop %v1343
        %v1345 = vmul.f32 %v1331, 1.442695
        %v1346 = vpow.pop %v1345
        %v1347 = vmul.f32 %v1332, 1.442695
        %v1348 = vpow.pop %v1347
        %v1349 = vsel %vm794, %v1334, 0.0
        %1350 = vadd.xlane.f32.xlu0 %v1349
        %v1351 = vpop.xlane.xlu0 %1350
        %v1352 = vsel %vm794, %v1336, 0.0
        %1353 = vadd.xlane.f32.xlu0 %v1352
        %v1354 = vpop.xlane.xlu0 %1353
        %v1355 = vsel %vm794, %v1338, 0.0
        %1356 = vadd.xlane.f32.xlu0 %v1355
        %v1357 = vpop.xlane.xlu0 %1356
        %v1358 = vsel %vm794, %v1340, 0.0
        %1359 = vadd.xlane.f32.xlu0 %v1358
        %v1360 = vpop.xlane.xlu0 %1359
        %v1361 = vsel %vm794, %v1342, 0.0
        %1362 = vadd.xlane.f32.xlu0 %v1361
        %v1363 = vpop.xlane.xlu0 %1362
        %v1364 = vsel %vm794, %v1344, 0.0
        %1365 = vadd.xlane.f32.xlu0 %v1364
        %v1366 = vpop.xlane.xlu0 %1365
        %v1367 = vsel %vm794, %v1346, 0.0
        %1368 = vadd.xlane.f32.xlu0 %v1367
        %v1369 = vpop.xlane.xlu0 %1368
        %v1370 = vsel %vm794, %v1348, 0.0
        %1371 = vadd.xlane.f32.xlu0 %v1370
        %v1372 = vpop.xlane.xlu0 %1371
        %v1373 = vpack.c.bf16 %v1336, %v1334
        %v1374 = vpack.c.bf16 %v1340, %v1338
        %v1375 = vpack.c.bf16 %v1344, %v1342
        %v1376 = vpack.c.bf16 %v1348, %v1346
        %1377 = vrot.lane.b32.xlu0 %v573, 56
        %v1378 = vpop.permute.xlu0 %1377
        %v1381 = vsel %vm794, %v1373, 0
        %1383 = vmatprep.subr.bf16.mxu0 0
        %1384 = vmatpush1.bf16.msra.mxu0 %v1378
        %1385 = vmatprep.subr.bf16.mxu0 0
        %1386 = vmatpush1.bf16.msra.mxu0 0
        %1387 = vmatprep.subr.bf16.mxu0 0
        %1388 = vmatpush1.bf16.msra.mxu0 0
        %1389 = vmatprep.subr.bf16.mxu0 0
        %1390 = vmatpush1.bf16.msra.mxu0 0
        %1391 = vmatprep.subr.bf16.mxu0 0
        %1392 = vmatpush1.bf16.msra.mxu0 0
        %1393 = vmatprep.subr.bf16.mxu0 0
        %1394 = vmatpush1.bf16.msra.mxu0 0
        %1395 = vmatprep.subr.bf16.mxu0 0
        %1396 = vmatpush1.bf16.msra.mxu0 0
        %1397 = vmatprep.subr.bf16.mxu0 0
        %1398 = vmatpush1.bf16.msra.mxu0 0
        %1399 = vmatprep.subr.bf16.mxu0 0
        %1400 = vmatpush1.bf16.msra.mxu0 0
        %1401 = vmatprep.subr.bf16.mxu0 0
        %1402 = vmatpush1.bf16.msra.mxu0 0
        %1403 = vmatprep.subr.bf16.mxu0 0
        %1404 = vmatpush1.bf16.msra.mxu0 0
        %1405 = vmatprep.subr.bf16.mxu0 0
        %1406 = vmatpush1.bf16.msra.mxu0 0
        %1407 = vmatprep.subr.bf16.mxu0 0
        %1408 = vmatpush1.bf16.msra.mxu0 0
        %1409 = vmatprep.subr.bf16.mxu0 0
        %1410 = vmatpush1.bf16.msra.mxu0 0
        %1411 = vmatprep.subr.bf16.mxu0 0
        %1412 = vmatpush1.bf16.msra.mxu0 0
        %1413 = vmatprep.subr.bf16.mxu0 0
        %1414 = vmatpush1.bf16.msra.mxu0 0
        %1415 = vmatprep.mubr.bf16.mxu0 0
        %1416 = vmatmul.mubr.bf16.gmra.mrb[0].mxu0 %v1381
        %v1417 = vpop.f32.mrb[0].mxu0
        %v1418 = vadd.f32 0.0, %v1417
        %v1419 = vpop.f32.mrb[0].mxu0
        %v1420 = vpop.f32.mrb[0].mxu0
        %v1421 = vadd.f32 0.0, %v1420
        %v1422 = vpop.f32.mrb[0].mxu0
        %1423 = vdwg.mxu0
        %1424 = vrot.lane.b32.xlu0 %v574, 56
        %v1425 = vpop.permute.xlu0 %1424
        %v1428 = vsel %vm794, %v1374, 0
        %1430 = vmatprep.subr.bf16.mxu0 0
        %1431 = vmatpush1.bf16.msra.mxu0 %v1425
        %1432 = vmatprep.subr.bf16.mxu0 0
        %1433 = vmatpush1.bf16.msra.mxu0 0
        %1434 = vmatprep.subr.bf16.mxu0 0
        %1435 = vmatpush1.bf16.msra.mxu0 0
        %1436 = vmatprep.subr.bf16.mxu0 0
        %1437 = vmatpush1.bf16.msra.mxu0 0
        %1438 = vmatprep.subr.bf16.mxu0 0
        %1439 = vmatpush1.bf16.msra.mxu0 0
        %1440 = vmatprep.subr.bf16.mxu0 0
        %1441 = vmatpush1.bf16.msra.mxu0 0
        %1442 = vmatprep.subr.bf16.mxu0 0
        %1443 = vmatpush1.bf16.msra.mxu0 0
        %1444 = vmatprep.subr.bf16.mxu0 0
        %1445 = vmatpush1.bf16.msra.mxu0 0
        %1446 = vmatprep.subr.bf16.mxu0 0
        %1447 = vmatpush1.bf16.msra.mxu0 0
        %1448 = vmatprep.subr.bf16.mxu0 0
        %1449 = vmatpush1.bf16.msra.mxu0 0
        %1450 = vmatprep.subr.bf16.mxu0 0
        %1451 = vmatpush1.bf16.msra.mxu0 0
        %1452 = vmatprep.subr.bf16.mxu0 0
        %1453 = vmatpush1.bf16.msra.mxu0 0
        %1454 = vmatprep.subr.bf16.mxu0 0
        %1455 = vmatpush1.bf16.msra.mxu0 0
        %1456 = vmatprep.subr.bf16.mxu0 0
        %1457 = vmatpush1.bf16.msra.mxu0 0
        %1458 = vmatprep.subr.bf16.mxu0 0
        %1459 = vmatpush1.bf16.msra.mxu0 0
        %1460 = vmatprep.subr.bf16.mxu0 0
        %1461 = vmatpush1.bf16.msra.mxu0 0
        %1462 = vmatprep.mubr.bf16.mxu0 0
        %1463 = vmatmul.mubr.bf16.gmra.mrb[0].mxu0 %v1428
        %v1464 = vpop.f32.mrb[0].mxu0
        %v1465 = vadd.f32 0.0, %v1464
        %v1466 = vpop.f32.mrb[0].mxu0
        %v1467 = vpop.f32.mrb[0].mxu0
        %v1468 = vadd.f32 0.0, %v1467
        %v1469 = vpop.f32.mrb[0].mxu0
        %1470 = vdwg.mxu0
        %1471 = vrot.lane.b32.xlu0 %v575, 56
        %v1472 = vpop.permute.xlu0 %1471
        %v1475 = vsel %vm794, %v1375, 0
        %1477 = vmatprep.subr.bf16.mxu0 0
        %1478 = vmatpush1.bf16.msra.mxu0 %v1472
        %1479 = vmatprep.subr.bf16.mxu0 0
        %1480 = vmatpush1.bf16.msra.mxu0 0
        %1481 = vmatprep.subr.bf16.mxu0 0
        %1482 = vmatpush1.bf16.msra.mxu0 0
        %1483 = vmatprep.subr.bf16.mxu0 0
        %1484 = vmatpush1.bf16.msra.mxu0 0
        %1485 = vmatprep.subr.bf16.mxu0 0
        %1486 = vmatpush1.bf16.msra.mxu0 0
        %1487 = vmatprep.subr.bf16.mxu0 0
        %1488 = vmatpush1.bf16.msra.mxu0 0
        %1489 = vmatprep.subr.bf16.mxu0 0
        %1490 = vmatpush1.bf16.msra.mxu0 0
        %1491 = vmatprep.subr.bf16.mxu0 0
        %1492 = vmatpush1.bf16.msra.mxu0 0
        %1493 = vmatprep.subr.bf16.mxu0 0
        %1494 = vmatpush1.bf16.msra.mxu0 0
        %1495 = vmatprep.subr.bf16.mxu0 0
        %1496 = vmatpush1.bf16.msra.mxu0 0
        %1497 = vmatprep.subr.bf16.mxu0 0
        %1498 = vmatpush1.bf16.msra.mxu0 0
        %1499 = vmatprep.subr.bf16.mxu0 0
        %1500 = vmatpush1.bf16.msra.mxu0 0
        %1501 = vmatprep.subr.bf16.mxu0 0
        %1502 = vmatpush1.bf16.msra.mxu0 0
        %1503 = vmatprep.subr.bf16.mxu0 0
        %1504 = vmatpush1.bf16.msra.mxu0 0
        %1505 = vmatprep.subr.bf16.mxu0 0
        %1506 = vmatpush1.bf16.msra.mxu0 0
        %1507 = vmatprep.subr.bf16.mxu0 0
        %1508 = vmatpush1.bf16.msra.mxu0 0
        %1509 = vmatprep.mubr.bf16.mxu0 0
        %1510 = vmatmul.mubr.bf16.gmra.mrb[0].mxu0 %v1475
        %v1511 = vpop.f32.mrb[0].mxu0
        %v1512 = vadd.f32 0.0, %v1511
        %v1513 = vpop.f32.mrb[0].mxu0
        %v1514 = vpop.f32.mrb[0].mxu0
        %v1515 = vadd.f32 0.0, %v1514
        %v1516 = vpop.f32.mrb[0].mxu0
        %1517 = vdwg.mxu0
        %1518 = vrot.lane.b32.xlu0 %v576, 56
        %v1519 = vpop.permute.xlu0 %1518
        %v1522 = vsel %vm794, %v1376, 0
        %1524 = vmatprep.subr.bf16.mxu0 0
        %1525 = vmatpush1.bf16.msra.mxu0 %v1519
        %1526 = vmatprep.subr.bf16.mxu0 0
        %1527 = vmatpush1.bf16.msra.mxu0 0
        %1528 = vmatprep.subr.bf16.mxu0 0
        %1529 = vmatpush1.bf16.msra.mxu0 0
        %1530 = vmatprep.subr.bf16.mxu0 0
        %1531 = vmatpush1.bf16.msra.mxu0 0
        %1532 = vmatprep.subr.bf16.mxu0 0
        %1533 = vmatpush1.bf16.msra.mxu0 0
        %1534 = vmatprep.subr.bf16.mxu0 0
        %1535 = vmatpush1.bf16.msra.mxu0 0
        %1536 = vmatprep.subr.bf16.mxu0 0
        %1537 = vmatpush1.bf16.msra.mxu0 0
        %1538 = vmatprep.subr.bf16.mxu0 0
        %1539 = vmatpush1.bf16.msra.mxu0 0
        %1540 = vmatprep.subr.bf16.mxu0 0
        %1541 = vmatpush1.bf16.msra.mxu0 0
        %1542 = vmatprep.subr.bf16.mxu0 0
        %1543 = vmatpush1.bf16.msra.mxu0 0
        %1544 = vmatprep.subr.bf16.mxu0 0
        %1545 = vmatpush1.bf16.msra.mxu0 0
        %1546 = vmatprep.subr.bf16.mxu0 0
        %1547 = vmatpush1.bf16.msra.mxu0 0
        %1548 = vmatprep.subr.bf16.mxu0 0
        %1549 = vmatpush1.bf16.msra.mxu0 0
        %1550 = vmatprep.subr.bf16.mxu0 0
        %1551 = vmatpush1.bf16.msra.mxu0 0
        %1552 = vmatprep.subr.bf16.mxu0 0
        %1553 = vmatpush1.bf16.msra.mxu0 0
        %1554 = vmatprep.subr.bf16.mxu0 0
        %1555 = vmatpush1.bf16.msra.mxu0 0
        %1556 = vmatprep.mubr.bf16.mxu0 0
        %1557 = vmatmul.mubr.bf16.gmra.mrb[0].mxu0 %v1522
        %v1558 = vpop.f32.mrb[0].mxu0
        %v1559 = vadd.f32 0.0, %v1558
        %v1560 = vpop.f32.mrb[0].mxu0
        %v1561 = vpop.f32.mrb[0].mxu0
        %v1562 = vadd.f32 0.0, %v1561
        %v1563 = vpop.f32.mrb[0].mxu0
        %1564 = vdwg.mxu0
        %v1565 = vrcp.pop %v1351
        %v1566 = vrcp.pop %v1354
        %v1567 = vrcp.pop %v1357
        %v1568 = vrcp.pop %v1360
        %v1569 = vrcp.pop %v1363
        %v1570 = vrcp.pop %v1366
        %v1571 = vrcp.pop %v1369
        %v1572 = vrcp.pop %v1372
        %v1573 = vmul.f32 %v1418, %v1565
        %v1574 = vmul.f32 %v1421, %v1566
        %v1575 = vmul.f32 %v1465, %v1567
        %v1576 = vmul.f32 %v1468, %v1568
        %v1577 = vmul.f32 %v1512, %v1569
        %v1578 = vmul.f32 %v1515, %v1570
        %v1579 = vmul.f32 %v1559, %v1571
        %v1580 = vmul.f32 %v1562, %v1572
        %v1581 = vpack.c.bf16 %v1574, %v1573
        %v1582 = vpack.c.bf16 %v1576, %v1575
        %v1583 = vpack.c.bf16 %v1578, %v1577
        %v1584 = vpack.c.bf16 %v1580, %v1579
        %v1585 = vld [vmem:[%s5 + $0x4] sm:$0xf]
        %v1587 = vsel %vm580, %v1581, 0
        %v1590 = vsel %vm580, %v1582, 0
        %v1593 = vsel %vm580, %v1583, 0
        %v1596 = vsel %vm580, %v1584, 0
        %vm1598 = vcmask 1043456
        %v1600 = vsel %vm1598, %v1585, 0
        %1602 = vmatprep.subr.bf16.mxu0 0
        %1603 = vmatpush1.bf16.msra.mxu0 %v1600
        %1604 = vmatprep.subr.bf16.mxu0 0
        %1605 = vmatpush1.bf16.msra.mxu0 0
        %1606 = vmatprep.subr.bf16.mxu0 0
        %1607 = vmatpush1.bf16.msra.mxu0 0
        %1608 = vmatprep.subr.bf16.mxu0 0
        %1609 = vmatpush1.bf16.msra.mxu0 0
        %1610 = vmatprep.subr.bf16.mxu0 0
        %1611 = vmatpush1.bf16.msra.mxu0 0
        %1612 = vmatprep.subr.bf16.mxu0 0
        %1613 = vmatpush1.bf16.msra.mxu0 0
        %1614 = vmatprep.subr.bf16.mxu0 0
        %1615 = vmatpush1.bf16.msra.mxu0 0
        %1616 = vmatprep.subr.bf16.mxu0 0
        %1617 = vmatpush1.bf16.msra.mxu0 0
        %1618 = vmatprep.subr.bf16.mxu0 0
        %1619 = vmatpush1.bf16.msra.mxu0 0
        %1620 = vmatprep.subr.bf16.mxu0 0
        %1621 = vmatpush1.bf16.msra.mxu0 0
        %1622 = vmatprep.subr.bf16.mxu0 0
        %1623 = vmatpush1.bf16.msra.mxu0 0
        %1624 = vmatprep.subr.bf16.mxu0 0
        %1625 = vmatpush1.bf16.msra.mxu0 0
        %1626 = vmatprep.subr.bf16.mxu0 0
        %1627 = vmatpush1.bf16.msra.mxu0 0
        %1628 = vmatprep.subr.bf16.mxu0 0
        %1629 = vmatpush1.bf16.msra.mxu0 0
        %1630 = vmatprep.subr.bf16.mxu0 0
        %1631 = vmatpush1.bf16.msra.mxu0 0
        %1632 = vmatprep.subr.bf16.mxu0 0
        %1633 = vmatpush1.bf16.msra.mxu0 0
        %1634 = vmatprep.mubr.bf16.mxu0 0
        %1635 = vmatmul.mubr.bf16.gmra.mrb[0].mxu0 %v1587
        %v1636 = vpop.f32.mrb[0].mxu0
        %v1637 = vadd.f32 0.0, %v1636
        %v1638 = vpop.f32.mrb[0].mxu0
        %v1639 = vpop.f32.mrb[0].mxu0
        %v1640 = vadd.f32 0.0, %v1639
        %v1641 = vpop.f32.mrb[0].mxu0
        %1642 = vmatprep.mubr.bf16.mxu0 0
        %1643 = vmatmul.mubr.bf16.gmra.mrb[0].mxu0 %v1590
        %v1644 = vpop.f32.mrb[0].mxu0
        %v1645 = vadd.f32 0.0, %v1644
        %v1646 = vpop.f32.mrb[0].mxu0
        %v1647 = vpop.f32.mrb[0].mxu0
        %v1648 = vadd.f32 0.0, %v1647
        %v1649 = vpop.f32.mrb[0].mxu0
        %1650 = vmatprep.mubr.bf16.mxu0 0
        %1651 = vmatmul.mubr.bf16.gmra.mrb[0].mxu0 %v1593
        %v1652 = vpop.f32.mrb[0].mxu0
        %v1653 = vadd.f32 0.0, %v1652
        %v1654 = vpop.f32.mrb[0].mxu0
        %v1655 = vpop.f32.mrb[0].mxu0
        %v1656 = vadd.f32 0.0, %v1655
        %v1657 = vpop.f32.mrb[0].mxu0
        %1658 = vmatprep.mubr.bf16.mxu0 0
        %1659 = vmatmul.mubr.bf16.gmra.mrb[0].mxu0 %v1596
        %v1660 = vpop.f32.mrb[0].mxu0
        %v1661 = vadd.f32 0.0, %v1660
        %v1662 = vpop.f32.mrb[0].mxu0
        %v1663 = vpop.f32.mrb[0].mxu0
        %v1664 = vadd.f32 0.0, %v1663
        %v1665 = vpop.f32.mrb[0].mxu0
        %1666 = vdwg.mxu0
        %v1668 = vsel %vm580, %v1075, 0
        %v1671 = vsel %vm580, %v1076, 0
        %v1674 = vsel %vm580, %v1077, 0
        %v1677 = vsel %vm580, %v1078, 0
        %v1680 = vsel %vm1598, %v1079, 0
        %1682 = vmatprep.subr.bf16.mxu0 0
        %1683 = vmatpush1.bf16.msra.mxu0 %v1680
        %1684 = vmatprep.subr.bf16.mxu0 0
        %1685 = vmatpush1.bf16.msra.mxu0 0
        %1686 = vmatprep.subr.bf16.mxu0 0
        %1687 = vmatpush1.bf16.msra.mxu0 0
        %1688 = vmatprep.subr.bf16.mxu0 0
        %1689 = vmatpush1.bf16.msra.mxu0 0
        %1690 = vmatprep.subr.bf16.mxu0 0
        %1691 = vmatpush1.bf16.msra.mxu0 0
        %1692 = vmatprep.subr.bf16.mxu0 0
        %1693 = vmatpush1.bf16.msra.mxu0 0
        %1694 = vmatprep.subr.bf16.mxu0 0
        %1695 = vmatpush1.bf16.msra.mxu0 0
        %1696 = vmatprep.subr.bf16.mxu0 0
        %1697 = vmatpush1.bf16.msra.mxu0 0
        %1698 = vmatprep.subr.bf16.mxu0 0
        %1699 = vmatpush1.bf16.msra.mxu0 0
        %1700 = vmatprep.subr.bf16.mxu0 0
        %1701 = vmatpush1.bf16.msra.mxu0 0
        %1702 = vmatprep.subr.bf16.mxu0 0
        %1703 = vmatpush1.bf16.msra.mxu0 0
        %1704 = vmatprep.subr.bf16.mxu0 0
        %1705 = vmatpush1.bf16.msra.mxu0 0
        %1706 = vmatprep.subr.bf16.mxu0 0
        %1707 = vmatpush1.bf16.msra.mxu0 0
        %1708 = vmatprep.subr.bf16.mxu0 0
        %1709 = vmatpush1.bf16.msra.mxu0 0
        %1710 = vmatprep.subr.bf16.mxu0 0
        %1711 = vmatpush1.bf16.msra.mxu0 0
        %1712 = vmatprep.subr.bf16.mxu0 0
        %1713 = vmatpush1.bf16.msra.mxu0 0
        %1714 = vmatprep.mubr.bf16.mxu0 0
        %1715 = vmatmul.mubr.bf16.gmra.mrb[0].mxu0 %v1668
        %v1716 = vpop.f32.mrb[0].mxu0
        %v1717 = vadd.f32 %v1637, %v1716
        %v1718 = vpop.f32.mrb[0].mxu0
        %v1719 = vpop.f32.mrb[0].mxu0
        %v1720 = vadd.f32 %v1640, %v1719
        %v1721 = vpop.f32.mrb[0].mxu0
        %1722 = vmatprep.mubr.bf16.mxu0 0
        %1723 = vmatmul.mubr.bf16.gmra.mrb[0].mxu0 %v1671
        %v1724 = vpop.f32.mrb[0].mxu0
        %v1725 = vadd.f32 %v1645, %v1724
        %v1726 = vpop.f32.mrb[0].mxu0
        %v1727 = vpop.f32.mrb[0].mxu0
        %v1728 = vadd.f32 %v1648, %v1727
        %v1729 = vpop.f32.mrb[0].mxu0
        %1730 = vmatprep.mubr.bf16.mxu0 0
        %1731 = vmatmul.mubr.bf16.gmra.mrb[0].mxu0 %v1674
        %v1732 = vpop.f32.mrb[0].mxu0
        %v1733 = vadd.f32 %v1653, %v1732
        %v1734 = vpop.f32.mrb[0].mxu0
        %v1735 = vpop.f32.mrb[0].mxu0
        %v1736 = vadd.f32 %v1656, %v1735
        %v1737 = vpop.f32.mrb[0].mxu0
        %1738 = vmatprep.mubr.bf16.mxu0 0
        %1739 = vmatmul.mubr.bf16.gmra.mrb[0].mxu0 %v1677
        %v1740 = vpop.f32.mrb[0].mxu0
        %v1741 = vadd.f32 %v1661, %v1740
        %v1742 = vpop.f32.mrb[0].mxu0
        %v1743 = vpop.f32.mrb[0].mxu0
        %v1744 = vadd.f32 %v1664, %v1743
        %v1745 = vpop.f32.mrb[0].mxu0
        %1746 = vdwg.mxu0
        %1747 = vrot.lane.b32.xlu0 %v573, 112
        %v1748 = vpop.permute.xlu0 %1747
        %1749 = vrot.lane.b32.xlu0 %v573, 80
        %v1750 = vpop.permute.xlu0 %1749
        %v1752 = vsel %vm580, %v1748, 0
        %v1755 = vsel %vm580, %v1750, 0
        %1757 = vmatprep.subr.bf16.mxu0 0
        %1758 = vmatpush1.bf16.xpose.msra.mxu0 %v1755
        %1759 = vmatprep.subr.bf16.mxu0 0
        %1760 = vmatpush1.bf16.xpose.msra.mxu0 0
        %1761 = vmatprep.subr.bf16.mxu0 0
        %1762 = vmatpush1.bf16.xpose.msra.mxu0 0
        %1763 = vmatprep.subr.bf16.mxu0 0
        %1764 = vmatpush1.bf16.xpose.msra.mxu0 0
        %1765 = vmatprep.subr.bf16.mxu0 0
        %1766 = vmatpush1.bf16.xpose.msra.mxu0 0
        %1767 = vmatprep.subr.bf16.mxu0 0
        %1768 = vmatpush1.bf16.xpose.msra.mxu0 0
        %1769 = vmatprep.subr.bf16.mxu0 0
        %1770 = vmatpush1.bf16.xpose.msra.mxu0 0
        %1771 = vmatprep.subr.bf16.mxu0 0
        %1772 = vmatpush1.bf16.xpose.msra.mxu0 0
        %1773 = vmatprep.subr.bf16.mxu0 0
        %1774 = vmatpush1.bf16.xpose.msra.mxu0 0
        %1775 = vmatprep.subr.bf16.mxu0 0
        %1776 = vmatpush1.bf16.xpose.msra.mxu0 0
        %1777 = vmatprep.subr.bf16.mxu0 0
        %1778 = vmatpush1.bf16.xpose.msra.mxu0 0
        %1779 = vmatprep.subr.bf16.mxu0 0
        %1780 = vmatpush1.bf16.xpose.msra.mxu0 0
        %1781 = vmatprep.subr.bf16.mxu0 0
        %1782 = vmatpush1.bf16.xpose.msra.mxu0 0
        %1783 = vmatprep.subr.bf16.mxu0 0
        %1784 = vmatpush1.bf16.xpose.msra.mxu0 0
        %1785 = vmatprep.subr.bf16.mxu0 0
        %1786 = vmatpush1.bf16.xpose.msra.mxu0 0
        %1787 = vmatprep.subr.bf16.mxu0 0
        %1788 = vmatpush1.bf16.xpose.msra.mxu0 0
        %1789 = vmatprep.mubr.bf16.mxu0 0
        %1790 = vmatmul.mubr.bf16.gmra.mrb[0].mxu0 %v1752
        %v1791 = vpop.f32.mrb[0].mxu0
        %v1792 = vadd.f32 0.0, %v1791
        %v1793 = vpop.f32.mrb[0].mxu0
        %v1794 = vpop.f32.mrb[0].mxu0
        %v1795 = vadd.f32 0.0, %v1794
        %v1796 = vpop.f32.mrb[0].mxu0
        %1797 = vdwg.mxu0
        %1798 = vrot.lane.b32.xlu0 %v574, 112
        %v1799 = vpop.permute.xlu0 %1798
        %1800 = vrot.lane.b32.xlu0 %v574, 80
        %v1801 = vpop.permute.xlu0 %1800
        %v1803 = vsel %vm580, %v1799, 0
        %v1806 = vsel %vm580, %v1801, 0
        %1808 = vmatprep.subr.bf16.mxu0 0
        %1809 = vmatpush1.bf16.xpose.msra.mxu0 %v1806
        %1810 = vmatprep.subr.bf16.mxu0 0
        %1811 = vmatpush1.bf16.xpose.msra.mxu0 0
        %1812 = vmatprep.subr.bf16.mxu0 0
        %1813 = vmatpush1.bf16.xpose.msra.mxu0 0
        %1814 = vmatprep.subr.bf16.mxu0 0
        %1815 = vmatpush1.bf16.xpose.msra.mxu0 0
        %1816 = vmatprep.subr.bf16.mxu0 0
        %1817 = vmatpush1.bf16.xpose.msra.mxu0 0
        %1818 = vmatprep.subr.bf16.mxu0 0
        %1819 = vmatpush1.bf16.xpose.msra.mxu0 0
        %1820 = vmatprep.subr.bf16.mxu0 0
        %1821 = vmatpush1.bf16.xpose.msra.mxu0 0
        %1822 = vmatprep.subr.bf16.mxu0 0
        %1823 = vmatpush1.bf16.xpose.msra.mxu0 0
        %1824 = vmatprep.subr.bf16.mxu0 0
        %1825 = vmatpush1.bf16.xpose.msra.mxu0 0
        %1826 = vmatprep.subr.bf16.mxu0 0
        %1827 = vmatpush1.bf16.xpose.msra.mxu0 0
        %1828 = vmatprep.subr.bf16.mxu0 0
        %1829 = vmatpush1.bf16.xpose.msra.mxu0 0
        %1830 = vmatprep.subr.bf16.mxu0 0
        %1831 = vmatpush1.bf16.xpose.msra.mxu0 0
        %1832 = vmatprep.subr.bf16.mxu0 0
        %1833 = vmatpush1.bf16.xpose.msra.mxu0 0
        %1834 = vmatprep.subr.bf16.mxu0 0
        %1835 = vmatpush1.bf16.xpose.msra.mxu0 0
        %1836 = vmatprep.subr.bf16.mxu0 0
        %1837 = vmatpush1.bf16.xpose.msra.mxu0 0
        %1838 = vmatprep.subr.bf16.mxu0 0
        %1839 = vmatpush1.bf16.xpose.msra.mxu0 0
        %1840 = vmatprep.mubr.bf16.mxu0 0
        %1841 = vmatmul.mubr.bf16.gmra.mrb[0].mxu0 %v1803
        %v1842 = vpop.f32.mrb[0].mxu0
        %v1843 = vadd.f32 0.0, %v1842
        %v1844 = vpop.f32.mrb[0].mxu0
        %v1845 = vpop.f32.mrb[0].mxu0
        %v1846 = vadd.f32 0.0, %v1845
        %v1847 = vpop.f32.mrb[0].mxu0
        %1848 = vdwg.mxu0
        %1849 = vrot.lane.b32.xlu0 %v575, 112
        %v1850 = vpop.permute.xlu0 %1849
        %1851 = vrot.lane.b32.xlu0 %v575, 80
        %v1852 = vpop.permute.xlu0 %1851
        %v1854 = vsel %vm580, %v1850, 0
        %v1857 = vsel %vm580, %v1852, 0
        %1859 = vmatprep.subr.bf16.mxu0 0
        %1860 = vmatpush1.bf16.xpose.msra.mxu0 %v1857
        %1861 = vmatprep.subr.bf16.mxu0 0
        %1862 = vmatpush1.bf16.xpose.msra.mxu0 0
        %1863 = vmatprep.subr.bf16.mxu0 0
        %1864 = vmatpush1.bf16.xpose.msra.mxu0 0
        %1865 = vmatprep.subr.bf16.mxu0 0
        %1866 = vmatpush1.bf16.xpose.msra.mxu0 0
        %1867 = vmatprep.subr.bf16.mxu0 0
        %1868 = vmatpush1.bf16.xpose.msra.mxu0 0
        %1869 = vmatprep.subr.bf16.mxu0 0
        %1870 = vmatpush1.bf16.xpose.msra.mxu0 0
        %1871 = vmatprep.subr.bf16.mxu0 0
        %1872 = vmatpush1.bf16.xpose.msra.mxu0 0
        %1873 = vmatprep.subr.bf16.mxu0 0
        %1874 = vmatpush1.bf16.xpose.msra.mxu0 0
        %1875 = vmatprep.subr.bf16.mxu0 0
        %1876 = vmatpush1.bf16.xpose.msra.mxu0 0
        %1877 = vmatprep.subr.bf16.mxu0 0
        %1878 = vmatpush1.bf16.xpose.msra.mxu0 0
        %1879 = vmatprep.subr.bf16.mxu0 0
        %1880 = vmatpush1.bf16.xpose.msra.mxu0 0
        %1881 = vmatprep.subr.bf16.mxu0 0
        %1882 = vmatpush1.bf16.xpose.msra.mxu0 0
        %1883 = vmatprep.subr.bf16.mxu0 0
        %1884 = vmatpush1.bf16.xpose.msra.mxu0 0
        %1885 = vmatprep.subr.bf16.mxu0 0
        %1886 = vmatpush1.bf16.xpose.msra.mxu0 0
        %1887 = vmatprep.subr.bf16.mxu0 0
        %1888 = vmatpush1.bf16.xpose.msra.mxu0 0
        %1889 = vmatprep.subr.bf16.mxu0 0
        %1890 = vmatpush1.bf16.xpose.msra.mxu0 0
        %1891 = vmatprep.mubr.bf16.mxu0 0
        %1892 = vmatmul.mubr.bf16.gmra.mrb[0].mxu0 %v1854
        %v1893 = vpop.f32.mrb[0].mxu0
        %v1894 = vadd.f32 0.0, %v1893
        %v1895 = vpop.f32.mrb[0].mxu0
        %v1896 = vpop.f32.mrb[0].mxu0
        %v1897 = vadd.f32 0.0, %v1896
        %v1898 = vpop.f32.mrb[0].mxu0
        %1899 = vdwg.mxu0
        %1900 = vrot.lane.b32.xlu0 %v576, 112
        %v1901 = vpop.permute.xlu0 %1900
        %1902 = vrot.lane.b32.xlu0 %v576, 80
        %v1903 = vpop.permute.xlu0 %1902
        %v1905 = vsel %vm580, %v1901, 0
        %v1908 = vsel %vm580, %v1903, 0
        %1910 = vmatprep.subr.bf16.mxu0 0
        %1911 = vmatpush1.bf16.xpose.msra.mxu0 %v1908
        %1912 = vmatprep.subr.bf16.mxu0 0
        %1913 = vmatpush1.bf16.xpose.msra.mxu0 0
        %1914 = vmatprep.subr.bf16.mxu0 0
        %1915 = vmatpush1.bf16.xpose.msra.mxu0 0
        %1916 = vmatprep.subr.bf16.mxu0 0
        %1917 = vmatpush1.bf16.xpose.msra.mxu0 0
        %1918 = vmatprep.subr.bf16.mxu0 0
        %1919 = vmatpush1.bf16.xpose.msra.mxu0 0
        %1920 = vmatprep.subr.bf16.mxu0 0
        %1921 = vmatpush1.bf16.xpose.msra.mxu0 0
        %1922 = vmatprep.subr.bf16.mxu0 0
        %1923 = vmatpush1.bf16.xpose.msra.mxu0 0
        %1924 = vmatprep.subr.bf16.mxu0 0
        %1925 = vmatpush1.bf16.xpose.msra.mxu0 0
        %1926 = vmatprep.subr.bf16.mxu0 0
        %1927 = vmatpush1.bf16.xpose.msra.mxu0 0
        %1928 = vmatprep.subr.bf16.mxu0 0
        %1929 = vmatpush1.bf16.xpose.msra.mxu0 0
        %1930 = vmatprep.subr.bf16.mxu0 0
        %1931 = vmatpush1.bf16.xpose.msra.mxu0 0
        %1932 = vmatprep.subr.bf16.mxu0 0
        %1933 = vmatpush1.bf16.xpose.msra.mxu0 0
        %1934 = vmatprep.subr.bf16.mxu0 0
        %1935 = vmatpush1.bf16.xpose.msra.mxu0 0
        %1936 = vmatprep.subr.bf16.mxu0 0
        %1937 = vmatpush1.bf16.xpose.msra.mxu0 0
        %1938 = vmatprep.subr.bf16.mxu0 0
        %1939 = vmatpush1.bf16.xpose.msra.mxu0 0
        %1940 = vmatprep.subr.bf16.mxu0 0
        %1941 = vmatpush1.bf16.xpose.msra.mxu0 0
        %1942 = vmatprep.mubr.bf16.mxu0 0
        %1943 = vmatmul.mubr.bf16.gmra.mrb[0].mxu0 %v1905
        %v1944 = vpop.f32.mrb[0].mxu0
        %v1945 = vadd.f32 0.0, %v1944
        %v1946 = vpop.f32.mrb[0].mxu0
        %v1947 = vpop.f32.mrb[0].mxu0
        %v1948 = vadd.f32 0.0, %v1947
        %v1949 = vpop.f32.mrb[0].mxu0
        %1950 = vdwg.mxu0
        %s1951 = scalar_lea.vmem [#allocation2], 128
        %v1952 = vld [vmem:[%s1951] sm:$0xff]
        %v1953 = vld [vmem:[%s1951 + $0x8] sm:$0xff]
        %v1954 = vld [vmem:[%s1951 + $0x10] sm:$0xff]
        %v1955 = vld [vmem:[%s1951 + $0x18] sm:$0xff]
        %v1956 = vld [vmem:[%s1951 + $0x20] sm:$0xff]
        %v1957 = vld [vmem:[%s1951 + $0x28] sm:$0xff]
        %v1958 = vld [vmem:[%s1951 + $0x30] sm:$0xff]
        %v1959 = vld [vmem:[%s1951 + $0x38] sm:$0xff]
        %v1960 = vadd.f32 %v1792, %v1952
        %v1961 = vadd.f32 %v1795, %v1953
        %v1962 = vadd.f32 %v1843, %v1954
        %v1963 = vadd.f32 %v1846, %v1955
        %v1964 = vadd.f32 %v1894, %v1956
        %v1965 = vadd.f32 %v1897, %v1957
        %v1966 = vadd.f32 %v1945, %v1958
        %v1967 = vadd.f32 %v1948, %v1959
        %v1968 = vsel %vm794, %v1960, -inf
        %1969 = vmax.xlane.f32.xlu0 %v1968
        %v1970 = vpop.xlane.xlu0 %1969
        %v1971 = vsel %vm794, %v1961, -inf
        %1972 = vmax.xlane.f32.xlu0 %v1971
        %v1973 = vpop.xlane.xlu0 %1972
        %v1974 = vsel %vm794, %v1962, -inf
        %1975 = vmax.xlane.f32.xlu0 %v1974
        %v1976 = vpop.xlane.xlu0 %1975
        %v1977 = vsel %vm794, %v1963, -inf
        %1978 = vmax.xlane.f32.xlu0 %v1977
        %v1979 = vpop.xlane.xlu0 %1978
        %v1980 = vsel %vm794, %v1964, -inf
        %1981 = vmax.xlane.f32.xlu0 %v1980
        %v1982 = vpop.xlane.xlu0 %1981
        %v1983 = vsel %vm794, %v1965, -inf
        %1984 = vmax.xlane.f32.xlu0 %v1983
        %v1985 = vpop.xlane.xlu0 %1984
        %v1986 = vsel %vm794, %v1966, -inf
        %1987 = vmax.xlane.f32.xlu0 %v1986
        %v1988 = vpop.xlane.xlu0 %1987
        %v1989 = vsel %vm794, %v1967, -inf
        %1990 = vmax.xlane.f32.xlu0 %v1989
        %v1991 = vpop.xlane.xlu0 %1990
        %v1992 = vsub.f32 %v1960, %v1970
        %v1993 = vsub.f32 %v1961, %v1973
        %v1994 = vsub.f32 %v1962, %v1976
        %v1995 = vsub.f32 %v1963, %v1979
        %v1996 = vsub.f32 %v1964, %v1982
        %v1997 = vsub.f32 %v1965, %v1985
        %v1998 = vsub.f32 %v1966, %v1988
        %v1999 = vsub.f32 %v1967, %v1991
        %v2000 = vmul.f32 %v1992, 1.442695
        %v2001 = vpow.pop %v2000
        %v2002 = vmul.f32 %v1993, 1.442695
        %v2003 = vpow.pop %v2002
        %v2004 = vmul.f32 %v1994, 1.442695
        %v2005 = vpow.pop %v2004
        %v2006 = vmul.f32 %v1995, 1.442695
        %v2007 = vpow.pop %v2006
        %v2008 = vmul.f32 %v1996, 1.442695
        %v2009 = vpow.pop %v2008
        %v2010 = vmul.f32 %v1997, 1.442695
        %v2011 = vpow.pop %v2010
        %v2012 = vmul.f32 %v1998, 1.442695
        %v2013 = vpow.pop %v2012
        %v2014 = vmul.f32 %v1999, 1.442695
        %v2015 = vpow.pop %v2014
        %v2016 = vsel %vm794, %v2001, 0.0
        %2017 = vadd.xlane.f32.xlu0 %v2016
        %v2018 = vpop.xlane.xlu0 %2017
        %v2019 = vsel %vm794, %v2003, 0.0
        %2020 = vadd.xlane.f32.xlu0 %v2019
        %v2021 = vpop.xlane.xlu0 %2020
        %v2022 = vsel %vm794, %v2005, 0.0
        %2023 = vadd.xlane.f32.xlu0 %v2022
        %v2024 = vpop.xlane.xlu0 %2023
        %v2025 = vsel %vm794, %v2007, 0.0
        %2026 = vadd.xlane.f32.xlu0 %v2025
        %v2027 = vpop.xlane.xlu0 %2026
        %v2028 = vsel %vm794, %v2009, 0.0
        %2029 = vadd.xlane.f32.xlu0 %v2028
        %v2030 = vpop.xlane.xlu0 %2029
        %v2031 = vsel %vm794, %v2011, 0.0
        %2032 = vadd.xlane.f32.xlu0 %v2031
        %v2033 = vpop.xlane.xlu0 %2032
        %v2034 = vsel %vm794, %v2013, 0.0
        %2035 = vadd.xlane.f32.xlu0 %v2034
        %v2036 = vpop.xlane.xlu0 %2035
        %v2037 = vsel %vm794, %v2015, 0.0
        %2038 = vadd.xlane.f32.xlu0 %v2037
        %v2039 = vpop.xlane.xlu0 %2038
        %v2040 = vpack.c.bf16 %v2003, %v2001
        %v2041 = vpack.c.bf16 %v2007, %v2005
        %v2042 = vpack.c.bf16 %v2011, %v2009
        %v2043 = vpack.c.bf16 %v2015, %v2013
        %2044 = vrot.lane.b32.xlu0 %v573, 48
        %v2045 = vpop.permute.xlu0 %2044
        %v2048 = vsel %vm794, %v2040, 0
        %2050 = vmatprep.subr.bf16.mxu0 0
        %2051 = vmatpush1.bf16.msra.mxu0 %v2045
        %2052 = vmatprep.subr.bf16.mxu0 0
        %2053 = vmatpush1.bf16.msra.mxu0 0
        %2054 = vmatprep.subr.bf16.mxu0 0
        %2055 = vmatpush1.bf16.msra.mxu0 0
        %2056 = vmatprep.subr.bf16.mxu0 0
        %2057 = vmatpush1.bf16.msra.mxu0 0
        %2058 = vmatprep.subr.bf16.mxu0 0
        %2059 = vmatpush1.bf16.msra.mxu0 0
        %2060 = vmatprep.subr.bf16.mxu0 0
        %2061 = vmatpush1.bf16.msra.mxu0 0
        %2062 = vmatprep.subr.bf16.mxu0 0
        %2063 = vmatpush1.bf16.msra.mxu0 0
        %2064 = vmatprep.subr.bf16.mxu0 0
        %2065 = vmatpush1.bf16.msra.mxu0 0
        %2066 = vmatprep.subr.bf16.mxu0 0
        %2067 = vmatpush1.bf16.msra.mxu0 0
        %2068 = vmatprep.subr.bf16.mxu0 0
        %2069 = vmatpush1.bf16.msra.mxu0 0
        %2070 = vmatprep.subr.bf16.mxu0 0
        %2071 = vmatpush1.bf16.msra.mxu0 0
        %2072 = vmatprep.subr.bf16.mxu0 0
        %2073 = vmatpush1.bf16.msra.mxu0 0
        %2074 = vmatprep.subr.bf16.mxu0 0
        %2075 = vmatpush1.bf16.msra.mxu0 0
        %2076 = vmatprep.subr.bf16.mxu0 0
        %2077 = vmatpush1.bf16.msra.mxu0 0
        %2078 = vmatprep.subr.bf16.mxu0 0
        %2079 = vmatpush1.bf16.msra.mxu0 0
        %2080 = vmatprep.subr.bf16.mxu0 0
        %2081 = vmatpush1.bf16.msra.mxu0 0
        %2082 = vmatprep.mubr.bf16.mxu0 0
        %2083 = vmatmul.mubr.bf16.gmra.mrb[0].mxu0 %v2048
        %v2084 = vpop.f32.mrb[0].mxu0
        %v2085 = vadd.f32 0.0, %v2084
        %v2086 = vpop.f32.mrb[0].mxu0
        %v2087 = vpop.f32.mrb[0].mxu0
        %v2088 = vadd.f32 0.0, %v2087
        %v2089 = vpop.f32.mrb[0].mxu0
        %2090 = vdwg.mxu0
        %2091 = vrot.lane.b32.xlu0 %v574, 48
        %v2092 = vpop.permute.xlu0 %2091
        %v2095 = vsel %vm794, %v2041, 0
        %2097 = vmatprep.subr.bf16.mxu0 0
        %2098 = vmatpush1.bf16.msra.mxu0 %v2092
        %2099 = vmatprep.subr.bf16.mxu0 0
        %2100 = vmatpush1.bf16.msra.mxu0 0
        %2101 = vmatprep.subr.bf16.mxu0 0
        %2102 = vmatpush1.bf16.msra.mxu0 0
        %2103 = vmatprep.subr.bf16.mxu0 0
        %2104 = vmatpush1.bf16.msra.mxu0 0
        %2105 = vmatprep.subr.bf16.mxu0 0
        %2106 = vmatpush1.bf16.msra.mxu0 0
        %2107 = vmatprep.subr.bf16.mxu0 0
        %2108 = vmatpush1.bf16.msra.mxu0 0
        %2109 = vmatprep.subr.bf16.mxu0 0
        %2110 = vmatpush1.bf16.msra.mxu0 0
        %2111 = vmatprep.subr.bf16.mxu0 0
        %2112 = vmatpush1.bf16.msra.mxu0 0
        %2113 = vmatprep.subr.bf16.mxu0 0
        %2114 = vmatpush1.bf16.msra.mxu0 0
        %2115 = vmatprep.subr.bf16.mxu0 0
        %2116 = vmatpush1.bf16.msra.mxu0 0
        %2117 = vmatprep.subr.bf16.mxu0 0
        %2118 = vmatpush1.bf16.msra.mxu0 0
        %2119 = vmatprep.subr.bf16.mxu0 0
        %2120 = vmatpush1.bf16.msra.mxu0 0
        %2121 = vmatprep.subr.bf16.mxu0 0
        %2122 = vmatpush1.bf16.msra.mxu0 0
        %2123 = vmatprep.subr.bf16.mxu0 0
        %2124 = vmatpush1.bf16.msra.mxu0 0
        %2125 = vmatprep.subr.bf16.mxu0 0
        %2126 = vmatpush1.bf16.msra.mxu0 0
        %2127 = vmatprep.subr.bf16.mxu0 0
        %2128 = vmatpush1.bf16.msra.mxu0 0
        %2129 = vmatprep.mubr.bf16.mxu0 0
        %2130 = vmatmul.mubr.bf16.gmra.mrb[0].mxu0 %v2095
        %v2131 = vpop.f32.mrb[0].mxu0
        %v2132 = vadd.f32 0.0, %v2131
        %v2133 = vpop.f32.mrb[0].mxu0
        %v2134 = vpop.f32.mrb[0].mxu0
        %v2135 = vadd.f32 0.0, %v2134
        %v2136 = vpop.f32.mrb[0].mxu0
        %2137 = vdwg.mxu0
        %2138 = vrot.lane.b32.xlu0 %v575, 48
        %v2139 = vpop.permute.xlu0 %2138
        %v2142 = vsel %vm794, %v2042, 0
        %2144 = vmatprep.subr.bf16.mxu0 0
        %2145 = vmatpush1.bf16.msra.mxu0 %v2139
        %2146 = vmatprep.subr.bf16.mxu0 0
        %2147 = vmatpush1.bf16.msra.mxu0 0
        %2148 = vmatprep.subr.bf16.mxu0 0
        %2149 = vmatpush1.bf16.msra.mxu0 0
        %2150 = vmatprep.subr.bf16.mxu0 0
        %2151 = vmatpush1.bf16.msra.mxu0 0
        %2152 = vmatprep.subr.bf16.mxu0 0
        %2153 = vmatpush1.bf16.msra.mxu0 0
        %2154 = vmatprep.subr.bf16.mxu0 0
        %2155 = vmatpush1.bf16.msra.mxu0 0
        %2156 = vmatprep.subr.bf16.mxu0 0
        %2157 = vmatpush1.bf16.msra.mxu0 0
        %2158 = vmatprep.subr.bf16.mxu0 0
        %2159 = vmatpush1.bf16.msra.mxu0 0
        %2160 = vmatprep.subr.bf16.mxu0 0
        %2161 = vmatpush1.bf16.msra.mxu0 0
        %2162 = vmatprep.subr.bf16.mxu0 0
        %2163 = vmatpush1.bf16.msra.mxu0 0
        %2164 = vmatprep.subr.bf16.mxu0 0
        %2165 = vmatpush1.bf16.msra.mxu0 0
        %2166 = vmatprep.subr.bf16.mxu0 0
        %2167 = vmatpush1.bf16.msra.mxu0 0
        %2168 = vmatprep.subr.bf16.mxu0 0
        %2169 = vmatpush1.bf16.msra.mxu0 0
        %2170 = vmatprep.subr.bf16.mxu0 0
        %2171 = vmatpush1.bf16.msra.mxu0 0
        %2172 = vmatprep.subr.bf16.mxu0 0
        %2173 = vmatpush1.bf16.msra.mxu0 0
        %2174 = vmatprep.subr.bf16.mxu0 0
        %2175 = vmatpush1.bf16.msra.mxu0 0
        %2176 = vmatprep.mubr.bf16.mxu0 0
        %2177 = vmatmul.mubr.bf16.gmra.mrb[0].mxu0 %v2142
        %v2178 = vpop.f32.mrb[0].mxu0
        %v2179 = vadd.f32 0.0, %v2178
        %v2180 = vpop.f32.mrb[0].mxu0
        %v2181 = vpop.f32.mrb[0].mxu0
        %v2182 = vadd.f32 0.0, %v2181
        %v2183 = vpop.f32.mrb[0].mxu0
        %2184 = vdwg.mxu0
        %2185 = vrot.lane.b32.xlu0 %v576, 48
        %v2186 = vpop.permute.xlu0 %2185
        %v2189 = vsel %vm794, %v2043, 0
        %2191 = vmatprep.subr.bf16.mxu0 0
        %2192 = vmatpush1.bf16.msra.mxu0 %v2186
        %2193 = vmatprep.subr.bf16.mxu0 0
        %2194 = vmatpush1.bf16.msra.mxu0 0
        %2195 = vmatprep.subr.bf16.mxu0 0
        %2196 = vmatpush1.bf16.msra.mxu0 0
        %2197 = vmatprep.subr.bf16.mxu0 0
        %2198 = vmatpush1.bf16.msra.mxu0 0
        %2199 = vmatprep.subr.bf16.mxu0 0
        %2200 = vmatpush1.bf16.msra.mxu0 0
        %2201 = vmatprep.subr.bf16.mxu0 0
        %2202 = vmatpush1.bf16.msra.mxu0 0
        %2203 = vmatprep.subr.bf16.mxu0 0
        %2204 = vmatpush1.bf16.msra.mxu0 0
        %2205 = vmatprep.subr.bf16.mxu0 0
        %2206 = vmatpush1.bf16.msra.mxu0 0
        %2207 = vmatprep.subr.bf16.mxu0 0
        %2208 = vmatpush1.bf16.msra.mxu0 0
        %2209 = vmatprep.subr.bf16.mxu0 0
        %2210 = vmatpush1.bf16.msra.mxu0 0
        %2211 = vmatprep.subr.bf16.mxu0 0
        %2212 = vmatpush1.bf16.msra.mxu0 0
        %2213 = vmatprep.subr.bf16.mxu0 0
        %2214 = vmatpush1.bf16.msra.mxu0 0
        %2215 = vmatprep.subr.bf16.mxu0 0
        %2216 = vmatpush1.bf16.msra.mxu0 0
        %2217 = vmatprep.subr.bf16.mxu0 0
        %2218 = vmatpush1.bf16.msra.mxu0 0
        %2219 = vmatprep.subr.bf16.mxu0 0
        %2220 = vmatpush1.bf16.msra.mxu0 0
        %2221 = vmatprep.subr.bf16.mxu0 0
        %2222 = vmatpush1.bf16.msra.mxu0 0
        %2223 = vmatprep.mubr.bf16.mxu0 0
        %2224 = vmatmul.mubr.bf16.gmra.mrb[0].mxu0 %v2189
        %v2225 = vpop.f32.mrb[0].mxu0
        %v2226 = vadd.f32 0.0, %v2225
        %v2227 = vpop.f32.mrb[0].mxu0
        %v2228 = vpop.f32.mrb[0].mxu0
        %v2229 = vadd.f32 0.0, %v2228
        %v2230 = vpop.f32.mrb[0].mxu0
        %2231 = vdwg.mxu0
        %v2232 = vrcp.pop %v2018
        %v2233 = vrcp.pop %v2021
        %v2234 = vrcp.pop %v2024
        %v2235 = vrcp.pop %v2027
        %v2236 = vrcp.pop %v2030
        %v2237 = vrcp.pop %v2033
        %v2238 = vrcp.pop %v2036
        %v2239 = vrcp.pop %v2039
        %v2240 = vmul.f32 %v2085, %v2232
        %v2241 = vmul.f32 %v2088, %v2233
        %v2242 = vmul.f32 %v2132, %v2234
        %v2243 = vmul.f32 %v2135, %v2235
        %v2244 = vmul.f32 %v2179, %v2236
        %v2245 = vmul.f32 %v2182, %v2237
        %v2246 = vmul.f32 %v2226, %v2238
        %v2247 = vmul.f32 %v2229, %v2239
        %v2248 = vpack.c.bf16 %v2241, %v2240
        %v2249 = vpack.c.bf16 %v2243, %v2242
        %v2250 = vpack.c.bf16 %v2245, %v2244
        %v2251 = vpack.c.bf16 %v2247, %v2246
        %v2252 = vld [vmem:[%s5 + $0x8] sm:$0xf]
        %v2254 = vsel %vm580, %v2248, 0
        %v2257 = vsel %vm580, %v2249, 0
        %v2260 = vsel %vm580, %v2250, 0
        %v2263 = vsel %vm580, %v2251, 0
        %v2266 = vsel %vm1598, %v2252, 0
        %2268 = vmatprep.subr.bf16.mxu0 0
        %2269 = vmatpush1.bf16.msra.mxu0 %v2266
        %2270 = vmatprep.subr.bf16.mxu0 0
        %2271 = vmatpush1.bf16.msra.mxu0 0
        %2272 = vmatprep.subr.bf16.mxu0 0
        %2273 = vmatpush1.bf16.msra.mxu0 0
        %2274 = vmatprep.subr.bf16.mxu0 0
        %2275 = vmatpush1.bf16.msra.mxu0 0
        %2276 = vmatprep.subr.bf16.mxu0 0
        %2277 = vmatpush1.bf16.msra.mxu0 0
        %2278 = vmatprep.subr.bf16.mxu0 0
        %2279 = vmatpush1.bf16.msra.mxu0 0
        %2280 = vmatprep.subr.bf16.mxu0 0
        %2281 = vmatpush1.bf16.msra.mxu0 0
        %2282 = vmatprep.subr.bf16.mxu0 0
        %2283 = vmatpush1.bf16.msra.mxu0 0
        %2284 = vmatprep.subr.bf16.mxu0 0
        %2285 = vmatpush1.bf16.msra.mxu0 0
        %2286 = vmatprep.subr.bf16.mxu0 0
        %2287 = vmatpush1.bf16.msra.mxu0 0
        %2288 = vmatprep.subr.bf16.mxu0 0
        %2289 = vmatpush1.bf16.msra.mxu0 0
        %2290 = vmatprep.subr.bf16.mxu0 0
        %2291 = vmatpush1.bf16.msra.mxu0 0
        %2292 = vmatprep.subr.bf16.mxu0 0
        %2293 = vmatpush1.bf16.msra.mxu0 0
        %2294 = vmatprep.subr.bf16.mxu0 0
        %2295 = vmatpush1.bf16.msra.mxu0 0
        %2296 = vmatprep.subr.bf16.mxu0 0
        %2297 = vmatpush1.bf16.msra.mxu0 0
        %2298 = vmatprep.subr.bf16.mxu0 0
        %2299 = vmatpush1.bf16.msra.mxu0 0
        %2300 = vmatprep.mubr.bf16.mxu0 0
        %2301 = vmatmul.mubr.bf16.gmra.mrb[0].mxu0 %v2254
        %v2302 = vpop.f32.mrb[0].mxu0
        %v2303 = vadd.f32 0.0, %v2302
        %v2304 = vpop.f32.mrb[0].mxu0
        %v2305 = vpop.f32.mrb[0].mxu0
        %v2306 = vadd.f32 0.0, %v2305
        %v2307 = vpop.f32.mrb[0].mxu0
        %2308 = vmatprep.mubr.bf16.mxu0 0
        %2309 = vmatmul.mubr.bf16.gmra.mrb[0].mxu0 %v2257
        %v2310 = vpop.f32.mrb[0].mxu0
        %v2311 = vadd.f32 0.0, %v2310
        %v2312 = vpop.f32.mrb[0].mxu0
        %v2313 = vpop.f32.mrb[0].mxu0
        %v2314 = vadd.f32 0.0, %v2313
        %v2315 = vpop.f32.mrb[0].mxu0
        %2316 = vmatprep.mubr.bf16.mxu0 0
        %2317 = vmatmul.mubr.bf16.gmra.mrb[0].mxu0 %v2260
        %v2318 = vpop.f32.mrb[0].mxu0
        %v2319 = vadd.f32 0.0, %v2318
        %v2320 = vpop.f32.mrb[0].mxu0
        %v2321 = vpop.f32.mrb[0].mxu0
        %v2322 = vadd.f32 0.0, %v2321
        %v2323 = vpop.f32.mrb[0].mxu0
        %2324 = vmatprep.mubr.bf16.mxu0 0
        %2325 = vmatmul.mubr.bf16.gmra.mrb[0].mxu0 %v2263
        %v2326 = vpop.f32.mrb[0].mxu0
        %v2327 = vadd.f32 0.0, %v2326
        %v2328 = vpop.f32.mrb[0].mxu0
        %v2329 = vpop.f32.mrb[0].mxu0
        %v2330 = vadd.f32 0.0, %v2329
        %v2331 = vpop.f32.mrb[0].mxu0
        %2332 = vdwg.mxu0
        %v2333 = vadd.f32 %v1717, %v2303
        %v2334 = vadd.f32 %v1720, %v2306
        %v2335 = vadd.f32 %v1725, %v2311
        %v2336 = vadd.f32 %v1728, %v2314
        %v2337 = vadd.f32 %v1733, %v2319
        %v2338 = vadd.f32 %v1736, %v2322
        %v2339 = vadd.f32 %v1741, %v2327
        %v2340 = vadd.f32 %v1744, %v2330
        %2341 = vrot.lane.b32.xlu0 %v573, 104
        %v2342 = vpop.permute.xlu0 %2341
        %2343 = vrot.lane.b32.xlu0 %v573, 72
        %v2344 = vpop.permute.xlu0 %2343
        %v2346 = vsel %vm580, %v2342, 0
        %v2349 = vsel %vm580, %v2344, 0
        %2351 = vmatprep.subr.bf16.mxu0 0
        %2352 = vmatpush1.bf16.xpose.msra.mxu0 %v2349
        %2353 = vmatprep.subr.bf16.mxu0 0
        %2354 = vmatpush1.bf16.xpose.msra.mxu0 0
        %2355 = vmatprep.subr.bf16.mxu0 0
        %2356 = vmatpush1.bf16.xpose.msra.mxu0 0
        %2357 = vmatprep.subr.bf16.mxu0 0
        %2358 = vmatpush1.bf16.xpose.msra.mxu0 0
        %2359 = vmatprep.subr.bf16.mxu0 0
        %2360 = vmatpush1.bf16.xpose.msra.mxu0 0
        %2361 = vmatprep.subr.bf16.mxu0 0
        %2362 = vmatpush1.bf16.xpose.msra.mxu0 0
        %2363 = vmatprep.subr.bf16.mxu0 0
        %2364 = vmatpush1.bf16.xpose.msra.mxu0 0
        %2365 = vmatprep.subr.bf16.mxu0 0
        %2366 = vmatpush1.bf16.xpose.msra.mxu0 0
        %2367 = vmatprep.subr.bf16.mxu0 0
        %2368 = vmatpush1.bf16.xpose.msra.mxu0 0
        %2369 = vmatprep.subr.bf16.mxu0 0
        %2370 = vmatpush1.bf16.xpose.msra.mxu0 0
        %2371 = vmatprep.subr.bf16.mxu0 0
        %2372 = vmatpush1.bf16.xpose.msra.mxu0 0
        %2373 = vmatprep.subr.bf16.mxu0 0
        %2374 = vmatpush1.bf16.xpose.msra.mxu0 0
        %2375 = vmatprep.subr.bf16.mxu0 0
        %2376 = vmatpush1.bf16.xpose.msra.mxu0 0
        %2377 = vmatprep.subr.bf16.mxu0 0
        %2378 = vmatpush1.bf16.xpose.msra.mxu0 0
        %2379 = vmatprep.subr.bf16.mxu0 0
        %2380 = vmatpush1.bf16.xpose.msra.mxu0 0
        %2381 = vmatprep.subr.bf16.mxu0 0
        %2382 = vmatpush1.bf16.xpose.msra.mxu0 0
        %2383 = vmatprep.mubr.bf16.mxu0 0
        %2384 = vmatmul.mubr.bf16.gmra.mrb[0].mxu0 %v2346
        %v2385 = vpop.f32.mrb[0].mxu0
        %v2386 = vadd.f32 0.0, %v2385
        %v2387 = vpop.f32.mrb[0].mxu0
        %v2388 = vpop.f32.mrb[0].mxu0
        %v2389 = vadd.f32 0.0, %v2388
        %v2390 = vpop.f32.mrb[0].mxu0
        %2391 = vdwg.mxu0
        %2392 = vrot.lane.b32.xlu0 %v574, 104
        %v2393 = vpop.permute.xlu0 %2392
        %2394 = vrot.lane.b32.xlu0 %v574, 72
        %v2395 = vpop.permute.xlu0 %2394
        %v2397 = vsel %vm580, %v2393, 0
        %v2400 = vsel %vm580, %v2395, 0
        %2402 = vmatprep.subr.bf16.mxu0 0
        %2403 = vmatpush1.bf16.xpose.msra.mxu0 %v2400
        %2404 = vmatprep.subr.bf16.mxu0 0
        %2405 = vmatpush1.bf16.xpose.msra.mxu0 0
        %2406 = vmatprep.subr.bf16.mxu0 0
        %2407 = vmatpush1.bf16.xpose.msra.mxu0 0
        %2408 = vmatprep.subr.bf16.mxu0 0
        %2409 = vmatpush1.bf16.xpose.msra.mxu0 0
        %2410 = vmatprep.subr.bf16.mxu0 0
        %2411 = vmatpush1.bf16.xpose.msra.mxu0 0
        %2412 = vmatprep.subr.bf16.mxu0 0
        %2413 = vmatpush1.bf16.xpose.msra.mxu0 0
        %2414 = vmatprep.subr.bf16.mxu0 0
        %2415 = vmatpush1.bf16.xpose.msra.mxu0 0
        %2416 = vmatprep.subr.bf16.mxu0 0
        %2417 = vmatpush1.bf16.xpose.msra.mxu0 0
        %2418 = vmatprep.subr.bf16.mxu0 0
        %2419 = vmatpush1.bf16.xpose.msra.mxu0 0
        %2420 = vmatprep.subr.bf16.mxu0 0
        %2421 = vmatpush1.bf16.xpose.msra.mxu0 0
        %2422 = vmatprep.subr.bf16.mxu0 0
        %2423 = vmatpush1.bf16.xpose.msra.mxu0 0
        %2424 = vmatprep.subr.bf16.mxu0 0
        %2425 = vmatpush1.bf16.xpose.msra.mxu0 0
        %2426 = vmatprep.subr.bf16.mxu0 0
        %2427 = vmatpush1.bf16.xpose.msra.mxu0 0
        %2428 = vmatprep.subr.bf16.mxu0 0
        %2429 = vmatpush1.bf16.xpose.msra.mxu0 0
        %2430 = vmatprep.subr.bf16.mxu0 0
        %2431 = vmatpush1.bf16.xpose.msra.mxu0 0
        %2432 = vmatprep.subr.bf16.mxu0 0
        %2433 = vmatpush1.bf16.xpose.msra.mxu0 0
        %2434 = vmatprep.mubr.bf16.mxu0 0
        %2435 = vmatmul.mubr.bf16.gmra.mrb[0].mxu0 %v2397
        %v2436 = vpop.f32.mrb[0].mxu0
        %v2437 = vadd.f32 0.0, %v2436
        %v2438 = vpop.f32.mrb[0].mxu0
        %v2439 = vpop.f32.mrb[0].mxu0
        %v2440 = vadd.f32 0.0, %v2439
        %v2441 = vpop.f32.mrb[0].mxu0
        %2442 = vdwg.mxu0
        %2443 = vrot.lane.b32.xlu0 %v575, 104
        %v2444 = vpop.permute.xlu0 %2443
        %2445 = vrot.lane.b32.xlu0 %v575, 72
        %v2446 = vpop.permute.xlu0 %2445
        %v2448 = vsel %vm580, %v2444, 0
        %v2451 = vsel %vm580, %v2446, 0
        %2453 = vmatprep.subr.bf16.mxu0 0
        %2454 = vmatpush1.bf16.xpose.msra.mxu0 %v2451
        %2455 = vmatprep.subr.bf16.mxu0 0
        %2456 = vmatpush1.bf16.xpose.msra.mxu0 0
        %2457 = vmatprep.subr.bf16.mxu0 0
        %2458 = vmatpush1.bf16.xpose.msra.mxu0 0
        %2459 = vmatprep.subr.bf16.mxu0 0
        %2460 = vmatpush1.bf16.xpose.msra.mxu0 0
        %2461 = vmatprep.subr.bf16.mxu0 0
        %2462 = vmatpush1.bf16.xpose.msra.mxu0 0
        %2463 = vmatprep.subr.bf16.mxu0 0
        %2464 = vmatpush1.bf16.xpose.msra.mxu0 0
        %2465 = vmatprep.subr.bf16.mxu0 0
        %2466 = vmatpush1.bf16.xpose.msra.mxu0 0
        %2467 = vmatprep.subr.bf16.mxu0 0
        %2468 = vmatpush1.bf16.xpose.msra.mxu0 0
        %2469 = vmatprep.subr.bf16.mxu0 0
        %2470 = vmatpush1.bf16.xpose.msra.mxu0 0
        %2471 = vmatprep.subr.bf16.mxu0 0
        %2472 = vmatpush1.bf16.xpose.msra.mxu0 0
        %2473 = vmatprep.subr.bf16.mxu0 0
        %2474 = vmatpush1.bf16.xpose.msra.mxu0 0
        %2475 = vmatprep.subr.bf16.mxu0 0
        %2476 = vmatpush1.bf16.xpose.msra.mxu0 0
        %2477 = vmatprep.subr.bf16.mxu0 0
        %2478 = vmatpush1.bf16.xpose.msra.mxu0 0
        %2479 = vmatprep.subr.bf16.mxu0 0
        %2480 = vmatpush1.bf16.xpose.msra.mxu0 0
        %2481 = vmatprep.subr.bf16.mxu0 0
        %2482 = vmatpush1.bf16.xpose.msra.mxu0 0
        %2483 = vmatprep.subr.bf16.mxu0 0
        %2484 = vmatpush1.bf16.xpose.msra.mxu0 0
        %2485 = vmatprep.mubr.bf16.mxu0 0
        %2486 = vmatmul.mubr.bf16.gmra.mrb[0].mxu0 %v2448
        %v2487 = vpop.f32.mrb[0].mxu0
        %v2488 = vadd.f32 0.0, %v2487
        %v2489 = vpop.f32.mrb[0].mxu0
        %v2490 = vpop.f32.mrb[0].mxu0
        %v2491 = vadd.f32 0.0, %v2490
        %v2492 = vpop.f32.mrb[0].mxu0
        %2493 = vdwg.mxu0
        %2494 = vrot.lane.b32.xlu0 %v576, 104
        %v2495 = vpop.permute.xlu0 %2494
        %2496 = vrot.lane.b32.xlu0 %v576, 72
        %v2497 = vpop.permute.xlu0 %2496
        %v2499 = vsel %vm580, %v2495, 0
        %v2502 = vsel %vm580, %v2497, 0
        %2504 = vmatprep.subr.bf16.mxu0 0
        %2505 = vmatpush1.bf16.xpose.msra.mxu0 %v2502
        %2506 = vmatprep.subr.bf16.mxu0 0
        %2507 = vmatpush1.bf16.xpose.msra.mxu0 0
        %2508 = vmatprep.subr.bf16.mxu0 0
        %2509 = vmatpush1.bf16.xpose.msra.mxu0 0
        %2510 = vmatprep.subr.bf16.mxu0 0
        %2511 = vmatpush1.bf16.xpose.msra.mxu0 0
        %2512 = vmatprep.subr.bf16.mxu0 0
        %2513 = vmatpush1.bf16.xpose.msra.mxu0 0
        %2514 = vmatprep.subr.bf16.mxu0 0
        %2515 = vmatpush1.bf16.xpose.msra.mxu0 0
        %2516 = vmatprep.subr.bf16.mxu0 0
        %2517 = vmatpush1.bf16.xpose.msra.mxu0 0
        %2518 = vmatprep.subr.bf16.mxu0 0
        %2519 = vmatpush1.bf16.xpose.msra.mxu0 0
        %2520 = vmatprep.subr.bf16.mxu0 0
        %2521 = vmatpush1.bf16.xpose.msra.mxu0 0
        %2522 = vmatprep.subr.bf16.mxu0 0
        %2523 = vmatpush1.bf16.xpose.msra.mxu0 0
        %2524 = vmatprep.subr.bf16.mxu0 0
        %2525 = vmatpush1.bf16.xpose.msra.mxu0 0
        %2526 = vmatprep.subr.bf16.mxu0 0
        %2527 = vmatpush1.bf16.xpose.msra.mxu0 0
        %2528 = vmatprep.subr.bf16.mxu0 0
        %2529 = vmatpush1.bf16.xpose.msra.mxu0 0
        %2530 = vmatprep.subr.bf16.mxu0 0
        %2531 = vmatpush1.bf16.xpose.msra.mxu0 0
        %2532 = vmatprep.subr.bf16.mxu0 0
        %2533 = vmatpush1.bf16.xpose.msra.mxu0 0
        %2534 = vmatprep.subr.bf16.mxu0 0
        %2535 = vmatpush1.bf16.xpose.msra.mxu0 0
        %2536 = vmatprep.mubr.bf16.mxu0 0
        %2537 = vmatmul.mubr.bf16.gmra.mrb[0].mxu0 %v2499
        %v2538 = vpop.f32.mrb[0].mxu0
        %v2539 = vadd.f32 0.0, %v2538
        %v2540 = vpop.f32.mrb[0].mxu0
        %v2541 = vpop.f32.mrb[0].mxu0
        %v2542 = vadd.f32 0.0, %v2541
        %v2543 = vpop.f32.mrb[0].mxu0
        %2544 = vdwg.mxu0
        %s2545 = scalar_lea.vmem [#allocation2], 192
        %v2546 = vld [vmem:[%s2545] sm:$0xff]
        %v2547 = vld [vmem:[%s2545 + $0x8] sm:$0xff]
        %v2548 = vld [vmem:[%s2545 + $0x10] sm:$0xff]
        %v2549 = vld [vmem:[%s2545 + $0x18] sm:$0xff]
        %v2550 = vld [vmem:[%s2545 + $0x20] sm:$0xff]
        %v2551 = vld [vmem:[%s2545 + $0x28] sm:$0xff]
        %v2552 = vld [vmem:[%s2545 + $0x30] sm:$0xff]
        %v2553 = vld [vmem:[%s2545 + $0x38] sm:$0xff]
        %v2554 = vadd.f32 %v2386, %v2546
        %v2555 = vadd.f32 %v2389, %v2547
        %v2556 = vadd.f32 %v2437, %v2548
        %v2557 = vadd.f32 %v2440, %v2549
        %v2558 = vadd.f32 %v2488, %v2550
        %v2559 = vadd.f32 %v2491, %v2551
        %v2560 = vadd.f32 %v2539, %v2552
        %v2561 = vadd.f32 %v2542, %v2553
        %v2562 = vsel %vm794, %v2554, -inf
        %2563 = vmax.xlane.f32.xlu0 %v2562
        %v2564 = vpop.xlane.xlu0 %2563
        %v2565 = vsel %vm794, %v2555, -inf
        %2566 = vmax.xlane.f32.xlu0 %v2565
        %v2567 = vpop.xlane.xlu0 %2566
        %v2568 = vsel %vm794, %v2556, -inf
        %2569 = vmax.xlane.f32.xlu0 %v2568
        %v2570 = vpop.xlane.xlu0 %2569
        %v2571 = vsel %vm794, %v2557, -inf
        %2572 = vmax.xlane.f32.xlu0 %v2571
        %v2573 = vpop.xlane.xlu0 %2572
        %v2574 = vsel %vm794, %v2558, -inf
        %2575 = vmax.xlane.f32.xlu0 %v2574
        %v2576 = vpop.xlane.xlu0 %2575
        %v2577 = vsel %vm794, %v2559, -inf
        %2578 = vmax.xlane.f32.xlu0 %v2577
        %v2579 = vpop.xlane.xlu0 %2578
        %v2580 = vsel %vm794, %v2560, -inf
        %2581 = vmax.xlane.f32.xlu0 %v2580
        %v2582 = vpop.xlane.xlu0 %2581
        %v2583 = vsel %vm794, %v2561, -inf
        %2584 = vmax.xlane.f32.xlu0 %v2583
        %v2585 = vpop.xlane.xlu0 %2584
        %v2586 = vsub.f32 %v2554, %v2564
        %v2587 = vsub.f32 %v2555, %v2567
        %v2588 = vsub.f32 %v2556, %v2570
        %v2589 = vsub.f32 %v2557, %v2573
        %v2590 = vsub.f32 %v2558, %v2576
        %v2591 = vsub.f32 %v2559, %v2579
        %v2592 = vsub.f32 %v2560, %v2582
        %v2593 = vsub.f32 %v2561, %v2585
        %v2594 = vmul.f32 %v2586, 1.442695
        %v2595 = vpow.pop %v2594
        %v2596 = vmul.f32 %v2587, 1.442695
        %v2597 = vpow.pop %v2596
        %v2598 = vmul.f32 %v2588, 1.442695
        %v2599 = vpow.pop %v2598
        %v2600 = vmul.f32 %v2589, 1.442695
        %v2601 = vpow.pop %v2600
        %v2602 = vmul.f32 %v2590, 1.442695
        %v2603 = vpow.pop %v2602
        %v2604 = vmul.f32 %v2591, 1.442695
        %v2605 = vpow.pop %v2604
        %v2606 = vmul.f32 %v2592, 1.442695
        %v2607 = vpow.pop %v2606
        %v2608 = vmul.f32 %v2593, 1.442695
        %v2609 = vpow.pop %v2608
        %v2610 = vsel %vm794, %v2595, 0.0
        %2611 = vadd.xlane.f32.xlu0 %v2610
        %v2612 = vpop.xlane.xlu0 %2611
        %v2613 = vsel %vm794, %v2597, 0.0
        %2614 = vadd.xlane.f32.xlu0 %v2613
        %v2615 = vpop.xlane.xlu0 %2614
        %v2616 = vsel %vm794, %v2599, 0.0
        %2617 = vadd.xlane.f32.xlu0 %v2616
        %v2618 = vpop.xlane.xlu0 %2617
        %v2619 = vsel %vm794, %v2601, 0.0
        %2620 = vadd.xlane.f32.xlu0 %v2619
        %v2621 = vpop.xlane.xlu0 %2620
        %v2622 = vsel %vm794, %v2603, 0.0
        %2623 = vadd.xlane.f32.xlu0 %v2622
        %v2624 = vpop.xlane.xlu0 %2623
        %v2625 = vsel %vm794, %v2605, 0.0
        %2626 = vadd.xlane.f32.xlu0 %v2625
        %v2627 = vpop.xlane.xlu0 %2626
        %v2628 = vsel %vm794, %v2607, 0.0
        %2629 = vadd.xlane.f32.xlu0 %v2628
        %v2630 = vpop.xlane.xlu0 %2629
        %v2631 = vsel %vm794, %v2609, 0.0
        %2632 = vadd.xlane.f32.xlu0 %v2631
        %v2633 = vpop.xlane.xlu0 %2632
        %v2634 = vpack.c.bf16 %v2597, %v2595
        %v2635 = vpack.c.bf16 %v2601, %v2599
        %v2636 = vpack.c.bf16 %v2605, %v2603
        %v2637 = vpack.c.bf16 %v2609, %v2607
        %2638 = vrot.lane.b32.xlu0 %v573, 40
        %v2639 = vpop.permute.xlu0 %2638
        %v2642 = vsel %vm794, %v2634, 0
        %2644 = vmatprep.subr.bf16.mxu0 0
        %2645 = vmatpush1.bf16.msra.mxu0 %v2639
        %2646 = vmatprep.subr.bf16.mxu0 0
        %2647 = vmatpush1.bf16.msra.mxu0 0
        %2648 = vmatprep.subr.bf16.mxu0 0
        %2649 = vmatpush1.bf16.msra.mxu0 0
        %2650 = vmatprep.subr.bf16.mxu0 0
        %2651 = vmatpush1.bf16.msra.mxu0 0
        %2652 = vmatprep.subr.bf16.mxu0 0
        %2653 = vmatpush1.bf16.msra.mxu0 0
        %2654 = vmatprep.subr.bf16.mxu0 0
        %2655 = vmatpush1.bf16.msra.mxu0 0
        %2656 = vmatprep.subr.bf16.mxu0 0
        %2657 = vmatpush1.bf16.msra.mxu0 0
        %2658 = vmatprep.subr.bf16.mxu0 0
        %2659 = vmatpush1.bf16.msra.mxu0 0
        %2660 = vmatprep.subr.bf16.mxu0 0
        %2661 = vmatpush1.bf16.msra.mxu0 0
        %2662 = vmatprep.subr.bf16.mxu0 0
        %2663 = vmatpush1.bf16.msra.mxu0 0
        %2664 = vmatprep.subr.bf16.mxu0 0
        %2665 = vmatpush1.bf16.msra.mxu0 0
        %2666 = vmatprep.subr.bf16.mxu0 0
        %2667 = vmatpush1.bf16.msra.mxu0 0
        %2668 = vmatprep.subr.bf16.mxu0 0
        %2669 = vmatpush1.bf16.msra.mxu0 0
        %2670 = vmatprep.subr.bf16.mxu0 0
        %2671 = vmatpush1.bf16.msra.mxu0 0
        %2672 = vmatprep.subr.bf16.mxu0 0
        %2673 = vmatpush1.bf16.msra.mxu0 0
        %2674 = vmatprep.subr.bf16.mxu0 0
        %2675 = vmatpush1.bf16.msra.mxu0 0
        %2676 = vmatprep.mubr.bf16.mxu0 0
        %2677 = vmatmul.mubr.bf16.gmra.mrb[0].mxu0 %v2642
        %v2678 = vpop.f32.mrb[0].mxu0
        %v2679 = vadd.f32 0.0, %v2678
        %v2680 = vpop.f32.mrb[0].mxu0
        %v2681 = vpop.f32.mrb[0].mxu0
        %v2682 = vadd.f32 0.0, %v2681
        %v2683 = vpop.f32.mrb[0].mxu0
        %2684 = vdwg.mxu0
        %2685 = vrot.lane.b32.xlu0 %v574, 40
        %v2686 = vpop.permute.xlu0 %2685
        %v2689 = vsel %vm794, %v2635, 0
        %2691 = vmatprep.subr.bf16.mxu0 0
        %2692 = vmatpush1.bf16.msra.mxu0 %v2686
        %2693 = vmatprep.subr.bf16.mxu0 0
        %2694 = vmatpush1.bf16.msra.mxu0 0
        %2695 = vmatprep.subr.bf16.mxu0 0
        %2696 = vmatpush1.bf16.msra.mxu0 0
        %2697 = vmatprep.subr.bf16.mxu0 0
        %2698 = vmatpush1.bf16.msra.mxu0 0
        %2699 = vmatprep.subr.bf16.mxu0 0
        %2700 = vmatpush1.bf16.msra.mxu0 0
        %2701 = vmatprep.subr.bf16.mxu0 0
        %2702 = vmatpush1.bf16.msra.mxu0 0
        %2703 = vmatprep.subr.bf16.mxu0 0
        %2704 = vmatpush1.bf16.msra.mxu0 0
        %2705 = vmatprep.subr.bf16.mxu0 0
        %2706 = vmatpush1.bf16.msra.mxu0 0
        %2707 = vmatprep.subr.bf16.mxu0 0
        %2708 = vmatpush1.bf16.msra.mxu0 0
        %2709 = vmatprep.subr.bf16.mxu0 0
        %2710 = vmatpush1.bf16.msra.mxu0 0
        %2711 = vmatprep.subr.bf16.mxu0 0
        %2712 = vmatpush1.bf16.msra.mxu0 0
        %2713 = vmatprep.subr.bf16.mxu0 0
        %2714 = vmatpush1.bf16.msra.mxu0 0
        %2715 = vmatprep.subr.bf16.mxu0 0
        %2716 = vmatpush1.bf16.msra.mxu0 0
        %2717 = vmatprep.subr.bf16.mxu0 0
        %2718 = vmatpush1.bf16.msra.mxu0 0
        %2719 = vmatprep.subr.bf16.mxu0 0
        %2720 = vmatpush1.bf16.msra.mxu0 0
        %2721 = vmatprep.subr.bf16.mxu0 0
        %2722 = vmatpush1.bf16.msra.mxu0 0
        %2723 = vmatprep.mubr.bf16.mxu0 0
        %2724 = vmatmul.mubr.bf16.gmra.mrb[0].mxu0 %v2689
        %v2725 = vpop.f32.mrb[0].mxu0
        %v2726 = vadd.f32 0.0, %v2725
        %v2727 = vpop.f32.mrb[0].mxu0
        %v2728 = vpop.f32.mrb[0].mxu0
        %v2729 = vadd.f32 0.0, %v2728
        %v2730 = vpop.f32.mrb[0].mxu0
        %2731 = vdwg.mxu0
        %2732 = vrot.lane.b32.xlu0 %v575, 40
        %v2733 = vpop.permute.xlu0 %2732
        %v2736 = vsel %vm794, %v2636, 0
        %2738 = vmatprep.subr.bf16.mxu0 0
        %2739 = vmatpush1.bf16.msra.mxu0 %v2733
        %2740 = vmatprep.subr.bf16.mxu0 0
        %2741 = vmatpush1.bf16.msra.mxu0 0
        %2742 = vmatprep.subr.bf16.mxu0 0
        %2743 = vmatpush1.bf16.msra.mxu0 0
        %2744 = vmatprep.subr.bf16.mxu0 0
        %2745 = vmatpush1.bf16.msra.mxu0 0
        %2746 = vmatprep.subr.bf16.mxu0 0
        %2747 = vmatpush1.bf16.msra.mxu0 0
        %2748 = vmatprep.subr.bf16.mxu0 0
        %2749 = vmatpush1.bf16.msra.mxu0 0
        %2750 = vmatprep.subr.bf16.mxu0 0
        %2751 = vmatpush1.bf16.msra.mxu0 0
        %2752 = vmatprep.subr.bf16.mxu0 0
        %2753 = vmatpush1.bf16.msra.mxu0 0
        %2754 = vmatprep.subr.bf16.mxu0 0
        %2755 = vmatpush1.bf16.msra.mxu0 0
        %2756 = vmatprep.subr.bf16.mxu0 0
        %2757 = vmatpush1.bf16.msra.mxu0 0
        %2758 = vmatprep.subr.bf16.mxu0 0
        %2759 = vmatpush1.bf16.msra.mxu0 0
        %2760 = vmatprep.subr.bf16.mxu0 0
        %2761 = vmatpush1.bf16.msra.mxu0 0
        %2762 = vmatprep.subr.bf16.mxu0 0
        %2763 = vmatpush1.bf16.msra.mxu0 0
        %2764 = vmatprep.subr.bf16.mxu0 0
        %2765 = vmatpush1.bf16.msra.mxu0 0
        %2766 = vmatprep.subr.bf16.mxu0 0
        %2767 = vmatpush1.bf16.msra.mxu0 0
        %2768 = vmatprep.subr.bf16.mxu0 0
        %2769 = vmatpush1.bf16.msra.mxu0 0
        %2770 = vmatprep.mubr.bf16.mxu0 0
        %2771 = vmatmul.mubr.bf16.gmra.mrb[0].mxu0 %v2736
        %v2772 = vpop.f32.mrb[0].mxu0
        %v2773 = vadd.f32 0.0, %v2772
        %v2774 = vpop.f32.mrb[0].mxu0
        %v2775 = vpop.f32.mrb[0].mxu0
        %v2776 = vadd.f32 0.0, %v2775
        %v2777 = vpop.f32.mrb[0].mxu0
        %2778 = vdwg.mxu0
        %2779 = vrot.lane.b32.xlu0 %v576, 40
        %v2780 = vpop.permute.xlu0 %2779
        %v2783 = vsel %vm794, %v2637, 0
        %2785 = vmatprep.subr.bf16.mxu0 0
        %2786 = vmatpush1.bf16.msra.mxu0 %v2780
        %2787 = vmatprep.subr.bf16.mxu0 0
        %2788 = vmatpush1.bf16.msra.mxu0 0
        %2789 = vmatprep.subr.bf16.mxu0 0
        %2790 = vmatpush1.bf16.msra.mxu0 0
        %2791 = vmatprep.subr.bf16.mxu0 0
        %2792 = vmatpush1.bf16.msra.mxu0 0
        %2793 = vmatprep.subr.bf16.mxu0 0
        %2794 = vmatpush1.bf16.msra.mxu0 0
        %2795 = vmatprep.subr.bf16.mxu0 0
        %2796 = vmatpush1.bf16.msra.mxu0 0
        %2797 = vmatprep.subr.bf16.mxu0 0
        %2798 = vmatpush1.bf16.msra.mxu0 0
        %2799 = vmatprep.subr.bf16.mxu0 0
        %2800 = vmatpush1.bf16.msra.mxu0 0
        %2801 = vmatprep.subr.bf16.mxu0 0
        %2802 = vmatpush1.bf16.msra.mxu0 0
        %2803 = vmatprep.subr.bf16.mxu0 0
        %2804 = vmatpush1.bf16.msra.mxu0 0
        %2805 = vmatprep.subr.bf16.mxu0 0
        %2806 = vmatpush1.bf16.msra.mxu0 0
        %2807 = vmatprep.subr.bf16.mxu0 0
        %2808 = vmatpush1.bf16.msra.mxu0 0
        %2809 = vmatprep.subr.bf16.mxu0 0
        %2810 = vmatpush1.bf16.msra.mxu0 0
        %2811 = vmatprep.subr.bf16.mxu0 0
        %2812 = vmatpush1.bf16.msra.mxu0 0
        %2813 = vmatprep.subr.bf16.mxu0 0
        %2814 = vmatpush1.bf16.msra.mxu0 0
        %2815 = vmatprep.subr.bf16.mxu0 0
        %2816 = vmatpush1.bf16.msra.mxu0 0
        %2817 = vmatprep.mubr.bf16.mxu0 0
        %2818 = vmatmul.mubr.bf16.gmra.mrb[0].mxu0 %v2783
        %v2819 = vpop.f32.mrb[0].mxu0
        %v2820 = vadd.f32 0.0, %v2819
        %v2821 = vpop.f32.mrb[0].mxu0
        %v2822 = vpop.f32.mrb[0].mxu0
        %v2823 = vadd.f32 0.0, %v2822
        %v2824 = vpop.f32.mrb[0].mxu0
        %2825 = vdwg.mxu0
        %v2826 = vrcp.pop %v2612
        %v2827 = vrcp.pop %v2615
        %v2828 = vrcp.pop %v2618
        %v2829 = vrcp.pop %v2621
        %v2830 = vrcp.pop %v2624
        %v2831 = vrcp.pop %v2627
        %v2832 = vrcp.pop %v2630
        %v2833 = vrcp.pop %v2633
        %v2834 = vmul.f32 %v2679, %v2826
        %v2835 = vmul.f32 %v2682, %v2827
        %v2836 = vmul.f32 %v2726, %v2828
        %v2837 = vmul.f32 %v2729, %v2829
        %v2838 = vmul.f32 %v2773, %v2830
        %v2839 = vmul.f32 %v2776, %v2831
        %v2840 = vmul.f32 %v2820, %v2832
        %v2841 = vmul.f32 %v2823, %v2833
        %v2842 = vpack.c.bf16 %v2835, %v2834
        %v2843 = vpack.c.bf16 %v2837, %v2836
        %v2844 = vpack.c.bf16 %v2839, %v2838
        %v2845 = vpack.c.bf16 %v2841, %v2840
        %v2846 = vld [vmem:[%s5 + $0xc] sm:$0xf]
        %v2848 = vsel %vm580, %v2842, 0
        %v2851 = vsel %vm580, %v2843, 0
        %v2854 = vsel %vm580, %v2844, 0
        %v2857 = vsel %vm580, %v2845, 0
        %v2860 = vsel %vm1598, %v2846, 0
        %2862 = vmatprep.subr.bf16.mxu0 0
        %2863 = vmatpush1.bf16.msra.mxu0 %v2860
        %2864 = vmatprep.subr.bf16.mxu0 0
        %2865 = vmatpush1.bf16.msra.mxu0 0
        %2866 = vmatprep.subr.bf16.mxu0 0
        %2867 = vmatpush1.bf16.msra.mxu0 0
        %2868 = vmatprep.subr.bf16.mxu0 0
        %2869 = vmatpush1.bf16.msra.mxu0 0
        %2870 = vmatprep.subr.bf16.mxu0 0
        %2871 = vmatpush1.bf16.msra.mxu0 0
        %2872 = vmatprep.subr.bf16.mxu0 0
        %2873 = vmatpush1.bf16.msra.mxu0 0
        %2874 = vmatprep.subr.bf16.mxu0 0
        %2875 = vmatpush1.bf16.msra.mxu0 0
        %2876 = vmatprep.subr.bf16.mxu0 0
        %2877 = vmatpush1.bf16.msra.mxu0 0
        %2878 = vmatprep.subr.bf16.mxu0 0
        %2879 = vmatpush1.bf16.msra.mxu0 0
        %2880 = vmatprep.subr.bf16.mxu0 0
        %2881 = vmatpush1.bf16.msra.mxu0 0
        %2882 = vmatprep.subr.bf16.mxu0 0
        %2883 = vmatpush1.bf16.msra.mxu0 0
        %2884 = vmatprep.subr.bf16.mxu0 0
        %2885 = vmatpush1.bf16.msra.mxu0 0
        %2886 = vmatprep.subr.bf16.mxu0 0
        %2887 = vmatpush1.bf16.msra.mxu0 0
        %2888 = vmatprep.subr.bf16.mxu0 0
        %2889 = vmatpush1.bf16.msra.mxu0 0
        %2890 = vmatprep.subr.bf16.mxu0 0
        %2891 = vmatpush1.bf16.msra.mxu0 0
        %2892 = vmatprep.subr.bf16.mxu0 0
        %2893 = vmatpush1.bf16.msra.mxu0 0
        %2894 = vmatprep.mubr.bf16.mxu0 0
        %2895 = vmatmul.mubr.bf16.gmra.mrb[0].mxu0 %v2848
        %v2896 = vpop.f32.mrb[0].mxu0
        %v2897 = vadd.f32 0.0, %v2896
        %v2898 = vpop.f32.mrb[0].mxu0
        %v2899 = vpop.f32.mrb[0].mxu0
        %v2900 = vadd.f32 0.0, %v2899
        %v2901 = vpop.f32.mrb[0].mxu0
        %2902 = vmatprep.mubr.bf16.mxu0 0
        %2903 = vmatmul.mubr.bf16.gmra.mrb[0].mxu0 %v2851
        %v2904 = vpop.f32.mrb[0].mxu0
        %v2905 = vadd.f32 0.0, %v2904
        %v2906 = vpop.f32.mrb[0].mxu0
        %v2907 = vpop.f32.mrb[0].mxu0
        %v2908 = vadd.f32 0.0, %v2907
        %v2909 = vpop.f32.mrb[0].mxu0
        %2910 = vmatprep.mubr.bf16.mxu0 0
        %2911 = vmatmul.mubr.bf16.gmra.mrb[0].mxu0 %v2854
        %v2912 = vpop.f32.mrb[0].mxu0
        %v2913 = vadd.f32 0.0, %v2912
        %v2914 = vpop.f32.mrb[0].mxu0
        %v2915 = vpop.f32.mrb[0].mxu0
        %v2916 = vadd.f32 0.0, %v2915
        %v2917 = vpop.f32.mrb[0].mxu0
        %2918 = vmatprep.mubr.bf16.mxu0 0
        %2919 = vmatmul.mubr.bf16.gmra.mrb[0].mxu0 %v2857
        %v2920 = vpop.f32.mrb[0].mxu0
        %v2921 = vadd.f32 0.0, %v2920
        %v2922 = vpop.f32.mrb[0].mxu0
        %v2923 = vpop.f32.mrb[0].mxu0
        %v2924 = vadd.f32 0.0, %v2923
        %v2925 = vpop.f32.mrb[0].mxu0
        %2926 = vdwg.mxu0
        %v2927 = vadd.f32 %v2333, %v2897
        %v2928 = vadd.f32 %v2334, %v2900
        %v2929 = vadd.f32 %v2335, %v2905
        %v2930 = vadd.f32 %v2336, %v2908
        %v2931 = vadd.f32 %v2337, %v2913
        %v2932 = vadd.f32 %v2338, %v2916
        %v2933 = vadd.f32 %v2339, %v2921
        %v2934 = vadd.f32 %v2340, %v2924
        %v2935 = vld [vmem:[%s6] sm:$0x1]
        %v2937 = vlaneseq
        %v2938 = vshrl.u32 %v2937, 7
        %v2939 = vsub.s32 0, %v2938
        %v2940 = vrot.slane %v2935, %v2939
        %v2942 = vadd.f32 %v2927, %v2940
        %v2943 = vadd.f32 %v2928, %v2940
        %v2944 = vadd.f32 %v2929, %v2940
        %v2945 = vadd.f32 %v2930, %v2940
        %v2946 = vadd.f32 %v2931, %v2940
        %v2947 = vadd.f32 %v2932, %v2940
        %v2948 = vadd.f32 %v2933, %v2940
        %v2949 = vadd.f32 %v2934, %v2940
        %2950 = vst.msk [vmem:[%s322] sm:$0xff] %vm333, %v2942
        %2951 = vst.msk [vmem:[%s322 + $0x8] sm:$0xff] %vm333, %v2943
        %2952 = vst.msk [vmem:[%s322 + $0x10] sm:$0xff] %vm333, %v2944
        %2953 = vst.msk [vmem:[%s322 + $0x18] sm:$0xff] %vm333, %v2945
        %2954 = vst.msk [vmem:[%s322 + $0x20] sm:$0xff] %vm333, %v2946
        %2955 = vst.msk [vmem:[%s322 + $0x28] sm:$0xff] %vm333, %v2947
        %2956 = vst.msk [vmem:[%s322 + $0x30] sm:$0xff] %vm333, %v2948
        %2957 = vst.msk [vmem:[%s322 + $0x38] sm:$0xff] %vm333, %v2949
        %s2958 = smul.u32 8, %s20
        %p2959 = scmp.lt.s32.totalorder %s2958, 15
        %s2960 = scalar_select %p2959, %s2958, 15
        %s2961 = smul.addr %s2960, 8
        %s2962 = scalar_lea.vmem %s8, %s2961
        // Predicated region
        $region57: #{tpu_custom_call.1} parent=51 // pred_check
          %p2963 = pneg %p211
        $region58: #{tpu_custom_call.1} parent=51 // pred_check_branch
          %2965 = sbr.rel (%p2963) target = $region60
        $region59: #{tpu_custom_call.1} parent=51 // pred_region
          %s2966 = smul.u32 8, %s20
        $region60: #{tpu_custom_call.1} parent=51 // pred_fallthru
          _
      $region52: #{tpu_custom_call.1} parent=5 // pred_fallthru
        _
      %p2967 = scmp.le.s32.totalorder 2, %s15
      // Predicated region
      $region61: #{tpu_custom_call.1} parent=5 // pred_check
        %p2968 = pneg %p2967
      $region62: #{tpu_custom_call.1} parent=5 // pred_check_branch
        %2970 = sbr.rel (%p2968) target = $region64
      $region63: #{tpu_custom_call.1} parent=5 // pred_region
        %s2971 = ssub.s32 %s15, 2
        // Predicated region
        $region65: #{tpu_custom_call.1} parent=63 // pred_check
          %p2972 = pneg %p217
        $region66: #{tpu_custom_call.1} parent=63 // pred_check_branch
          %2974 = sbr.rel (%p2972) target = $region68
        $region67: #{tpu_custom_call.1} parent=63 // pred_region
          %s2975 = smul.u32 8, %s21
          %p2976 = scmp.lt.s32.totalorder %s2975, 15
          %s2977 = scalar_select %p2976, %s2975, 15
          %s2978 = smul.addr %s2977, 8
          %s2979 = scalar_lea.vmem %s8, %s2978
        $region68: #{tpu_custom_call.1} parent=63 // pred_fallthru
          _
      $region64: #{tpu_custom_call.1} parent=5 // pred_fallthru
        _
    $region6: #{tpu_custom_call.1} parent=1 // loop_footer
      %s19 = sadd.s32 1, %s15
    $region7: #{tpu_custom_call.1} parent=1 // loop_footer_branch
      %14 = sbr.rel target = $region3
    $region8: #{tpu_custom_call.1} parent=1 // loop_exit
      _
    %2980 = vsyncpa [#allocation3], 1
    %s2981 = scalar_lea.sflag [#allocation3], 1
    %2982 = vsyncpa %s2981, 1

</llo_original>
